<compile_context>
chip_gen: v6e
topology: v6e:2x2x1
jax: 0.10.0
libtpu: 0.0.40
codegen_flags: <defaults>
</compile_context>

<pallas_src>
import functools

import numpy as np
import jax
import jax.numpy as jnp
from jax import lax
from jax.experimental import pallas as pl
from jax.experimental.pallas import tpu as pltpu


_SQRT2_INV = 0.7071067811865476
_NEG = -1e30          # finite stand-in for -inf (avoids inf arithmetic / NaN)


# ----------------------------------------------------------------------------
# Mask / relative-position helpers (numpy, mirror the PyTorch helpers)
# ----------------------------------------------------------------------------

def create_mask_np(window_size, displacement, upper_lower, left_right):
    T = window_size ** 2
    mask = np.zeros((T, T), dtype=np.float32)
    d = displacement
    if upper_lower:
        mask[-d * window_size:, :-d * window_size] = _NEG
        mask[:-d * window_size, -d * window_size:] = _NEG
    if left_right:
        mask = mask.reshape(window_size, window_size, window_size, window_size)
        mask[:, -d:, :, :-d] = _NEG
        mask[:, :-d, :, -d:] = _NEG
        mask = mask.reshape(T, T)
    return mask


def get_relative_indices_np(window_size):
    idx = np.array([[x, y] for x in range(window_size) for y in range(window_size)])
    dist = idx[None, :, :] - idx[:, None, :]
    return dist + window_size - 1            # (T, T, 2), values in [0, 2*ws-2]


def build_dense_bias(pos_bias_tt, shifted, nh, nw, ws, disp):
    """Fold window partition + cyclic shift + shift masks + pos-embedding into
    one dense (L, L) additive bias over the ORIGINAL spatial ordering."""
    L = nh * nw
    T = ws * ws
    nw_h, nw_w = nh // ws, nw // ws
    n_win = nw_h * nw_w

    # Windowed bias exactly as the PyTorch code builds `dots` additions.
    wb = np.broadcast_to(pos_bias_tt.astype(np.float32), (n_win, T, T)).copy()
    if shifted:
        ul = create_mask_np(ws, disp, True, False)
        lr = create_mask_np(ws, disp, False, True)
        wb[-nw_w:] += ul                      # dots[:, :, -nw_w:]      += ul
        wb[nw_w - 1::nw_w] += lr              # dots[:, :, nw_w-1::nw_w] += lr

    # Map window-ordered positions back to original spatial flat indices.
    idx = np.arange(L).reshape(nh, nw)
    if shifted:
        idx = np.roll(idx, (-disp, -disp), axis=(0, 1))   # same as torch.roll
    idx = idx.reshape(nw_h, ws, nw_w, ws).transpose(0, 2, 1, 3).reshape(n_win, T)

    dense = np.full((L, L), _NEG, dtype=np.float32)
    for w in range(n_win):
        rows = idx[w]
        dense[np.ix_(rows, rows)] = wb[w]
    return dense


# ----------------------------------------------------------------------------
# Fused stage kernel (one grid step per batch element)
# ----------------------------------------------------------------------------

def _grn(x, gamma, beta):
    # Global Response Norm over all spatial positions (rows), f32.
    gx = jnp.sqrt(jnp.sum(x * x, axis=0, keepdims=True))          # (1, dim)
    nx = gx / (jnp.mean(gx, axis=-1, keepdims=True) + 1e-6)
    return gamma * (x * nx) + beta + x


def _stage_kernel(xp_ref, pw_ref, pb_ref,
                  ag_ref, ab_ref, qkv_ref, ow_ref, ob_ref, bias_ref,
                  mg_ref, mb_ref, w1_ref, b1_ref, w2_ref, b2_ref,
                  o_ref, *, n_blocks, heads, head_dim):
    hh = heads * head_dim

    # ---- PatchMerging linear ------------------------------------------------
    x = jnp.dot(xp_ref[0].astype(jnp.bfloat16), pw_ref[...],
                preferred_element_type=jnp.float32) + pb_ref[...]   # (L, dim)

    for blk in range(n_blocks):                      # static unroll (regular, shifted, ...)
        # ---- Residual(PreNorm(GRN, WindowAttention)) as dense masked attention
        xg = _grn(x, ag_ref[blk], ab_ref[blk]).astype(jnp.bfloat16)
        qkv = jnp.dot(xg, qkv_ref[blk],
                      preferred_element_type=jnp.float32)           # (L, 3*hh)
        bias = bias_ref[blk]                                        # (L, L) f32

        head_outs = []
        for h in range(heads):                                      # heads=2, unrolled
            q = qkv[:, h * head_dim:(h + 1) * head_dim].astype(jnp.bfloat16)
            k = qkv[:, hh + h * head_dim:hh + (h + 1) * head_dim].astype(jnp.bfloat16)
            v = qkv[:, 2 * hh + h * head_dim:2 * hh + (h + 1) * head_dim].astype(jnp.bfloat16)
            # scale already folded into Q weights at build time
            s = lax.dot_general(q, k, (((1,), (1,)), ((), ())),
                                preferred_element_type=jnp.float32) + bias
            m = jnp.max(s, axis=-1, keepdims=True)
            p = jnp.exp(s - m)
            p = p / jnp.sum(p, axis=-1, keepdims=True)              # exact softmax
            head_outs.append(jnp.dot(p.astype(jnp.bfloat16), v,
                                     preferred_element_type=jnp.float32))
        o_cat = jnp.concatenate(head_outs, axis=-1)                 # (L, heads*hd)
        attn = jnp.dot(o_cat.astype(jnp.bfloat16), ow_ref[blk],
                       preferred_element_type=jnp.float32) + ob_ref[blk]
        x = attn + x                                                # residual

        # ---- Residual(PreNorm(GRN, FeedForward)) ----------------------------
        xg = _grn(x, mg_ref[blk], mb_ref[blk]).astype(jnp.bfloat16)
        hmid = jnp.dot(xg, w1_ref[blk],
                       preferred_element_type=jnp.float32) + b1_ref[blk]
        hmid = 0.5 * hmid * (1.0 + lax.erf(hmid * _SQRT2_INV))      # exact GELU
        x = x + jnp.dot(hmid.astype(jnp.bfloat16), w2_ref[blk],
                        preferred_element_type=jnp.float32) + b2_ref[blk]

    o_ref[0] = x


# ----------------------------------------------------------------------------
# Parameter construction (deterministic, synthetic)
# ----------------------------------------------------------------------------

def _init(key, shape, std=0.02):
    return std * jax.random.normal(key, shape, dtype=jnp.float32)


def build_params(key, cfg, nh, nw):
    dim = cfg["hidden_dim"]
    ws = cfg["window_size"]
    heads = cfg["num_heads"]
    hd = cfg["head_dim"]
    df = cfg["downscaling_factor"]
    n_blocks = cfg["layers"]
    T = ws * ws
    disp = ws // 2
    hh = heads * hd
    scale = hd ** (-0.5)
    rel_idx = get_relative_indices_np(ws)

    keys = iter(jax.random.split(key, 8 + 8 * n_blocks))

    patch_w = _init(next(keys), (cfg["in_channels"] * df * df, dim))
    patch_b = _init(next(keys), (1, dim))

    qkv_l, ow_l, ob_l, bias_l, w1_l, b1_l, w2_l, b2_l = ([] for _ in range(8))
    for blk in range(n_blocks):
        shifted = (blk % 2 == 1)
        if cfg["relative_pos_embedding"]:
            pos = jax.random.normal(next(keys), (2 * ws - 1, 2 * ws - 1),
                                    dtype=jnp.float32)
            pos_tt = np.asarray(jax.device_get(pos))[rel_idx[..., 0], rel_idx[..., 1]]
        else:
            pos_tt = np.asarray(jax.device_get(
                jax.random.normal(next(keys), (T, T), dtype=jnp.float32)))
        bias_l.append(build_dense_bias(pos_tt, shifted, nh, nw, ws, disp))

        qkv = _init(next(keys), (dim, 3 * hh))
        qkv = qkv.at[:, :hh].multiply(scale)      # fold 1/sqrt(head_dim) into Q
        qkv_l.append(qkv)
        ow_l.append(_init(next(keys), (hh, dim)))
        ob_l.append(_init(next(keys), (1, dim)))
        w1_l.append(_init(next(keys), (dim, 4 * dim)))
        b1_l.append(_init(next(keys), (1, 4 * dim)))
        w2_l.append(_init(next(keys), (4 * dim, dim)))
        b2_l.append(_init(next(keys), (1, dim)))

    return dict(
        patch_w=patch_w.astype(jnp.bfloat16),
        patch_b=patch_b,
        # GRN params are zeros exactly as in the PyTorch __init__.
        attn_gamma=jnp.zeros((n_blocks, 1, dim), jnp.float32),
        attn_beta=jnp.zeros((n_blocks, 1, dim), jnp.float32),
        qkv_w=jnp.stack(qkv_l).astype(jnp.bfloat16),
        out_w=jnp.stack(ow_l).astype(jnp.bfloat16),
        out_b=jnp.stack(ob_l),
        attn_bias=jnp.asarray(np.stack(bias_l), jnp.float32),
        mlp_gamma=jnp.zeros((n_blocks, 1, dim), jnp.float32),
        mlp_beta=jnp.zeros((n_blocks, 1, dim), jnp.float32),
        ff_w1=jnp.stack(w1_l).astype(jnp.bfloat16),
        ff_b1=jnp.stack(b1_l),
        ff_w2=jnp.stack(w2_l).astype(jnp.bfloat16),
        ff_b2=jnp.stack(b2_l),
    )


# ----------------------------------------------------------------------------
# Forward pass: unfold (host layout op) -> ONE fused pallas_call -> NCHW
# ----------------------------------------------------------------------------

def stage_module_forward(params, x, cfg):
    df = cfg["downscaling_factor"]
    dim = cfg["hidden_dim"]
    heads = cfg["num_heads"]
    hd = cfg["head_dim"]
    n_blocks = cfg["layers"]
    b, c, h, w = x.shape
    nh, nww = h // df, w // df
    L = nh * nww
    K = c * df * df
    hh = heads * hd
    hid = 4 * dim

    # nn.Unfold(k=df, s=df) feature order is (c, ki, kj); pure layout op.
    xp = x.reshape(b, c, nh, df, nww, df)
    xp = jnp.transpose(xp, (0, 2, 4, 1, 3, 5)).reshape(b, L, K)

    kern = functools.partial(_stage_kernel, n_blocks=n_blocks,
                             heads=heads, head_dim=hd)
    rep = lambda i: (0, 0, 0)      # replicated (same block every grid step)
    rep2 = lambda i: (0, 0)

    out = pl.pallas_call(
        kern,
        out_shape=jax.ShapeDtypeStruct((b, L, dim), jnp.float32),
        grid=(b,),
        in_specs=[
            pl.BlockSpec((1, L, K), lambda i: (i, 0, 0)),            # xp
            pl.BlockSpec((K, dim), rep2),                            # patch_w
            pl.BlockSpec((1, dim), rep2),                            # patch_b
            pl.BlockSpec((n_blocks, 1, dim), rep),                   # attn_gamma
            pl.BlockSpec((n_blocks, 1, dim), rep),                   # attn_beta
            pl.BlockSpec((n_blocks, dim, 3 * hh), rep),              # qkv_w
            pl.BlockSpec((n_blocks, hh, dim), rep),                  # out_w
            pl.BlockSpec((n_blocks, 1, dim), rep),                   # out_b
            pl.BlockSpec((n_blocks, L, L), rep),                     # attn_bias
            pl.BlockSpec((n_blocks, 1, dim), rep),                   # mlp_gamma
            pl.BlockSpec((n_blocks, 1, dim), rep),                   # mlp_beta
            pl.BlockSpec((n_blocks, dim, hid), rep),                 # ff_w1
            pl.BlockSpec((n_blocks, 1, hid), rep),                   # ff_b1
            pl.BlockSpec((n_blocks, hid, dim), rep),                 # ff_w2
            pl.BlockSpec((n_blocks, 1, dim), rep),                   # ff_b2
        ],
        out_specs=pl.BlockSpec((1, L, dim), lambda i: (i, 0, 0)),
        compiler_params=pltpu.CompilerParams(
            dimension_semantics=("parallel",)),
    )(xp, params["patch_w"], params["patch_b"],
      params["attn_gamma"], params["attn_beta"], params["qkv_w"],
      params["out_w"], params["out_b"], params["attn_bias"],
      params["mlp_gamma"], params["mlp_beta"], params["ff_w1"],
      params["ff_b1"], params["ff_w2"], params["ff_b2"])

    out = out.reshape(b, nh, nww, dim)
    return jnp.transpose(out, (0, 3, 1, 2))        # -> NCHW, like permute(0,3,1,2)


# ----------------------------------------------------------------------------
# Main
# ----------------------------------------------------------------------------

if __name__ == "__main__":
    cfg = dict(
        in_channels=4,
        hidden_dim=32,
        layers=2,
        downscaling_factor=2,
        num_heads=2,
        head_dim=16,
        window_size=4,
        relative_pos_embedding=True,
    )
    key = jax.random.PRNGKey(0)
    kx, kp = jax.random.split(key)

    x = jax.random.normal(kx, (2, cfg["in_channels"], 16, 16), dtype=jnp.float32)
    new_h = 16 // cfg["downscaling_factor"]
    new_w = 16 // cfg["downscaling_factor"]

    params = build_params(kp, cfg, new_h, new_w)

    fwd = jax.jit(functools.partial(stage_module_forward, cfg=cfg))
    out = fwd(params, x)
    out = jax.block_until_ready(out)

    assert out.shape == (2, cfg["hidden_dim"], new_h, new_w), out.shape
    assert bool(jnp.all(jnp.isfinite(out)))
    print("KERNEL_OK")
</pallas_src>

<mosaic_0001>
module attributes {stable_mosaic.version = 11 : i64} {
  func.func @_stage_kernel(%arg0: i32, %arg1: memref<1x64x16xf32, #tpu.memory_space<vmem>>, %arg2: memref<16x32xbf16, #tpu.memory_space<vmem>>, %arg3: memref<1x32xf32, #tpu.memory_space<vmem>>, %arg4: memref<2x1x32xf32, #tpu.memory_space<vmem>>, %arg5: memref<2x1x32xf32, #tpu.memory_space<vmem>>, %arg6: memref<2x32x96xbf16, #tpu.memory_space<vmem>>, %arg7: memref<2x32x32xbf16, #tpu.memory_space<vmem>>, %arg8: memref<2x1x32xf32, #tpu.memory_space<vmem>>, %arg9: memref<2x64x64xf32, #tpu.memory_space<vmem>>, %arg10: memref<2x1x32xf32, #tpu.memory_space<vmem>>, %arg11: memref<2x1x32xf32, #tpu.memory_space<vmem>>, %arg12: memref<2x32x128xbf16, #tpu.memory_space<vmem>>, %arg13: memref<2x1x128xf32, #tpu.memory_space<vmem>>, %arg14: memref<2x128x32xbf16, #tpu.memory_space<vmem>>, %arg15: memref<2x1x32xf32, #tpu.memory_space<vmem>>, %arg16: memref<1x64x32xf32, #tpu.memory_space<vmem>>) attributes {dimension_semantics = [#tpu.dimension_semantics<parallel>], iteration_bounds = array<i64: 2>, scalar_prefetch = 0 : i64, scratch_operands = 0 : i64, tpu.core_type = #tpu.core_type<tc>, window_params = [{transform_indices = @transform_0, window_bounds = array<i64: 1, 64, 16>}, {pipeline_mode = #tpu.pipeline_mode<synchronous>, transform_indices = @transform_1, window_bounds = array<i64: 16, 32>}, {pipeline_mode = #tpu.pipeline_mode<synchronous>, transform_indices = @transform_2, window_bounds = array<i64: 1, 32>}, {pipeline_mode = #tpu.pipeline_mode<synchronous>, transform_indices = @transform_3, window_bounds = array<i64: 2, 1, 32>}, {pipeline_mode = #tpu.pipeline_mode<synchronous>, transform_indices = @transform_4, window_bounds = array<i64: 2, 1, 32>}, {pipeline_mode = #tpu.pipeline_mode<synchronous>, transform_indices = @transform_5, window_bounds = array<i64: 2, 32, 96>}, {pipeline_mode = #tpu.pipeline_mode<synchronous>, transform_indices = @transform_6, window_bounds = array<i64: 2, 32, 32>}, {pipeline_mode = #tpu.pipeline_mode<synchronous>, transform_indices = @transform_7, window_bounds = array<i64: 2, 1, 32>}, {pipeline_mode = #tpu.pipeline_mode<synchronous>, transform_indices = @transform_8, window_bounds = array<i64: 2, 64, 64>}, {pipeline_mode = #tpu.pipeline_mode<synchronous>, transform_indices = @transform_9, window_bounds = array<i64: 2, 1, 32>}, {pipeline_mode = #tpu.pipeline_mode<synchronous>, transform_indices = @transform_10, window_bounds = array<i64: 2, 1, 32>}, {pipeline_mode = #tpu.pipeline_mode<synchronous>, transform_indices = @transform_11, window_bounds = array<i64: 2, 32, 128>}, {pipeline_mode = #tpu.pipeline_mode<synchronous>, transform_indices = @transform_12, window_bounds = array<i64: 2, 1, 128>}, {pipeline_mode = #tpu.pipeline_mode<synchronous>, transform_indices = @transform_13, window_bounds = array<i64: 2, 128, 32>}, {pipeline_mode = #tpu.pipeline_mode<synchronous>, transform_indices = @transform_14, window_bounds = array<i64: 2, 1, 32>}, {transform_indices = @transform_15, window_bounds = array<i64: 1, 64, 32>}]} {
    %c0 = arith.constant 0 : index
    %c0_0 = arith.constant 0 : index
    %c0_1 = arith.constant 0 : index
    %0 = vector.load %arg1[%c0, %c0_0, %c0_1] : memref<1x64x16xf32, #tpu.memory_space<vmem>>, vector<1x64x16xf32>
    %1 = vector.shape_cast %0 : vector<1x64x16xf32> to vector<64x16xf32>
    %2 = arith.truncf %1 : vector<64x16xf32> to vector<64x16xbf16>
    %c0_2 = arith.constant 0 : index
    %c0_3 = arith.constant 0 : index
    %3 = vector.load %arg2[%c0_2, %c0_3] : memref<16x32xbf16, #tpu.memory_space<vmem>>, vector<16x32xbf16>
    %cst = arith.constant dense<0.000000e+00> : vector<64x32xf32>
    %4 = tpu.matmul %2, %3, %cst {dimension_numbers = #tpu.dot_dimension_numbers<[1], [0], [0], [1], [0, 0, 1, 1], [], []>} : vector<64x16xbf16>, vector<16x32xbf16>, vector<64x32xf32> -> vector<64x32xf32>
    %c0_4 = arith.constant 0 : index
    %c0_5 = arith.constant 0 : index
    %5 = vector.load %arg3[%c0_4, %c0_5] : memref<1x32xf32, #tpu.memory_space<vmem>>, vector<1x32xf32>
    %6 = vector.broadcast %5 : vector<1x32xf32> to vector<64x32xf32>
    %7 = arith.addf %4, %6 : vector<64x32xf32>
    %c0_6 = arith.constant 0 : index
    %c0_7 = arith.constant 0 : index
    %c0_8 = arith.constant 0 : index
    %8 = vector.load %arg4[%c0_6, %c0_7, %c0_8] : memref<2x1x32xf32, #tpu.memory_space<vmem>>, vector<1x1x32xf32>
    %9 = vector.shape_cast %8 : vector<1x1x32xf32> to vector<1x32xf32>
    %c0_9 = arith.constant 0 : index
    %c0_10 = arith.constant 0 : index
    %c0_11 = arith.constant 0 : index
    %10 = vector.load %arg5[%c0_9, %c0_10, %c0_11] : memref<2x1x32xf32, #tpu.memory_space<vmem>>, vector<1x1x32xf32>
    %11 = vector.shape_cast %10 : vector<1x1x32xf32> to vector<1x32xf32>
    %12 = arith.mulf %7, %7 : vector<64x32xf32>
    %cst_12 = arith.constant dense<0.000000e+00> : vector<32xf32>
    %13 = vector.multi_reduction <add>, %12, %cst_12 [0] : vector<64x32xf32> to vector<32xf32>
    %14 = vector.shape_cast %13 : vector<32xf32> to vector<1x32xf32>
    %15 = math.sqrt %14 : vector<1x32xf32>
    %cst_13 = arith.constant dense<0.000000e+00> : vector<1xf32>
    %16 = vector.multi_reduction <add>, %15, %cst_13 [1] : vector<1x32xf32> to vector<1xf32>
    %17 = vector.shape_cast %16 : vector<1xf32> to vector<1x1xf32>
    %cst_14 = arith.constant 3.200000e+01 : f32
    %18 = vector.broadcast %cst_14 : f32 to vector<1x1xf32>
    %19 = arith.divf %17, %18 : vector<1x1xf32>
    %cst_15 = arith.constant 9.99999997E-7 : f32
    %20 = vector.broadcast %cst_15 : f32 to vector<1x1xf32>
    %21 = arith.addf %19, %20 : vector<1x1xf32>
    %22 = vector.broadcast %21 : vector<1x1xf32> to vector<1x32xf32>
    %23 = arith.divf %15, %22 : vector<1x32xf32>
    %24 = vector.broadcast %23 : vector<1x32xf32> to vector<64x32xf32>
    %25 = arith.mulf %7, %24 : vector<64x32xf32>
    %26 = vector.broadcast %9 : vector<1x32xf32> to vector<64x32xf32>
    %27 = arith.mulf %26, %25 : vector<64x32xf32>
    %28 = vector.broadcast %11 : vector<1x32xf32> to vector<64x32xf32>
    %29 = arith.addf %27, %28 : vector<64x32xf32>
    %30 = arith.addf %29, %7 : vector<64x32xf32>
    %31 = arith.truncf %30 : vector<64x32xf32> to vector<64x32xbf16>
    %c0_16 = arith.constant 0 : index
    %c0_17 = arith.constant 0 : index
    %c0_18 = arith.constant 0 : index
    %32 = vector.load %arg6[%c0_16, %c0_17, %c0_18] : memref<2x32x96xbf16, #tpu.memory_space<vmem>>, vector<1x32x96xbf16>
    %33 = vector.shape_cast %32 : vector<1x32x96xbf16> to vector<32x96xbf16>
    %cst_19 = arith.constant dense<0.000000e+00> : vector<64x96xf32>
    %34 = tpu.matmul %31, %33, %cst_19 {dimension_numbers = #tpu.dot_dimension_numbers<[1], [0], [0], [1], [0, 0, 1, 1], [], []>} : vector<64x32xbf16>, vector<32x96xbf16>, vector<64x96xf32> -> vector<64x96xf32>
    %c0_20 = arith.constant 0 : index
    %c0_21 = arith.constant 0 : index
    %c0_22 = arith.constant 0 : index
    %35 = vector.load %arg9[%c0_20, %c0_21, %c0_22] : memref<2x64x64xf32, #tpu.memory_space<vmem>>, vector<1x64x64xf32>
    %36 = vector.shape_cast %35 : vector<1x64x64xf32> to vector<64x64xf32>
    %37 = vector.extract_strided_slice %34 {offsets = [0, 0], sizes = [64, 16], strides = [1, 1]} : vector<64x96xf32> to vector<64x16xf32>
    %38 = arith.truncf %37 : vector<64x16xf32> to vector<64x16xbf16>
    %39 = vector.extract_strided_slice %34 {offsets = [0, 32], sizes = [64, 16], strides = [1, 1]} : vector<64x96xf32> to vector<64x16xf32>
    %40 = arith.truncf %39 : vector<64x16xf32> to vector<64x16xbf16>
    %41 = vector.extract_strided_slice %34 {offsets = [0, 64], sizes = [64, 16], strides = [1, 1]} : vector<64x96xf32> to vector<64x16xf32>
    %42 = arith.truncf %41 : vector<64x16xf32> to vector<64x16xbf16>
    %cst_23 = arith.constant dense<0.000000e+00> : vector<64x64xf32>
    %43 = tpu.matmul %38, %40, %cst_23 {dimension_numbers = #tpu.dot_dimension_numbers<[1], [1], [0], [0], [0, 0, 1, 0], [], []>} : vector<64x16xbf16>, vector<64x16xbf16>, vector<64x64xf32> -> vector<64x64xf32>
    %44 = arith.addf %43, %36 : vector<64x64xf32>
    %cst_24 = arith.constant dense<0xFF800000> : vector<64xf32>
    %45 = vector.multi_reduction <maximumf>, %44, %cst_24 [1] : vector<64x64xf32> to vector<64xf32>
    %46 = vector.shape_cast %45 : vector<64xf32> to vector<64x1xf32>
    %47 = vector.broadcast %46 : vector<64x1xf32> to vector<64x64xf32>
    %48 = arith.subf %44, %47 : vector<64x64xf32>
    %49 = math.exp %48 : vector<64x64xf32>
    %cst_25 = arith.constant dense<0.000000e+00> : vector<64xf32>
    %50 = vector.multi_reduction <add>, %49, %cst_25 [1] : vector<64x64xf32> to vector<64xf32>
    %51 = vector.shape_cast %50 : vector<64xf32> to vector<64x1xf32>
    %52 = vector.broadcast %51 : vector<64x1xf32> to vector<64x64xf32>
    %53 = arith.divf %49, %52 : vector<64x64xf32>
    %54 = arith.truncf %53 : vector<64x64xf32> to vector<64x64xbf16>
    %cst_26 = arith.constant dense<0.000000e+00> : vector<64x16xf32>
    %55 = tpu.matmul %54, %42, %cst_26 {dimension_numbers = #tpu.dot_dimension_numbers<[1], [0], [0], [1], [0, 0, 1, 1], [], []>} : vector<64x64xbf16>, vector<64x16xbf16>, vector<64x16xf32> -> vector<64x16xf32>
    %56 = vector.extract_strided_slice %34 {offsets = [0, 16], sizes = [64, 16], strides = [1, 1]} : vector<64x96xf32> to vector<64x16xf32>
    %57 = arith.truncf %56 : vector<64x16xf32> to vector<64x16xbf16>
    %58 = vector.extract_strided_slice %34 {offsets = [0, 48], sizes = [64, 16], strides = [1, 1]} : vector<64x96xf32> to vector<64x16xf32>
    %59 = arith.truncf %58 : vector<64x16xf32> to vector<64x16xbf16>
    %60 = vector.extract_strided_slice %34 {offsets = [0, 80], sizes = [64, 16], strides = [1, 1]} : vector<64x96xf32> to vector<64x16xf32>
    %61 = arith.truncf %60 : vector<64x16xf32> to vector<64x16xbf16>
    %cst_27 = arith.constant dense<0.000000e+00> : vector<64x64xf32>
    %62 = tpu.matmul %57, %59, %cst_27 {dimension_numbers = #tpu.dot_dimension_numbers<[1], [1], [0], [0], [0, 0, 1, 0], [], []>} : vector<64x16xbf16>, vector<64x16xbf16>, vector<64x64xf32> -> vector<64x64xf32>
    %63 = arith.addf %62, %36 : vector<64x64xf32>
    %cst_28 = arith.constant dense<0xFF800000> : vector<64xf32>
    %64 = vector.multi_reduction <maximumf>, %63, %cst_28 [1] : vector<64x64xf32> to vector<64xf32>
    %65 = vector.shape_cast %64 : vector<64xf32> to vector<64x1xf32>
    %66 = vector.broadcast %65 : vector<64x1xf32> to vector<64x64xf32>
    %67 = arith.subf %63, %66 : vector<64x64xf32>
    %68 = math.exp %67 : vector<64x64xf32>
    %cst_29 = arith.constant dense<0.000000e+00> : vector<64xf32>
    %69 = vector.multi_reduction <add>, %68, %cst_29 [1] : vector<64x64xf32> to vector<64xf32>
    %70 = vector.shape_cast %69 : vector<64xf32> to vector<64x1xf32>
    %71 = vector.broadcast %70 : vector<64x1xf32> to vector<64x64xf32>
    %72 = arith.divf %68, %71 : vector<64x64xf32>
    %73 = arith.truncf %72 : vector<64x64xf32> to vector<64x64xbf16>
    %cst_30 = arith.constant dense<0.000000e+00> : vector<64x16xf32>
    %74 = tpu.matmul %73, %61, %cst_30 {dimension_numbers = #tpu.dot_dimension_numbers<[1], [0], [0], [1], [0, 0, 1, 1], [], []>} : vector<64x64xbf16>, vector<64x16xbf16>, vector<64x16xf32> -> vector<64x16xf32>
    %75 = tpu.concatenate %55, %74 in 1 : vector<64x16xf32>, vector<64x16xf32> -> vector<64x32xf32>
    %76 = arith.truncf %75 : vector<64x32xf32> to vector<64x32xbf16>
    %c0_31 = arith.constant 0 : index
    %c0_32 = arith.constant 0 : index
    %c0_33 = arith.constant 0 : index
    %77 = vector.load %arg7[%c0_31, %c0_32, %c0_33] : memref<2x32x32xbf16, #tpu.memory_space<vmem>>, vector<1x32x32xbf16>
    %78 = vector.shape_cast %77 : vector<1x32x32xbf16> to vector<32x32xbf16>
    %cst_34 = arith.constant dense<0.000000e+00> : vector<64x32xf32>
    %79 = tpu.matmul %76, %78, %cst_34 {dimension_numbers = #tpu.dot_dimension_numbers<[1], [0], [0], [1], [0, 0, 1, 1], [], []>} : vector<64x32xbf16>, vector<32x32xbf16>, vector<64x32xf32> -> vector<64x32xf32>
    %c0_35 = arith.constant 0 : index
    %c0_36 = arith.constant 0 : index
    %c0_37 = arith.constant 0 : index
    %80 = vector.load %arg8[%c0_35, %c0_36, %c0_37] : memref<2x1x32xf32, #tpu.memory_space<vmem>>, vector<1x1x32xf32>
    %81 = vector.shape_cast %80 : vector<1x1x32xf32> to vector<1x32xf32>
    %82 = vector.broadcast %81 : vector<1x32xf32> to vector<64x32xf32>
    %83 = arith.addf %79, %82 : vector<64x32xf32>
    %84 = arith.addf %83, %7 : vector<64x32xf32>
    %c0_38 = arith.constant 0 : index
    %c0_39 = arith.constant 0 : index
    %c0_40 = arith.constant 0 : index
    %85 = vector.load %arg10[%c0_38, %c0_39, %c0_40] : memref<2x1x32xf32, #tpu.memory_space<vmem>>, vector<1x1x32xf32>
    %86 = vector.shape_cast %85 : vector<1x1x32xf32> to vector<1x32xf32>
    %c0_41 = arith.constant 0 : index
    %c0_42 = arith.constant 0 : index
    %c0_43 = arith.constant 0 : index
    %87 = vector.load %arg11[%c0_41, %c0_42, %c0_43] : memref<2x1x32xf32, #tpu.memory_space<vmem>>, vector<1x1x32xf32>
    %88 = vector.shape_cast %87 : vector<1x1x32xf32> to vector<1x32xf32>
    %89 = arith.mulf %84, %84 : vector<64x32xf32>
    %cst_44 = arith.constant dense<0.000000e+00> : vector<32xf32>
    %90 = vector.multi_reduction <add>, %89, %cst_44 [0] : vector<64x32xf32> to vector<32xf32>
    %91 = vector.shape_cast %90 : vector<32xf32> to vector<1x32xf32>
    %92 = math.sqrt %91 : vector<1x32xf32>
    %cst_45 = arith.constant dense<0.000000e+00> : vector<1xf32>
    %93 = vector.multi_reduction <add>, %92, %cst_45 [1] : vector<1x32xf32> to vector<1xf32>
    %94 = vector.shape_cast %93 : vector<1xf32> to vector<1x1xf32>
    %cst_46 = arith.constant 3.200000e+01 : f32
    %95 = vector.broadcast %cst_46 : f32 to vector<1x1xf32>
    %96 = arith.divf %94, %95 : vector<1x1xf32>
    %cst_47 = arith.constant 9.99999997E-7 : f32
    %97 = vector.broadcast %cst_47 : f32 to vector<1x1xf32>
    %98 = arith.addf %96, %97 : vector<1x1xf32>
    %99 = vector.broadcast %98 : vector<1x1xf32> to vector<1x32xf32>
    %100 = arith.divf %92, %99 : vector<1x32xf32>
    %101 = vector.broadcast %100 : vector<1x32xf32> to vector<64x32xf32>
    %102 = arith.mulf %84, %101 : vector<64x32xf32>
    %103 = vector.broadcast %86 : vector<1x32xf32> to vector<64x32xf32>
    %104 = arith.mulf %103, %102 : vector<64x32xf32>
    %105 = vector.broadcast %88 : vector<1x32xf32> to vector<64x32xf32>
    %106 = arith.addf %104, %105 : vector<64x32xf32>
    %107 = arith.addf %106, %84 : vector<64x32xf32>
    %108 = arith.truncf %107 : vector<64x32xf32> to vector<64x32xbf16>
    %c0_48 = arith.constant 0 : index
    %c0_49 = arith.constant 0 : index
    %c0_50 = arith.constant 0 : index
    %109 = vector.load %arg12[%c0_48, %c0_49, %c0_50] : memref<2x32x128xbf16, #tpu.memory_space<vmem>>, vector<1x32x128xbf16>
    %110 = vector.shape_cast %109 : vector<1x32x128xbf16> to vector<32x128xbf16>
    %cst_51 = arith.constant dense<0.000000e+00> : vector<64x128xf32>
    %111 = tpu.matmul %108, %110, %cst_51 {dimension_numbers = #tpu.dot_dimension_numbers<[1], [0], [0], [1], [0, 0, 1, 1], [], []>} : vector<64x32xbf16>, vector<32x128xbf16>, vector<64x128xf32> -> vector<64x128xf32>
    %c0_52 = arith.constant 0 : index
    %c0_53 = arith.constant 0 : index
    %c0_54 = arith.constant 0 : index
    %112 = vector.load %arg13[%c0_52, %c0_53, %c0_54] : memref<2x1x128xf32, #tpu.memory_space<vmem>>, vector<1x1x128xf32>
    %113 = vector.shape_cast %112 : vector<1x1x128xf32> to vector<1x128xf32>
    %114 = vector.broadcast %113 : vector<1x128xf32> to vector<64x128xf32>
    %115 = arith.addf %111, %114 : vector<64x128xf32>
    %cst_55 = arith.constant 5.000000e-01 : f32
    %116 = vector.broadcast %cst_55 : f32 to vector<64x128xf32>
    %117 = arith.mulf %116, %115 : vector<64x128xf32>
    %cst_56 = arith.constant 0.707106769 : f32
    %118 = vector.broadcast %cst_56 : f32 to vector<64x128xf32>
    %119 = arith.mulf %115, %118 : vector<64x128xf32>
    %120 = math.erf %119 : vector<64x128xf32>
    %cst_57 = arith.constant 1.000000e+00 : f32
    %121 = vector.broadcast %cst_57 : f32 to vector<64x128xf32>
    %122 = arith.addf %121, %120 : vector<64x128xf32>
    %123 = arith.mulf %117, %122 : vector<64x128xf32>
    %124 = arith.truncf %123 : vector<64x128xf32> to vector<64x128xbf16>
    %c0_58 = arith.constant 0 : index
    %c0_59 = arith.constant 0 : index
    %c0_60 = arith.constant 0 : index
    %125 = vector.load %arg14[%c0_58, %c0_59, %c0_60] : memref<2x128x32xbf16, #tpu.memory_space<vmem>>, vector<1x128x32xbf16>
    %126 = vector.shape_cast %125 : vector<1x128x32xbf16> to vector<128x32xbf16>
    %cst_61 = arith.constant dense<0.000000e+00> : vector<64x32xf32>
    %127 = tpu.matmul %124, %126, %cst_61 {dimension_numbers = #tpu.dot_dimension_numbers<[1], [0], [0], [1], [0, 0, 1, 1], [], []>} : vector<64x128xbf16>, vector<128x32xbf16>, vector<64x32xf32> -> vector<64x32xf32>
    %128 = arith.addf %84, %127 : vector<64x32xf32>
    %c0_62 = arith.constant 0 : index
    %c0_63 = arith.constant 0 : index
    %c0_64 = arith.constant 0 : index
    %129 = vector.load %arg15[%c0_62, %c0_63, %c0_64] : memref<2x1x32xf32, #tpu.memory_space<vmem>>, vector<1x1x32xf32>
    %130 = vector.shape_cast %129 : vector<1x1x32xf32> to vector<1x32xf32>
    %131 = vector.broadcast %130 : vector<1x32xf32> to vector<64x32xf32>
    %132 = arith.addf %128, %131 : vector<64x32xf32>
    %c1 = arith.constant 1 : index
    %c0_65 = arith.constant 0 : index
    %c0_66 = arith.constant 0 : index
    %133 = vector.load %arg4[%c1, %c0_65, %c0_66] : memref<2x1x32xf32, #tpu.memory_space<vmem>>, vector<1x1x32xf32>
    %134 = vector.shape_cast %133 : vector<1x1x32xf32> to vector<1x32xf32>
    %c1_67 = arith.constant 1 : index
    %c0_68 = arith.constant 0 : index
    %c0_69 = arith.constant 0 : index
    %135 = vector.load %arg5[%c1_67, %c0_68, %c0_69] : memref<2x1x32xf32, #tpu.memory_space<vmem>>, vector<1x1x32xf32>
    %136 = vector.shape_cast %135 : vector<1x1x32xf32> to vector<1x32xf32>
    %137 = arith.mulf %132, %132 : vector<64x32xf32>
    %cst_70 = arith.constant dense<0.000000e+00> : vector<32xf32>
    %138 = vector.multi_reduction <add>, %137, %cst_70 [0] : vector<64x32xf32> to vector<32xf32>
    %139 = vector.shape_cast %138 : vector<32xf32> to vector<1x32xf32>
    %140 = math.sqrt %139 : vector<1x32xf32>
    %cst_71 = arith.constant dense<0.000000e+00> : vector<1xf32>
    %141 = vector.multi_reduction <add>, %140, %cst_71 [1] : vector<1x32xf32> to vector<1xf32>
    %142 = vector.shape_cast %141 : vector<1xf32> to vector<1x1xf32>
    %cst_72 = arith.constant 3.200000e+01 : f32
    %143 = vector.broadcast %cst_72 : f32 to vector<1x1xf32>
    %144 = arith.divf %142, %143 : vector<1x1xf32>
    %cst_73 = arith.constant 9.99999997E-7 : f32
    %145 = vector.broadcast %cst_73 : f32 to vector<1x1xf32>
    %146 = arith.addf %144, %145 : vector<1x1xf32>
    %147 = vector.broadcast %146 : vector<1x1xf32> to vector<1x32xf32>
    %148 = arith.divf %140, %147 : vector<1x32xf32>
    %149 = vector.broadcast %148 : vector<1x32xf32> to vector<64x32xf32>
    %150 = arith.mulf %132, %149 : vector<64x32xf32>
    %151 = vector.broadcast %134 : vector<1x32xf32> to vector<64x32xf32>
    %152 = arith.mulf %151, %150 : vector<64x32xf32>
    %153 = vector.broadcast %136 : vector<1x32xf32> to vector<64x32xf32>
    %154 = arith.addf %152, %153 : vector<64x32xf32>
    %155 = arith.addf %154, %132 : vector<64x32xf32>
    %156 = arith.truncf %155 : vector<64x32xf32> to vector<64x32xbf16>
    %c1_74 = arith.constant 1 : index
    %c0_75 = arith.constant 0 : index
    %c0_76 = arith.constant 0 : index
    %157 = vector.load %arg6[%c1_74, %c0_75, %c0_76] : memref<2x32x96xbf16, #tpu.memory_space<vmem>>, vector<1x32x96xbf16>
    %158 = vector.shape_cast %157 : vector<1x32x96xbf16> to vector<32x96xbf16>
    %cst_77 = arith.constant dense<0.000000e+00> : vector<64x96xf32>
    %159 = tpu.matmul %156, %158, %cst_77 {dimension_numbers = #tpu.dot_dimension_numbers<[1], [0], [0], [1], [0, 0, 1, 1], [], []>} : vector<64x32xbf16>, vector<32x96xbf16>, vector<64x96xf32> -> vector<64x96xf32>
    %c1_78 = arith.constant 1 : index
    %c0_79 = arith.constant 0 : index
    %c0_80 = arith.constant 0 : index
    %160 = vector.load %arg9[%c1_78, %c0_79, %c0_80] : memref<2x64x64xf32, #tpu.memory_space<vmem>>, vector<1x64x64xf32>
    %161 = vector.shape_cast %160 : vector<1x64x64xf32> to vector<64x64xf32>
    %162 = vector.extract_strided_slice %159 {offsets = [0, 0], sizes = [64, 16], strides = [1, 1]} : vector<64x96xf32> to vector<64x16xf32>
    %163 = arith.truncf %162 : vector<64x16xf32> to vector<64x16xbf16>
    %164 = vector.extract_strided_slice %159 {offsets = [0, 32], sizes = [64, 16], strides = [1, 1]} : vector<64x96xf32> to vector<64x16xf32>
    %165 = arith.truncf %164 : vector<64x16xf32> to vector<64x16xbf16>
    %166 = vector.extract_strided_slice %159 {offsets = [0, 64], sizes = [64, 16], strides = [1, 1]} : vector<64x96xf32> to vector<64x16xf32>
    %167 = arith.truncf %166 : vector<64x16xf32> to vector<64x16xbf16>
    %cst_81 = arith.constant dense<0.000000e+00> : vector<64x64xf32>
    %168 = tpu.matmul %163, %165, %cst_81 {dimension_numbers = #tpu.dot_dimension_numbers<[1], [1], [0], [0], [0, 0, 1, 0], [], []>} : vector<64x16xbf16>, vector<64x16xbf16>, vector<64x64xf32> -> vector<64x64xf32>
    %169 = arith.addf %168, %161 : vector<64x64xf32>
    %cst_82 = arith.constant dense<0xFF800000> : vector<64xf32>
    %170 = vector.multi_reduction <maximumf>, %169, %cst_82 [1] : vector<64x64xf32> to vector<64xf32>
    %171 = vector.shape_cast %170 : vector<64xf32> to vector<64x1xf32>
    %172 = vector.broadcast %171 : vector<64x1xf32> to vector<64x64xf32>
    %173 = arith.subf %169, %172 : vector<64x64xf32>
    %174 = math.exp %173 : vector<64x64xf32>
    %cst_83 = arith.constant dense<0.000000e+00> : vector<64xf32>
    %175 = vector.multi_reduction <add>, %174, %cst_83 [1] : vector<64x64xf32> to vector<64xf32>
    %176 = vector.shape_cast %175 : vector<64xf32> to vector<64x1xf32>
    %177 = vector.broadcast %176 : vector<64x1xf32> to vector<64x64xf32>
    %178 = arith.divf %174, %177 : vector<64x64xf32>
    %179 = arith.truncf %178 : vector<64x64xf32> to vector<64x64xbf16>
    %cst_84 = arith.constant dense<0.000000e+00> : vector<64x16xf32>
    %180 = tpu.matmul %179, %167, %cst_84 {dimension_numbers = #tpu.dot_dimension_numbers<[1], [0], [0], [1], [0, 0, 1, 1], [], []>} : vector<64x64xbf16>, vector<64x16xbf16>, vector<64x16xf32> -> vector<64x16xf32>
    %181 = vector.extract_strided_slice %159 {offsets = [0, 16], sizes = [64, 16], strides = [1, 1]} : vector<64x96xf32> to vector<64x16xf32>
    %182 = arith.truncf %181 : vector<64x16xf32> to vector<64x16xbf16>
    %183 = vector.extract_strided_slice %159 {offsets = [0, 48], sizes = [64, 16], strides = [1, 1]} : vector<64x96xf32> to vector<64x16xf32>
    %184 = arith.truncf %183 : vector<64x16xf32> to vector<64x16xbf16>
    %185 = vector.extract_strided_slice %159 {offsets = [0, 80], sizes = [64, 16], strides = [1, 1]} : vector<64x96xf32> to vector<64x16xf32>
    %186 = arith.truncf %185 : vector<64x16xf32> to vector<64x16xbf16>
    %cst_85 = arith.constant dense<0.000000e+00> : vector<64x64xf32>
    %187 = tpu.matmul %182, %184, %cst_85 {dimension_numbers = #tpu.dot_dimension_numbers<[1], [1], [0], [0], [0, 0, 1, 0], [], []>} : vector<64x16xbf16>, vector<64x16xbf16>, vector<64x64xf32> -> vector<64x64xf32>
    %188 = arith.addf %187, %161 : vector<64x64xf32>
    %cst_86 = arith.constant dense<0xFF800000> : vector<64xf32>
    %189 = vector.multi_reduction <maximumf>, %188, %cst_86 [1] : vector<64x64xf32> to vector<64xf32>
    %190 = vector.shape_cast %189 : vector<64xf32> to vector<64x1xf32>
    %191 = vector.broadcast %190 : vector<64x1xf32> to vector<64x64xf32>
    %192 = arith.subf %188, %191 : vector<64x64xf32>
    %193 = math.exp %192 : vector<64x64xf32>
    %cst_87 = arith.constant dense<0.000000e+00> : vector<64xf32>
    %194 = vector.multi_reduction <add>, %193, %cst_87 [1] : vector<64x64xf32> to vector<64xf32>
    %195 = vector.shape_cast %194 : vector<64xf32> to vector<64x1xf32>
    %196 = vector.broadcast %195 : vector<64x1xf32> to vector<64x64xf32>
    %197 = arith.divf %193, %196 : vector<64x64xf32>
    %198 = arith.truncf %197 : vector<64x64xf32> to vector<64x64xbf16>
    %cst_88 = arith.constant dense<0.000000e+00> : vector<64x16xf32>
    %199 = tpu.matmul %198, %186, %cst_88 {dimension_numbers = #tpu.dot_dimension_numbers<[1], [0], [0], [1], [0, 0, 1, 1], [], []>} : vector<64x64xbf16>, vector<64x16xbf16>, vector<64x16xf32> -> vector<64x16xf32>
    %200 = tpu.concatenate %180, %199 in 1 : vector<64x16xf32>, vector<64x16xf32> -> vector<64x32xf32>
    %201 = arith.truncf %200 : vector<64x32xf32> to vector<64x32xbf16>
    %c1_89 = arith.constant 1 : index
    %c0_90 = arith.constant 0 : index
    %c0_91 = arith.constant 0 : index
    %202 = vector.load %arg7[%c1_89, %c0_90, %c0_91] : memref<2x32x32xbf16, #tpu.memory_space<vmem>>, vector<1x32x32xbf16>
    %203 = vector.shape_cast %202 : vector<1x32x32xbf16> to vector<32x32xbf16>
    %cst_92 = arith.constant dense<0.000000e+00> : vector<64x32xf32>
    %204 = tpu.matmul %201, %203, %cst_92 {dimension_numbers = #tpu.dot_dimension_numbers<[1], [0], [0], [1], [0, 0, 1, 1], [], []>} : vector<64x32xbf16>, vector<32x32xbf16>, vector<64x32xf32> -> vector<64x32xf32>
    %c1_93 = arith.constant 1 : index
    %c0_94 = arith.constant 0 : index
    %c0_95 = arith.constant 0 : index
    %205 = vector.load %arg8[%c1_93, %c0_94, %c0_95] : memref<2x1x32xf32, #tpu.memory_space<vmem>>, vector<1x1x32xf32>
    %206 = vector.shape_cast %205 : vector<1x1x32xf32> to vector<1x32xf32>
    %207 = vector.broadcast %206 : vector<1x32xf32> to vector<64x32xf32>
    %208 = arith.addf %204, %207 : vector<64x32xf32>
    %209 = arith.addf %208, %132 : vector<64x32xf32>
    %c1_96 = arith.constant 1 : index
    %c0_97 = arith.constant 0 : index
    %c0_98 = arith.constant 0 : index
    %210 = vector.load %arg10[%c1_96, %c0_97, %c0_98] : memref<2x1x32xf32, #tpu.memory_space<vmem>>, vector<1x1x32xf32>
    %211 = vector.shape_cast %210 : vector<1x1x32xf32> to vector<1x32xf32>
    %c1_99 = arith.constant 1 : index
    %c0_100 = arith.constant 0 : index
    %c0_101 = arith.constant 0 : index
    %212 = vector.load %arg11[%c1_99, %c0_100, %c0_101] : memref<2x1x32xf32, #tpu.memory_space<vmem>>, vector<1x1x32xf32>
    %213 = vector.shape_cast %212 : vector<1x1x32xf32> to vector<1x32xf32>
    %214 = arith.mulf %209, %209 : vector<64x32xf32>
    %cst_102 = arith.constant dense<0.000000e+00> : vector<32xf32>
    %215 = vector.multi_reduction <add>, %214, %cst_102 [0] : vector<64x32xf32> to vector<32xf32>
    %216 = vector.shape_cast %215 : vector<32xf32> to vector<1x32xf32>
    %217 = math.sqrt %216 : vector<1x32xf32>
    %cst_103 = arith.constant dense<0.000000e+00> : vector<1xf32>
    %218 = vector.multi_reduction <add>, %217, %cst_103 [1] : vector<1x32xf32> to vector<1xf32>
    %219 = vector.shape_cast %218 : vector<1xf32> to vector<1x1xf32>
    %cst_104 = arith.constant 3.200000e+01 : f32
    %220 = vector.broadcast %cst_104 : f32 to vector<1x1xf32>
    %221 = arith.divf %219, %220 : vector<1x1xf32>
    %cst_105 = arith.constant 9.99999997E-7 : f32
    %222 = vector.broadcast %cst_105 : f32 to vector<1x1xf32>
    %223 = arith.addf %221, %222 : vector<1x1xf32>
    %224 = vector.broadcast %223 : vector<1x1xf32> to vector<1x32xf32>
    %225 = arith.divf %217, %224 : vector<1x32xf32>
    %226 = vector.broadcast %225 : vector<1x32xf32> to vector<64x32xf32>
    %227 = arith.mulf %209, %226 : vector<64x32xf32>
    %228 = vector.broadcast %211 : vector<1x32xf32> to vector<64x32xf32>
    %229 = arith.mulf %228, %227 : vector<64x32xf32>
    %230 = vector.broadcast %213 : vector<1x32xf32> to vector<64x32xf32>
    %231 = arith.addf %229, %230 : vector<64x32xf32>
    %232 = arith.addf %231, %209 : vector<64x32xf32>
    %233 = arith.truncf %232 : vector<64x32xf32> to vector<64x32xbf16>
    %c1_106 = arith.constant 1 : index
    %c0_107 = arith.constant 0 : index
    %c0_108 = arith.constant 0 : index
    %234 = vector.load %arg12[%c1_106, %c0_107, %c0_108] : memref<2x32x128xbf16, #tpu.memory_space<vmem>>, vector<1x32x128xbf16>
    %235 = vector.shape_cast %234 : vector<1x32x128xbf16> to vector<32x128xbf16>
    %cst_109 = arith.constant dense<0.000000e+00> : vector<64x128xf32>
    %236 = tpu.matmul %233, %235, %cst_109 {dimension_numbers = #tpu.dot_dimension_numbers<[1], [0], [0], [1], [0, 0, 1, 1], [], []>} : vector<64x32xbf16>, vector<32x128xbf16>, vector<64x128xf32> -> vector<64x128xf32>
    %c1_110 = arith.constant 1 : index
    %c0_111 = arith.constant 0 : index
    %c0_112 = arith.constant 0 : index
    %237 = vector.load %arg13[%c1_110, %c0_111, %c0_112] : memref<2x1x128xf32, #tpu.memory_space<vmem>>, vector<1x1x128xf32>
    %238 = vector.shape_cast %237 : vector<1x1x128xf32> to vector<1x128xf32>
    %239 = vector.broadcast %238 : vector<1x128xf32> to vector<64x128xf32>
    %240 = arith.addf %236, %239 : vector<64x128xf32>
    %cst_113 = arith.constant 5.000000e-01 : f32
    %241 = vector.broadcast %cst_113 : f32 to vector<64x128xf32>
    %242 = arith.mulf %241, %240 : vector<64x128xf32>
    %cst_114 = arith.constant 0.707106769 : f32
    %243 = vector.broadcast %cst_114 : f32 to vector<64x128xf32>
    %244 = arith.mulf %240, %243 : vector<64x128xf32>
    %245 = math.erf %244 : vector<64x128xf32>
    %cst_115 = arith.constant 1.000000e+00 : f32
    %246 = vector.broadcast %cst_115 : f32 to vector<64x128xf32>
    %247 = arith.addf %246, %245 : vector<64x128xf32>
    %248 = arith.mulf %242, %247 : vector<64x128xf32>
    %249 = arith.truncf %248 : vector<64x128xf32> to vector<64x128xbf16>
    %c1_116 = arith.constant 1 : index
    %c0_117 = arith.constant 0 : index
    %c0_118 = arith.constant 0 : index
    %250 = vector.load %arg14[%c1_116, %c0_117, %c0_118] : memref<2x128x32xbf16, #tpu.memory_space<vmem>>, vector<1x128x32xbf16>
    %251 = vector.shape_cast %250 : vector<1x128x32xbf16> to vector<128x32xbf16>
    %cst_119 = arith.constant dense<0.000000e+00> : vector<64x32xf32>
    %252 = tpu.matmul %249, %251, %cst_119 {dimension_numbers = #tpu.dot_dimension_numbers<[1], [0], [0], [1], [0, 0, 1, 1], [], []>} : vector<64x128xbf16>, vector<128x32xbf16>, vector<64x32xf32> -> vector<64x32xf32>
    %253 = arith.addf %209, %252 : vector<64x32xf32>
    %c1_120 = arith.constant 1 : index
    %c0_121 = arith.constant 0 : index
    %c0_122 = arith.constant 0 : index
    %254 = vector.load %arg15[%c1_120, %c0_121, %c0_122] : memref<2x1x32xf32, #tpu.memory_space<vmem>>, vector<1x1x32xf32>
    %255 = vector.shape_cast %254 : vector<1x1x32xf32> to vector<1x32xf32>
    %256 = vector.broadcast %255 : vector<1x32xf32> to vector<64x32xf32>
    %257 = arith.addf %253, %256 : vector<64x32xf32>
    %c0_123 = arith.constant 0 : index
    %c0_124 = arith.constant 0 : index
    %c0_125 = arith.constant 0 : index
    %258 = vector.load %arg16[%c0_123, %c0_124, %c0_125] : memref<1x64x32xf32, #tpu.memory_space<vmem>>, vector<1x64x32xf32>
    %259 = vector.shape_cast %258 : vector<1x64x32xf32> to vector<64x32xf32>
    %260 = vector.shape_cast %257 : vector<64x32xf32> to vector<1x64x32xf32>
    tpu.vector_store %arg16[%c0_123, %c0_124, %c0_125], %260 {strides = array<i32>} : memref<1x64x32xf32, #tpu.memory_space<vmem>>, vector<1x64x32xf32>,
    return
  }
  func.func @transform_0(%arg0: i32) -> (i32, i32, i32) {
    %c0_i32 = arith.constant 0 : i32
    %c0_i32_0 = arith.constant 0 : i32
    %c0_i32_1 = arith.constant 0 : i32
    return %arg0, %c0_i32, %c0_i32_0 : i32, i32, i32
  }
  func.func @transform_1(%arg0: i32) -> (i32, i32) {
    %c0_i32 = arith.constant 0 : i32
    %c0_i32_0 = arith.constant 0 : i32
    %c0_i32_1 = arith.constant 0 : i32
    return %c0_i32, %c0_i32_0 : i32, i32
  }
  func.func @transform_2(%arg0: i32) -> (i32, i32) {
    %c0_i32 = arith.constant 0 : i32
    %c0_i32_0 = arith.constant 0 : i32
    %c0_i32_1 = arith.constant 0 : i32
    return %c0_i32, %c0_i32_0 : i32, i32
  }
  func.func @transform_3(%arg0: i32) -> (i32, i32, i32) {
    %c0_i32 = arith.constant 0 : i32
    %c0_i32_0 = arith.constant 0 : i32
    %c0_i32_1 = arith.constant 0 : i32
    %c0_i32_2 = arith.constant 0 : i32
    return %c0_i32, %c0_i32_0, %c0_i32_1 : i32, i32, i32
  }
  func.func @transform_4(%arg0: i32) -> (i32, i32, i32) {
    %c0_i32 = arith.constant 0 : i32
    %c0_i32_0 = arith.constant 0 : i32
    %c0_i32_1 = arith.constant 0 : i32
    %c0_i32_2 = arith.constant 0 : i32
    return %c0_i32, %c0_i32_0, %c0_i32_1 : i32, i32, i32
  }
  func.func @transform_5(%arg0: i32) -> (i32, i32, i32) {
    %c0_i32 = arith.constant 0 : i32
    %c0_i32_0 = arith.constant 0 : i32
    %c0_i32_1 = arith.constant 0 : i32
    %c0_i32_2 = arith.constant 0 : i32
    return %c0_i32, %c0_i32_0, %c0_i32_1 : i32, i32, i32
  }
  func.func @transform_6(%arg0: i32) -> (i32, i32, i32) {
    %c0_i32 = arith.constant 0 : i32
    %c0_i32_0 = arith.constant 0 : i32
    %c0_i32_1 = arith.constant 0 : i32
    %c0_i32_2 = arith.constant 0 : i32
    return %c0_i32, %c0_i32_0, %c0_i32_1 : i32, i32, i32
  }
  func.func @transform_7(%arg0: i32) -> (i32, i32, i32) {
    %c0_i32 = arith.constant 0 : i32
    %c0_i32_0 = arith.constant 0 : i32
    %c0_i32_1 = arith.constant 0 : i32
    %c0_i32_2 = arith.constant 0 : i32
    return %c0_i32, %c0_i32_0, %c0_i32_1 : i32, i32, i32
  }
  func.func @transform_8(%arg0: i32) -> (i32, i32, i32) {
    %c0_i32 = arith.constant 0 : i32
    %c0_i32_0 = arith.constant 0 : i32
    %c0_i32_1 = arith.constant 0 : i32
    %c0_i32_2 = arith.constant 0 : i32
    return %c0_i32, %c0_i32_0, %c0_i32_1 : i32, i32, i32
  }
  func.func @transform_9(%arg0: i32) -> (i32, i32, i32) {
    %c0_i32 = arith.constant 0 : i32
    %c0_i32_0 = arith.constant 0 : i32
    %c0_i32_1 = arith.constant 0 : i32
    %c0_i32_2 = arith.constant 0 : i32
    return %c0_i32, %c0_i32_0, %c0_i32_1 : i32, i32, i32
  }
  func.func @transform_10(%arg0: i32) -> (i32, i32, i32) {
    %c0_i32 = arith.constant 0 : i32
    %c0_i32_0 = arith.constant 0 : i32
    %c0_i32_1 = arith.constant 0 : i32
    %c0_i32_2 = arith.constant 0 : i32
    return %c0_i32, %c0_i32_0, %c0_i32_1 : i32, i32, i32
  }
  func.func @transform_11(%arg0: i32) -> (i32, i32, i32) {
    %c0_i32 = arith.constant 0 : i32
    %c0_i32_0 = arith.constant 0 : i32
    %c0_i32_1 = arith.constant 0 : i32
    %c0_i32_2 = arith.constant 0 : i32
    return %c0_i32, %c0_i32_0, %c0_i32_1 : i32, i32, i32
  }
  func.func @transform_12(%arg0: i32) -> (i32, i32, i32) {
    %c0_i32 = arith.constant 0 : i32
    %c0_i32_0 = arith.constant 0 : i32
    %c0_i32_1 = arith.constant 0 : i32
    %c0_i32_2 = arith.constant 0 : i32
    return %c0_i32, %c0_i32_0, %c0_i32_1 : i32, i32, i32
  }
  func.func @transform_13(%arg0: i32) -> (i32, i32, i32) {
    %c0_i32 = arith.constant 0 : i32
    %c0_i32_0 = arith.constant 0 : i32
    %c0_i32_1 = arith.constant 0 : i32
    %c0_i32_2 = arith.constant 0 : i32
    return %c0_i32, %c0_i32_0, %c0_i32_1 : i32, i32, i32
  }
  func.func @transform_14(%arg0: i32) -> (i32, i32, i32) {
    %c0_i32 = arith.constant 0 : i32
    %c0_i32_0 = arith.constant 0 : i32
    %c0_i32_1 = arith.constant 0 : i32
    %c0_i32_2 = arith.constant 0 : i32
    return %c0_i32, %c0_i32_0, %c0_i32_1 : i32, i32, i32
  }
  func.func @transform_15(%arg0: i32) -> (i32, i32, i32) {
    %c0_i32 = arith.constant 0 : i32
    %c0_i32_0 = arith.constant 0 : i32
    %c0_i32_1 = arith.constant 0 : i32
    return %arg0, %c0_i32, %c0_i32_0 : i32, i32, i32
  }
}

</mosaic_0001>

<llo_original>
// kernel: stage_module_forward.1
$region0: #{stage_module_forward.1}
  #allocation0 [shape = 'u32[]', space=smem, size = 0x4, offset = 0x4, fixed_abs, tag = 'smem constant byte address 0x4 - core index']
  #allocation1 [shape = 'u32[144,128]{1,0:T(1,128)}', space=vmem, size = 0x12000, scoped, tag = 'internal scratch']
  %s0 = inlined_call_operand.vmem [shape: f32[2,64,16], index: 0, kind: input, shape index: {}]
  %s1 = inlined_call_operand.vmem [shape: bf16[16,32], index: 1, kind: input, shape index: {}]
  %s2 = inlined_call_operand.vmem [shape: f32[1,32], index: 2, kind: input, shape index: {}]
  %s3 = inlined_call_operand.vmem [shape: f32[2,1,32], index: 3, kind: input, shape index: {}]
  %s4 = inlined_call_operand.vmem [shape: f32[2,1,32], index: 4, kind: input, shape index: {}]
  %s5 = inlined_call_operand.vmem [shape: bf16[2,32,96], index: 5, kind: input, shape index: {}]
  %s6 = inlined_call_operand.vmem [shape: bf16[2,32,32], index: 6, kind: input, shape index: {}]
  %s7 = inlined_call_operand.vmem [shape: f32[2,1,32], index: 7, kind: input, shape index: {}]
  %s8 = inlined_call_operand.vmem [shape: f32[2,64,64], index: 8, kind: input, shape index: {}]
  %s9 = inlined_call_operand.vmem [shape: f32[2,1,32], index: 9, kind: input, shape index: {}]
  %s10 = inlined_call_operand.vmem [shape: f32[2,1,32], index: 10, kind: input, shape index: {}]
  %s11 = inlined_call_operand.vmem [shape: bf16[2,32,128], index: 11, kind: input, shape index: {}]
  %s12 = inlined_call_operand.vmem [shape: f32[2,1,128], index: 12, kind: input, shape index: {}]
  %s13 = inlined_call_operand.vmem [shape: bf16[2,128,32], index: 13, kind: input, shape index: {}]
  %s14 = inlined_call_operand.vmem [shape: f32[2,1,32], index: 14, kind: input, shape index: {}]
  %s15 = inlined_call_operand.hbm [shape: f32[2,64,32], index: 15, kind: output, shape index: {}]
  %s16 = sld [smem:[#allocation0]]
  $region93: #{stage_module_forward.1} parent=0
    _
  %s18 = ssub.s32 1, %s16
  %s19 = scalar_select 0, %s18, %s16
  $region1: #{stage_module_forward.1} parent=0
    #allocation2 [shape = 'u8[65536]{0}', space=vmem, size = 0x10000, scoped, tag = 'output window, operand 0']
    #allocation3 [shape = 's32[2]{0}', space=sflag, size = 0x8, scoped, tag = 'scoped memory for stage_module_forward.1']
    %20 = vsyncpa [#allocation3], 0
    %s21 = scalar_lea.sflag [#allocation3], 1
    %22 = vsyncpa %s21, 0
    loop: start=0, step=1, limit=4
    $region2: #{stage_module_forward.1} parent=1 // loop_pre_header
      _
    $region3: #{stage_module_forward.1} parent=1 // loop_header
      %s24 = sphi 0, %s28
      %p25 = scmp.ge.s32.totalorder %s24, 4
      %s34 = sphi 0, %s36
      %s37 = sphi 0, %s34
      %s38 = sphi 0, %s37
      %s54 = sphi 0, %s38
      %s58 = sphi 0, %s58
      %s60 = sphi 0, %s58
      %s61 = sphi 0, %s60
      %s75 = sphi 0, %s61
      %s79 = sphi 0, %s79
      %s81 = sphi 0, %s79
      %s82 = sphi 0, %s81
      %s96 = sphi 0, %s82
      %s100 = sphi 0, %s100
      %s102 = sphi 0, %s100
      %s103 = sphi 0, %s102
      %s117 = sphi 0, %s103
      %s121 = sphi 0, %s121
      %s123 = sphi 0, %s121
      %s124 = sphi 0, %s123
      %s138 = sphi 0, %s124
      %s142 = sphi 0, %s142
      %s144 = sphi 0, %s142
      %s145 = sphi 0, %s144
      %s159 = sphi 0, %s145
      %s163 = sphi 0, %s163
      %s165 = sphi 0, %s163
      %s166 = sphi 0, %s165
      %s180 = sphi 0, %s166
      %s184 = sphi 0, %s184
      %s186 = sphi 0, %s184
      %s187 = sphi 0, %s186
      %s201 = sphi 0, %s187
      %s205 = sphi 0, %s205
      %s207 = sphi 0, %s205
      %s208 = sphi 0, %s207
      %s222 = sphi 0, %s208
      %s226 = sphi 0, %s226
      %s228 = sphi 0, %s226
      %s229 = sphi 0, %s228
      %s243 = sphi 0, %s229
      %s247 = sphi 0, %s247
      %s249 = sphi 0, %s247
      %s250 = sphi 0, %s249
      %s264 = sphi 0, %s250
      %s268 = sphi 0, %s268
      %s270 = sphi 0, %s268
      %s271 = sphi 0, %s270
      %s285 = sphi 0, %s271
      %s289 = sphi 0, %s289
      %s291 = sphi 0, %s289
      %s292 = sphi 0, %s291
      %s306 = sphi 0, %s292
      %s310 = sphi 0, %s310
      %s312 = sphi 0, %s310
      %s313 = sphi 0, %s312
      %s327 = sphi 0, %s313
      %s331 = sphi 0, %s331
      %s333 = sphi 0, %s331
      %s334 = sphi 0, %s333
      %s348 = sphi 0, %s334
      %s354 = sphi 0, %s356
      %s357 = sphi 0, %s354
      %s358 = sphi 0, %s357
      %s374 = sphi 0, %s358
    $region4: #{stage_module_forward.1} parent=1 // loop_header_branch
      %27 = sbr.rel (%p25) target = $region8
    $region5: #{stage_module_forward.1} parent=1 // loop_body
      %s29 = ssub.s32 %s24, 1
      %s30 = ssub.s32 %s24, 2
      %s31 = sadd.s32 %s24, 1
      %s32 = ssub.s32 %s24, %s31
      %p33 = scmp.eq.s32.totalorder %s32, 0
      %s35 = sadd.s32 %s34, 1
      %s36 = scalar_select %p33, %s34, %s35
      %p39 = pneg %p33
      %p40 = scmp.eq.s32.totalorder %s24, 1
      %p41 = por %p39, %p40
      %p42 = scmp.ne.s32.totalorder %s34, %s37
      %p43 = scmp.eq.s32.totalorder %s24, 0
      %p44 = por %p42, %p43
      %p45 = scmp.ne.s32.totalorder %s34, %s37
      %p46 = scmp.eq.s32.totalorder %s29, 1
      %p47 = por %p45, %p46
      %p48 = scmp.ne.s32.totalorder %s37, %s38
      %p49 = scmp.eq.s32.totalorder %s29, 0
      %p50 = por %p48, %p49
      %p51 = scmp.ne.s32.totalorder %s37, %s38
      %p52 = scmp.eq.s32.totalorder %s30, 1
      %p53 = por %p51, %p52
      %p55 = scmp.ne.s32.totalorder %s38, %s54
      %p56 = scmp.eq.s32.totalorder %s30, 0
      %p57 = por %p55, %p56
      %s59 = sadd.s32 %s58, 1
      %p62 = scmp.eq.s32.totalorder %s24, 1
      %p63 = scmp.ne.s32.totalorder %s58, %s60
      %p64 = scmp.eq.s32.totalorder %s24, 0
      %p65 = por %p63, %p64
      %p66 = scmp.ne.s32.totalorder %s58, %s60
      %p67 = scmp.eq.s32.totalorder %s29, 1
      %p68 = por %p66, %p67
      %p69 = scmp.ne.s32.totalorder %s60, %s61
      %p70 = scmp.eq.s32.totalorder %s29, 0
      %p71 = por %p69, %p70
      %p72 = scmp.ne.s32.totalorder %s60, %s61
      %p73 = scmp.eq.s32.totalorder %s30, 1
      %p74 = por %p72, %p73
      %p76 = scmp.ne.s32.totalorder %s61, %s75
      %p77 = scmp.eq.s32.totalorder %s30, 0
      %p78 = por %p76, %p77
      %s80 = sadd.s32 %s79, 1
      %p83 = scmp.eq.s32.totalorder %s24, 1
      %p84 = scmp.ne.s32.totalorder %s79, %s81
      %p85 = scmp.eq.s32.totalorder %s24, 0
      %p86 = por %p84, %p85
      %p87 = scmp.ne.s32.totalorder %s79, %s81
      %p88 = scmp.eq.s32.totalorder %s29, 1
      %p89 = por %p87, %p88
      %p90 = scmp.ne.s32.totalorder %s81, %s82
      %p91 = scmp.eq.s32.totalorder %s29, 0
      %p92 = por %p90, %p91
      %p93 = scmp.ne.s32.totalorder %s81, %s82
      %p94 = scmp.eq.s32.totalorder %s30, 1
      %p95 = por %p93, %p94
      %p97 = scmp.ne.s32.totalorder %s82, %s96
      %p98 = scmp.eq.s32.totalorder %s30, 0
      %p99 = por %p97, %p98
      %s101 = sadd.s32 %s100, 1
      %p104 = scmp.eq.s32.totalorder %s24, 1
      %p105 = scmp.ne.s32.totalorder %s100, %s102
      %p106 = scmp.eq.s32.totalorder %s24, 0
      %p107 = por %p105, %p106
      %p108 = scmp.ne.s32.totalorder %s100, %s102
      %p109 = scmp.eq.s32.totalorder %s29, 1
      %p110 = por %p108, %p109
      %p111 = scmp.ne.s32.totalorder %s102, %s103
      %p112 = scmp.eq.s32.totalorder %s29, 0
      %p113 = por %p111, %p112
      %p114 = scmp.ne.s32.totalorder %s102, %s103
      %p115 = scmp.eq.s32.totalorder %s30, 1
      %p116 = por %p114, %p115
      %p118 = scmp.ne.s32.totalorder %s103, %s117
      %p119 = scmp.eq.s32.totalorder %s30, 0
      %p120 = por %p118, %p119
      %s122 = sadd.s32 %s121, 1
      %p125 = scmp.eq.s32.totalorder %s24, 1
      %p126 = scmp.ne.s32.totalorder %s121, %s123
      %p127 = scmp.eq.s32.totalorder %s24, 0
      %p128 = por %p126, %p127
      %p129 = scmp.ne.s32.totalorder %s121, %s123
      %p130 = scmp.eq.s32.totalorder %s29, 1
      %p131 = por %p129, %p130
      %p132 = scmp.ne.s32.totalorder %s123, %s124
      %p133 = scmp.eq.s32.totalorder %s29, 0
      %p134 = por %p132, %p133
      %p135 = scmp.ne.s32.totalorder %s123, %s124
      %p136 = scmp.eq.s32.totalorder %s30, 1
      %p137 = por %p135, %p136
      %p139 = scmp.ne.s32.totalorder %s124, %s138
      %p140 = scmp.eq.s32.totalorder %s30, 0
      %p141 = por %p139, %p140
      %s143 = sadd.s32 %s142, 1
      %p146 = scmp.eq.s32.totalorder %s24, 1
      %p147 = scmp.ne.s32.totalorder %s142, %s144
      %p148 = scmp.eq.s32.totalorder %s24, 0
      %p149 = por %p147, %p148
      %p150 = scmp.ne.s32.totalorder %s142, %s144
      %p151 = scmp.eq.s32.totalorder %s29, 1
      %p152 = por %p150, %p151
      %p153 = scmp.ne.s32.totalorder %s144, %s145
      %p154 = scmp.eq.s32.totalorder %s29, 0
      %p155 = por %p153, %p154
      %p156 = scmp.ne.s32.totalorder %s144, %s145
      %p157 = scmp.eq.s32.totalorder %s30, 1
      %p158 = por %p156, %p157
      %p160 = scmp.ne.s32.totalorder %s145, %s159
      %p161 = scmp.eq.s32.totalorder %s30, 0
      %p162 = por %p160, %p161
      %s164 = sadd.s32 %s163, 1
      %p167 = scmp.eq.s32.totalorder %s24, 1
      %p168 = scmp.ne.s32.totalorder %s163, %s165
      %p169 = scmp.eq.s32.totalorder %s24, 0
      %p170 = por %p168, %p169
      %p171 = scmp.ne.s32.totalorder %s163, %s165
      %p172 = scmp.eq.s32.totalorder %s29, 1
      %p173 = por %p171, %p172
      %p174 = scmp.ne.s32.totalorder %s165, %s166
      %p175 = scmp.eq.s32.totalorder %s29, 0
      %p176 = por %p174, %p175
      %p177 = scmp.ne.s32.totalorder %s165, %s166
      %p178 = scmp.eq.s32.totalorder %s30, 1
      %p179 = por %p177, %p178
      %p181 = scmp.ne.s32.totalorder %s166, %s180
      %p182 = scmp.eq.s32.totalorder %s30, 0
      %p183 = por %p181, %p182
      %s185 = sadd.s32 %s184, 1
      %p188 = scmp.eq.s32.totalorder %s24, 1
      %p189 = scmp.ne.s32.totalorder %s184, %s186
      %p190 = scmp.eq.s32.totalorder %s24, 0
      %p191 = por %p189, %p190
      %p192 = scmp.ne.s32.totalorder %s184, %s186
      %p193 = scmp.eq.s32.totalorder %s29, 1
      %p194 = por %p192, %p193
      %p195 = scmp.ne.s32.totalorder %s186, %s187
      %p196 = scmp.eq.s32.totalorder %s29, 0
      %p197 = por %p195, %p196
      %p198 = scmp.ne.s32.totalorder %s186, %s187
      %p199 = scmp.eq.s32.totalorder %s30, 1
      %p200 = por %p198, %p199
      %p202 = scmp.ne.s32.totalorder %s187, %s201
      %p203 = scmp.eq.s32.totalorder %s30, 0
      %p204 = por %p202, %p203
      %s206 = sadd.s32 %s205, 1
      %p209 = scmp.eq.s32.totalorder %s24, 1
      %p210 = scmp.ne.s32.totalorder %s205, %s207
      %p211 = scmp.eq.s32.totalorder %s24, 0
      %p212 = por %p210, %p211
      %p213 = scmp.ne.s32.totalorder %s205, %s207
      %p214 = scmp.eq.s32.totalorder %s29, 1
      %p215 = por %p213, %p214
      %p216 = scmp.ne.s32.totalorder %s207, %s208
      %p217 = scmp.eq.s32.totalorder %s29, 0
      %p218 = por %p216, %p217
      %p219 = scmp.ne.s32.totalorder %s207, %s208
      %p220 = scmp.eq.s32.totalorder %s30, 1
      %p221 = por %p219, %p220
      %p223 = scmp.ne.s32.totalorder %s208, %s222
      %p224 = scmp.eq.s32.totalorder %s30, 0
      %p225 = por %p223, %p224
      %s227 = sadd.s32 %s226, 1
      %p230 = scmp.eq.s32.totalorder %s24, 1
      %p231 = scmp.ne.s32.totalorder %s226, %s228
      %p232 = scmp.eq.s32.totalorder %s24, 0
      %p233 = por %p231, %p232
      %p234 = scmp.ne.s32.totalorder %s226, %s228
      %p235 = scmp.eq.s32.totalorder %s29, 1
      %p236 = por %p234, %p235
      %p237 = scmp.ne.s32.totalorder %s228, %s229
      %p238 = scmp.eq.s32.totalorder %s29, 0
      %p239 = por %p237, %p238
      %p240 = scmp.ne.s32.totalorder %s228, %s229
      %p241 = scmp.eq.s32.totalorder %s30, 1
      %p242 = por %p240, %p241
      %p244 = scmp.ne.s32.totalorder %s229, %s243
      %p245 = scmp.eq.s32.totalorder %s30, 0
      %p246 = por %p244, %p245
      %s248 = sadd.s32 %s247, 1
      %p251 = scmp.eq.s32.totalorder %s24, 1
      %p252 = scmp.ne.s32.totalorder %s247, %s249
      %p253 = scmp.eq.s32.totalorder %s24, 0
      %p254 = por %p252, %p253
      %p255 = scmp.ne.s32.totalorder %s247, %s249
      %p256 = scmp.eq.s32.totalorder %s29, 1
      %p257 = por %p255, %p256
      %p258 = scmp.ne.s32.totalorder %s249, %s250
      %p259 = scmp.eq.s32.totalorder %s29, 0
      %p260 = por %p258, %p259
      %p261 = scmp.ne.s32.totalorder %s249, %s250
      %p262 = scmp.eq.s32.totalorder %s30, 1
      %p263 = por %p261, %p262
      %p265 = scmp.ne.s32.totalorder %s250, %s264
      %p266 = scmp.eq.s32.totalorder %s30, 0
      %p267 = por %p265, %p266
      %s269 = sadd.s32 %s268, 1
      %p272 = scmp.eq.s32.totalorder %s24, 1
      %p273 = scmp.ne.s32.totalorder %s268, %s270
      %p274 = scmp.eq.s32.totalorder %s24, 0
      %p275 = por %p273, %p274
      %p276 = scmp.ne.s32.totalorder %s268, %s270
      %p277 = scmp.eq.s32.totalorder %s29, 1
      %p278 = por %p276, %p277
      %p279 = scmp.ne.s32.totalorder %s270, %s271
      %p280 = scmp.eq.s32.totalorder %s29, 0
      %p281 = por %p279, %p280
      %p282 = scmp.ne.s32.totalorder %s270, %s271
      %p283 = scmp.eq.s32.totalorder %s30, 1
      %p284 = por %p282, %p283
      %p286 = scmp.ne.s32.totalorder %s271, %s285
      %p287 = scmp.eq.s32.totalorder %s30, 0
      %p288 = por %p286, %p287
      %s290 = sadd.s32 %s289, 1
      %p293 = scmp.eq.s32.totalorder %s24, 1
      %p294 = scmp.ne.s32.totalorder %s289, %s291
      %p295 = scmp.eq.s32.totalorder %s24, 0
      %p296 = por %p294, %p295
      %p297 = scmp.ne.s32.totalorder %s289, %s291
      %p298 = scmp.eq.s32.totalorder %s29, 1
      %p299 = por %p297, %p298
      %p300 = scmp.ne.s32.totalorder %s291, %s292
      %p301 = scmp.eq.s32.totalorder %s29, 0
      %p302 = por %p300, %p301
      %p303 = scmp.ne.s32.totalorder %s291, %s292
      %p304 = scmp.eq.s32.totalorder %s30, 1
      %p305 = por %p303, %p304
      %p307 = scmp.ne.s32.totalorder %s292, %s306
      %p308 = scmp.eq.s32.totalorder %s30, 0
      %p309 = por %p307, %p308
      %s311 = sadd.s32 %s310, 1
      %p314 = scmp.eq.s32.totalorder %s24, 1
      %p315 = scmp.ne.s32.totalorder %s310, %s312
      %p316 = scmp.eq.s32.totalorder %s24, 0
      %p317 = por %p315, %p316
      %p318 = scmp.ne.s32.totalorder %s310, %s312
      %p319 = scmp.eq.s32.totalorder %s29, 1
      %p320 = por %p318, %p319
      %p321 = scmp.ne.s32.totalorder %s312, %s313
      %p322 = scmp.eq.s32.totalorder %s29, 0
      %p323 = por %p321, %p322
      %p324 = scmp.ne.s32.totalorder %s312, %s313
      %p325 = scmp.eq.s32.totalorder %s30, 1
      %p326 = por %p324, %p325
      %p328 = scmp.ne.s32.totalorder %s313, %s327
      %p329 = scmp.eq.s32.totalorder %s30, 0
      %p330 = por %p328, %p329
      %s332 = sadd.s32 %s331, 1
      %p335 = scmp.eq.s32.totalorder %s24, 1
      %p336 = scmp.ne.s32.totalorder %s331, %s333
      %p337 = scmp.eq.s32.totalorder %s24, 0
      %p338 = por %p336, %p337
      %p339 = scmp.ne.s32.totalorder %s331, %s333
      %p340 = scmp.eq.s32.totalorder %s29, 1
      %p341 = por %p339, %p340
      %p342 = scmp.ne.s32.totalorder %s333, %s334
      %p343 = scmp.eq.s32.totalorder %s29, 0
      %p344 = por %p342, %p343
      %p345 = scmp.ne.s32.totalorder %s333, %s334
      %p346 = scmp.eq.s32.totalorder %s30, 1
      %p347 = por %p345, %p346
      %p349 = scmp.ne.s32.totalorder %s334, %s348
      %p350 = scmp.eq.s32.totalorder %s30, 0
      %p351 = por %p349, %p350
      %s352 = ssub.s32 %s24, %s31
      %p353 = scmp.eq.s32.totalorder %s352, 0
      %s355 = sadd.s32 %s354, 1
      %s356 = scalar_select %p353, %s354, %s355
      %p359 = pneg %p353
      %p360 = scmp.eq.s32.totalorder %s24, 1
      %p361 = por %p359, %p360
      %p362 = scmp.ne.s32.totalorder %s354, %s357
      %p363 = scmp.eq.s32.totalorder %s24, 0
      %p364 = por %p362, %p363
      %p365 = scmp.ne.s32.totalorder %s354, %s357
      %p366 = scmp.eq.s32.totalorder %s29, 1
      %p367 = por %p365, %p366
      %p368 = scmp.ne.s32.totalorder %s357, %s358
      %p369 = scmp.eq.s32.totalorder %s29, 0
      %p370 = por %p368, %p369
      %p371 = scmp.ne.s32.totalorder %s357, %s358
      %p372 = scmp.eq.s32.totalorder %s30, 1
      %p373 = por %p371, %p372
      %p375 = scmp.ne.s32.totalorder %s358, %s374
      %p376 = scmp.eq.s32.totalorder %s30, 0
      %p377 = por %p375, %p376
      %p378 = scmp.le.s32.totalorder 1, %s24
      %p379 = scmp.lt.s32.totalorder %s24, 3
      %p380 = pnand %p378, %p379
      %p381 = pneg %p380
      // Predicated region
      $region9: #{stage_module_forward.1} parent=5 // pred_check
        _
      $region10: #{stage_module_forward.1} parent=5 // pred_check_branch
        %383 = sbr.rel (%p380) target = $region12
      $region11: #{stage_module_forward.1} parent=5 // pred_region
        %s384 = ssub.s32 %s24, 1
        // Predicated region
        $region13: #{stage_module_forward.1} parent=11 // pred_check
          %p385 = pneg %p71
        $region14: #{stage_module_forward.1} parent=11 // pred_check_branch
          %387 = sbr.rel (%p385) target = $region16
        $region15: #{stage_module_forward.1} parent=11 // pred_region
          _
        $region16: #{stage_module_forward.1} parent=11 // pred_fallthru
          _
        // Predicated region
        $region17: #{stage_module_forward.1} parent=11 // pred_check
          %p388 = pneg %p92
        $region18: #{stage_module_forward.1} parent=11 // pred_check_branch
          %390 = sbr.rel (%p388) target = $region20
        $region19: #{stage_module_forward.1} parent=11 // pred_region
          _
        $region20: #{stage_module_forward.1} parent=11 // pred_fallthru
          _
        // Predicated region
        $region21: #{stage_module_forward.1} parent=11 // pred_check
          %p391 = pneg %p113
        $region22: #{stage_module_forward.1} parent=11 // pred_check_branch
          %393 = sbr.rel (%p391) target = $region24
        $region23: #{stage_module_forward.1} parent=11 // pred_region
          _
        $region24: #{stage_module_forward.1} parent=11 // pred_fallthru
          _
        // Predicated region
        $region25: #{stage_module_forward.1} parent=11 // pred_check
          %p394 = pneg %p134
        $region26: #{stage_module_forward.1} parent=11 // pred_check_branch
          %396 = sbr.rel (%p394) target = $region28
        $region27: #{stage_module_forward.1} parent=11 // pred_region
          _
        $region28: #{stage_module_forward.1} parent=11 // pred_fallthru
          _
        // Predicated region
        $region29: #{stage_module_forward.1} parent=11 // pred_check
          %p397 = pneg %p155
        $region30: #{stage_module_forward.1} parent=11 // pred_check_branch
          %399 = sbr.rel (%p397) target = $region32
        $region31: #{stage_module_forward.1} parent=11 // pred_region
          _
        $region32: #{stage_module_forward.1} parent=11 // pred_fallthru
          _
        // Predicated region
        $region33: #{stage_module_forward.1} parent=11 // pred_check
          %p400 = pneg %p176
        $region34: #{stage_module_forward.1} parent=11 // pred_check_branch
          %402 = sbr.rel (%p400) target = $region36
        $region35: #{stage_module_forward.1} parent=11 // pred_region
          _
        $region36: #{stage_module_forward.1} parent=11 // pred_fallthru
          _
        // Predicated region
        $region37: #{stage_module_forward.1} parent=11 // pred_check
          %p403 = pneg %p197
        $region38: #{stage_module_forward.1} parent=11 // pred_check_branch
          %405 = sbr.rel (%p403) target = $region40
        $region39: #{stage_module_forward.1} parent=11 // pred_region
          _
        $region40: #{stage_module_forward.1} parent=11 // pred_fallthru
          _
        // Predicated region
        $region41: #{stage_module_forward.1} parent=11 // pred_check
          %p406 = pneg %p218
        $region42: #{stage_module_forward.1} parent=11 // pred_check_branch
          %408 = sbr.rel (%p406) target = $region44
        $region43: #{stage_module_forward.1} parent=11 // pred_region
          _
        $region44: #{stage_module_forward.1} parent=11 // pred_fallthru
          _
        // Predicated region
        $region45: #{stage_module_forward.1} parent=11 // pred_check
          %p409 = pneg %p239
        $region46: #{stage_module_forward.1} parent=11 // pred_check_branch
          %411 = sbr.rel (%p409) target = $region48
        $region47: #{stage_module_forward.1} parent=11 // pred_region
          _
        $region48: #{stage_module_forward.1} parent=11 // pred_fallthru
          _
        // Predicated region
        $region49: #{stage_module_forward.1} parent=11 // pred_check
          %p412 = pneg %p260
        $region50: #{stage_module_forward.1} parent=11 // pred_check_branch
          %414 = sbr.rel (%p412) target = $region52
        $region51: #{stage_module_forward.1} parent=11 // pred_region
          _
        $region52: #{stage_module_forward.1} parent=11 // pred_fallthru
          _
        // Predicated region
        $region53: #{stage_module_forward.1} parent=11 // pred_check
          %p415 = pneg %p281
        $region54: #{stage_module_forward.1} parent=11 // pred_check_branch
          %417 = sbr.rel (%p415) target = $region56
        $region55: #{stage_module_forward.1} parent=11 // pred_region
          _
        $region56: #{stage_module_forward.1} parent=11 // pred_fallthru
          _
        // Predicated region
        $region57: #{stage_module_forward.1} parent=11 // pred_check
          %p418 = pneg %p302
        $region58: #{stage_module_forward.1} parent=11 // pred_check_branch
          %420 = sbr.rel (%p418) target = $region60
        $region59: #{stage_module_forward.1} parent=11 // pred_region
          _
        $region60: #{stage_module_forward.1} parent=11 // pred_fallthru
          _
        // Predicated region
        $region61: #{stage_module_forward.1} parent=11 // pred_check
          %p421 = pneg %p323
        $region62: #{stage_module_forward.1} parent=11 // pred_check_branch
          %423 = sbr.rel (%p421) target = $region64
        $region63: #{stage_module_forward.1} parent=11 // pred_region
          _
        $region64: #{stage_module_forward.1} parent=11 // pred_fallthru
          _
        // Predicated region
        $region65: #{stage_module_forward.1} parent=11 // pred_check
          %p424 = pneg %p344
        $region66: #{stage_module_forward.1} parent=11 // pred_check_branch
          %426 = sbr.rel (%p424) target = $region68
        $region67: #{stage_module_forward.1} parent=11 // pred_region
          _
        $region68: #{stage_module_forward.1} parent=11 // pred_fallthru
          _
      $region12: #{stage_module_forward.1} parent=5 // pred_fallthru
        _
      %p427 = scmp.lt.s32.totalorder %s24, 2
      // Predicated region
      $region69: #{stage_module_forward.1} parent=5 // pred_check
        %p428 = pneg %p427
      $region70: #{stage_module_forward.1} parent=5 // pred_check_branch
        %430 = sbr.rel (%p428) target = $region72
      $region71: #{stage_module_forward.1} parent=5 // pred_region
        // Predicated region
        $region73: #{stage_module_forward.1} parent=71 // pred_check
          %p431 = pneg %p44
        $region74: #{stage_module_forward.1} parent=71 // pred_check_branch
          %433 = sbr.rel (%p431) target = $region76
        $region75: #{stage_module_forward.1} parent=71 // pred_region
          %p434 = scmp.lt.s32.totalorder %s24, 1
          %s435 = scalar_select %p434, %s24, 1
          %s436 = smul.addr %s435, 8
          %s437 = smul.addr %s436, 8
          %s438 = scalar_lea.vmem %s0, %s437
        $region76: #{stage_module_forward.1} parent=71 // pred_fallthru
          _
      $region72: #{stage_module_forward.1} parent=5 // pred_fallthru
        _
      %p439 = scmp.le.s32.totalorder 1, %s24
      %p440 = scmp.lt.s32.totalorder %s24, 3
      %p441 = pnand %p439, %p440
      %p442 = pneg %p441
      // Predicated region
      $region77: #{stage_module_forward.1} parent=5 // pred_check
        _
      $region78: #{stage_module_forward.1} parent=5 // pred_check_branch
        %444 = sbr.rel (%p441) target = $region80
      $region79: #{stage_module_forward.1} parent=5 // pred_region
        %s445 = ssub.s32 %s24, 1
        %p446 = scmp.lt.s32.totalorder %s29, 1
        %s447 = scalar_select %p446, %s29, 1
        %s448 = smul.addr %s447, 8
        %s449 = smul.addr %s448, 8
        %s450 = scalar_lea.vmem %s0, %s449
        %p451 = pneg %p50
        %p452 = pneg %p47
        %p453 = pneg %p71
        %p454 = pneg %p68
        %p455 = pneg %p92
        %p456 = pneg %p89
        %p457 = pneg %p113
        %p458 = pneg %p110
        %p459 = pneg %p134
        %p460 = pneg %p131
        %p461 = pneg %p155
        %p462 = pneg %p152
        %p463 = pneg %p176
        %p464 = pneg %p173
        %p465 = pneg %p197
        %p466 = pneg %p194
        %p467 = pneg %p218
        %p468 = pneg %p215
        %p469 = pneg %p239
        %p470 = pneg %p236
        %p471 = pneg %p260
        %p472 = pneg %p257
        %p473 = pneg %p281
        %p474 = pneg %p278
        %p475 = pneg %p302
        %p476 = pneg %p299
        %p477 = pneg %p323
        %p478 = pneg %p320
        %p479 = pneg %p344
        %p480 = pneg %p341
        %p481 = pneg %p370
        %p482 = pneg %p367
        %s483 = sand.u32 %s357, 1
        %s484 = scalar_lea.sflag [#allocation3], %s483
        %s485 = sand.u32 %s357, 1
        %s486 = smul.addr %s485, 64
        %s487 = scalar_lea.vmem [#allocation2], %s486
        %p488 = scmp.lt.s32.totalorder %s29, 1
        %s489 = scalar_select %p488, %s29, 1
        %s490 = smul.addr %s489, 8
        %s491 = smul.addr %s490, 8
        %s492 = scalar_lea.vmem %s0, %s491
        %v494 = vld [vmem:[%s492] sm:$0xff]
        %v495 = vld [vmem:[%s492 + $0x8] sm:$0xff]
        %v496 = vld [vmem:[%s492 + $0x10] sm:$0xff]
        %v497 = vld [vmem:[%s492 + $0x18] sm:$0xff]
        %v498 = vld [vmem:[%s492 + $0x20] sm:$0xff]
        %v499 = vld [vmem:[%s492 + $0x28] sm:$0xff]
        %v500 = vld [vmem:[%s492 + $0x30] sm:$0xff]
        %v501 = vld [vmem:[%s492 + $0x38] sm:$0xff]
        %v502 = vpack.c.bf16 %v495, %v494
        %v503 = vpack.c.bf16 %v497, %v496
        %v504 = vpack.c.bf16 %v499, %v498
        %v505 = vpack.c.bf16 %v501, %v500
        %v506 = vld [vmem:[%s1] sm:$0xf]
        %v507 = vld [vmem:[%s1 + $0x4] sm:$0xf]
        %v508 = vld [vmem:[%s2] sm:$0x1]
        %v510 = vlaneseq
        %v511 = vshrl.u32 %v510, 7
        %v512 = vsub.s32 0, %v511
        %v513 = vrot.slane %v508, %v512
        %v517 = vunpack.c.l.b16 %v506
        %v518 = vunpack.c.l.b16 %v507
        %v519 = vpack.c.b16 %v518, %v517
        %vm521 = vcmask 130048
        %v523 = vsel %vm521, %v502, 0
        %v526 = vsel %vm521, %v503, 0
        %v529 = vsel %vm521, %v504, 0
        %v532 = vsel %vm521, %v505, 0
        %534 = vmatprep.subr.bf16.mxu0 0
        %535 = vmatpush1.bf16.msra.mxu0 0
        %536 = vmatprep.subr.bf16.mxu0 0
        %537 = vmatpush1.bf16.msra.mxu0 0
        %538 = vmatprep.subr.bf16.mxu0 0
        %539 = vmatpush1.bf16.msra.mxu0 0
        %540 = vmatprep.subr.bf16.mxu0 0
        %541 = vmatpush1.bf16.msra.mxu0 0
        %542 = vmatprep.subr.bf16.mxu0 0
        %543 = vmatpush1.bf16.msra.mxu0 0
        %544 = vmatprep.subr.bf16.mxu0 0
        %545 = vmatpush1.bf16.msra.mxu0 0
        %546 = vmatprep.subr.bf16.mxu0 0
        %547 = vmatpush1.bf16.msra.mxu0 0
        %548 = vmatprep.subr.bf16.mxu0 0
        %549 = vmatpush1.bf16.msra.mxu0 %v519
        %550 = vmatprep.subr.bf16.mxu0 0
        %551 = vmatpush2.bf16.msra.mxu0 0
        %552 = vmatprep.subr.bf16.mxu0 0
        %553 = vmatpush2.bf16.msra.mxu0 0
        %554 = vmatprep.subr.bf16.mxu0 0
        %555 = vmatpush2.bf16.msra.mxu0 0
        %556 = vmatprep.subr.bf16.mxu0 0
        %557 = vmatpush2.bf16.msra.mxu0 0
        %558 = vmatprep.subr.bf16.mxu0 0
        %559 = vmatpush2.bf16.msra.mxu0 0
        %560 = vmatprep.subr.bf16.mxu0 0
        %561 = vmatpush2.bf16.msra.mxu0 0
        %562 = vmatprep.subr.bf16.mxu0 0
        %563 = vmatpush2.bf16.msra.mxu0 0
        %564 = vmatprep.subr.bf16.mxu0 0
        %565 = vmatpush2.bf16.msra.mxu0 0
        %566 = vmatprep.mubr.bf16.mxu0 0
        %567 = vmatmul.mubr.bf16.gmra.mxu0 %v523
        %v568 = vpop.f32.mrf.mxu0
        %v569 = vadd.f32 %v513, %v568
        %v570 = vpop.f32.mrf.mxu0
        %v571 = vpop.f32.mrf.mxu0
        %v572 = vadd.f32 %v513, %v571
        %v573 = vpop.f32.mrf.mxu0
        %574 = vmatprep.mubr.bf16.mxu0 0
        %575 = vmatmul.mubr.bf16.gmra.mxu0 %v526
        %v576 = vpop.f32.mrf.mxu0
        %v577 = vadd.f32 %v513, %v576
        %v578 = vpop.f32.mrf.mxu0
        %v579 = vpop.f32.mrf.mxu0
        %v580 = vadd.f32 %v513, %v579
        %v581 = vpop.f32.mrf.mxu0
        %582 = vmatprep.mubr.bf16.mxu0 0
        %583 = vmatmul.mubr.bf16.gmra.mxu0 %v529
        %v584 = vpop.f32.mrf.mxu0
        %v585 = vadd.f32 %v513, %v584
        %v586 = vpop.f32.mrf.mxu0
        %v587 = vpop.f32.mrf.mxu0
        %v588 = vadd.f32 %v513, %v587
        %v589 = vpop.f32.mrf.mxu0
        %590 = vmatprep.mubr.bf16.mxu0 0
        %591 = vmatmul.mubr.bf16.gmra.mxu0 %v532
        %v592 = vpop.f32.mrf.mxu0
        %v593 = vadd.f32 %v513, %v592
        %v594 = vpop.f32.mrf.mxu0
        %v595 = vpop.f32.mrf.mxu0
        %v596 = vadd.f32 %v513, %v595
        %v597 = vpop.f32.mrf.mxu0
        %598 = vdwg.mxu0
        %v599 = vld [vmem:[%s3] sm:$0x1]
        %v600 = vld [vmem:[%s4] sm:$0x1]
        %v601 = vmul.f32 %v569, %v569
        %v602 = vmul.f32 %v572, %v572
        %v603 = vmul.f32 %v577, %v577
        %v604 = vmul.f32 %v580, %v580
        %v605 = vmul.f32 %v585, %v585
        %v606 = vmul.f32 %v588, %v588
        %v607 = vmul.f32 %v593, %v593
        %v608 = vmul.f32 %v596, %v596
        %vm609 = vcmask 261120
        %v610 = vsel %vm609, %v601, 0.0
        %v611 = vsel %vm609, %v602, 0.0
        %v612 = vadd.f32 %v610, %v611
        %v613 = vsel %vm609, %v603, 0.0
        %v614 = vadd.f32 %v612, %v613
        %v615 = vsel %vm609, %v604, 0.0
        %v616 = vadd.f32 %v614, %v615
        %v617 = vsel %vm609, %v605, 0.0
        %v618 = vadd.f32 %v616, %v617
        %v619 = vsel %vm609, %v606, 0.0
        %v620 = vadd.f32 %v618, %v619
        %v621 = vsel %vm609, %v607, 0.0
        %v622 = vadd.f32 %v620, %v621
        %v623 = vsel %vm609, %v608, 0.0
        %v624 = vadd.f32 %v622, %v623
        %v625 = vrot.slane %v624, 4
        %v626 = vadd.f32 %v624, %v625
        %v627 = vrot.slane %v626, 2
        %v628 = vadd.f32 %v626, %v627
        %v629 = vrot.slane %v628, 1
        %v630 = vadd.f32 %v628, %v629
        %v631 = vrsqrt.pop %v630
        %v632 = vmul.f32 %v630, %v631
        %vm633 = vcmp.eq.f32.partialorder %v630, inf
        %v634 = vsel %vm633, %v630, %v632
        %vm635 = vcmp.eq.f32.partialorder %v630, 0.0
        %v636 = vand.u32 %v630, 2147483648
        %v637 = vsel %vm635, %v636, %v634
        %v638 = vsel %vm609, %v637, 0.0
        %639 = vadd.xlane.f32.xlu0 %v638
        %v640 = vpop.xlane.xlu0 %639
        %v641 = vrcp.pop 32.0
        %v642 = vmul.f32 %v640, %v641
        %v643 = vadd.f32 %v642, 1e-06
        %v644 = vrcp.pop %v643
        %v645 = vmul.f32 %v637, %v644
        %v646 = vmul.f32 %v569, %v645
        %v647 = vmul.f32 %v572, %v645
        %v648 = vmul.f32 %v577, %v645
        %v649 = vmul.f32 %v580, %v645
        %v650 = vmul.f32 %v585, %v645
        %v651 = vmul.f32 %v588, %v645
        %v652 = vmul.f32 %v593, %v645
        %v653 = vmul.f32 %v596, %v645
        %v655 = vlaneseq
        %v656 = vshrl.u32 %v655, 7
        %v657 = vsub.s32 0, %v656
        %v658 = vrot.slane %v599, %v657
        %v660 = vmul.f32 %v658, %v646
        %v661 = vmul.f32 %v658, %v647
        %v662 = vmul.f32 %v658, %v648
        %v663 = vmul.f32 %v658, %v649
        %v664 = vmul.f32 %v658, %v650
        %v665 = vmul.f32 %v658, %v651
        %v666 = vmul.f32 %v658, %v652
        %v667 = vmul.f32 %v658, %v653
        %v669 = vlaneseq
        %v670 = vshrl.u32 %v669, 7
        %v671 = vsub.s32 0, %v670
        %v672 = vrot.slane %v600, %v671
        %v674 = vadd.f32 %v660, %v672
        %v675 = vadd.f32 %v661, %v672
        %v676 = vadd.f32 %v662, %v672
        %v677 = vadd.f32 %v663, %v672
        %v678 = vadd.f32 %v664, %v672
        %v679 = vadd.f32 %v665, %v672
        %v680 = vadd.f32 %v666, %v672
        %v681 = vadd.f32 %v667, %v672
        %v682 = vadd.f32 %v674, %v569
        %v683 = vadd.f32 %v675, %v572
        %v684 = vadd.f32 %v676, %v577
        %v685 = vadd.f32 %v677, %v580
        %v686 = vadd.f32 %v678, %v585
        %v687 = vadd.f32 %v679, %v588
        %v688 = vadd.f32 %v680, %v593
        %v689 = vadd.f32 %v681, %v596
        %v690 = vpack.c.bf16 %v683, %v682
        %v691 = vpack.c.bf16 %v685, %v684
        %v692 = vpack.c.bf16 %v687, %v686
        %v693 = vpack.c.bf16 %v689, %v688
        %v694 = vld [vmem:[%s5] sm:$0xf]
        %v695 = vld [vmem:[%s5 + $0x4] sm:$0xf]
        %v696 = vld [vmem:[%s5 + $0x8] sm:$0xf]
        %v697 = vld [vmem:[%s5 + $0xc] sm:$0xf]
        %v702 = vunpack.c.l.b16 %v694
        %v703 = vunpack.c.l.b16 %v695
        %v704 = vunpack.c.l.b16 %v696
        %v705 = vunpack.c.l.b16 %v697
        %v706 = vpack.c.b16 %v703, %v702
        %v707 = vpack.c.b16 %v705, %v704
        %v711 = vsel %vm609, %v690, 0
        %v714 = vsel %vm609, %v691, 0
        %v717 = vsel %vm609, %v692, 0
        %v720 = vsel %vm609, %v693, 0
        %722 = vmatprep.subr.bf16.mxu0 0
        %723 = vmatpush1.bf16.msra.mxu0 0
        %724 = vmatprep.subr.bf16.mxu0 0
        %725 = vmatpush1.bf16.msra.mxu0 0
        %726 = vmatprep.subr.bf16.mxu0 0
        %727 = vmatpush1.bf16.msra.mxu0 0
        %728 = vmatprep.subr.bf16.mxu0 0
        %729 = vmatpush1.bf16.msra.mxu0 0
        %730 = vmatprep.subr.bf16.mxu0 0
        %731 = vmatpush1.bf16.msra.mxu0 0
        %732 = vmatprep.subr.bf16.mxu0 0
        %733 = vmatpush1.bf16.msra.mxu0 0
        %734 = vmatprep.subr.bf16.mxu0 0
        %735 = vmatpush1.bf16.msra.mxu0 %v707
        %736 = vmatprep.subr.bf16.mxu0 0
        %737 = vmatpush1.bf16.msra.mxu0 %v706
        %738 = vmatprep.subr.bf16.mxu0 0
        %739 = vmatpush2.bf16.msra.mxu0 0
        %740 = vmatprep.subr.bf16.mxu0 0
        %741 = vmatpush2.bf16.msra.mxu0 0
        %742 = vmatprep.subr.bf16.mxu0 0
        %743 = vmatpush2.bf16.msra.mxu0 0
        %744 = vmatprep.subr.bf16.mxu0 0
        %745 = vmatpush2.bf16.msra.mxu0 0
        %746 = vmatprep.subr.bf16.mxu0 0
        %747 = vmatpush2.bf16.msra.mxu0 0
        %748 = vmatprep.subr.bf16.mxu0 0
        %749 = vmatpush2.bf16.msra.mxu0 0
        %750 = vmatprep.subr.bf16.mxu0 0
        %751 = vmatpush2.bf16.msra.mxu0 0
        %752 = vmatprep.subr.bf16.mxu0 0
        %753 = vmatpush2.bf16.msra.mxu0 0
        %754 = vmatprep.mubr.bf16.mxu0 0
        %755 = vmatmul.mubr.bf16.gmra.mxu0 %v711
        %v756 = vpop.f32.mrf.mxu0
        %v757 = vadd.f32 0.0, %v756
        %v758 = vpop.f32.mrf.mxu0
        %v759 = vpop.f32.mrf.mxu0
        %v760 = vadd.f32 0.0, %v759
        %v761 = vpop.f32.mrf.mxu0
        %762 = vmatprep.mubr.bf16.mxu0 0
        %763 = vmatmul.mubr.bf16.gmra.mxu0 %v714
        %v764 = vpop.f32.mrf.mxu0
        %v765 = vadd.f32 0.0, %v764
        %v766 = vpop.f32.mrf.mxu0
        %v767 = vpop.f32.mrf.mxu0
        %v768 = vadd.f32 0.0, %v767
        %v769 = vpop.f32.mrf.mxu0
        %770 = vmatprep.mubr.bf16.mxu0 0
        %771 = vmatmul.mubr.bf16.gmra.mxu0 %v717
        %v772 = vpop.f32.mrf.mxu0
        %v773 = vadd.f32 0.0, %v772
        %v774 = vpop.f32.mrf.mxu0
        %v775 = vpop.f32.mrf.mxu0
        %v776 = vadd.f32 0.0, %v775
        %v777 = vpop.f32.mrf.mxu0
        %778 = vmatprep.mubr.bf16.mxu0 0
        %779 = vmatmul.mubr.bf16.gmra.mxu0 %v720
        %v780 = vpop.f32.mrf.mxu0
        %v781 = vadd.f32 0.0, %v780
        %v782 = vpop.f32.mrf.mxu0
        %v783 = vpop.f32.mrf.mxu0
        %v784 = vadd.f32 0.0, %v783
        %v785 = vpop.f32.mrf.mxu0
        %786 = vdwg.mxu0
        %v787 = vld [vmem:[%s8] sm:$0xff]
        %v788 = vld [vmem:[%s8 + $0x8] sm:$0xff]
        %v789 = vld [vmem:[%s8 + $0x10] sm:$0xff]
        %v790 = vld [vmem:[%s8 + $0x18] sm:$0xff]
        %v791 = vld [vmem:[%s8 + $0x20] sm:$0xff]
        %v792 = vld [vmem:[%s8 + $0x28] sm:$0xff]
        %v793 = vld [vmem:[%s8 + $0x30] sm:$0xff]
        %v794 = vld [vmem:[%s8 + $0x38] sm:$0xff]
        %v795 = vpack.c.bf16 %v760, %v757
        %v796 = vpack.c.bf16 %v768, %v765
        %v797 = vpack.c.bf16 %v776, %v773
        %v798 = vpack.c.bf16 %v784, %v781
        %803 = vrot.lane.b32.xlu0 %v795, 96
        %v804 = vpop.permute.xlu0 %803
        %805 = vrot.lane.b32.xlu0 %v796, 96
        %v806 = vpop.permute.xlu0 %805
        %807 = vrot.lane.b32.xlu0 %v797, 96
        %v808 = vpop.permute.xlu0 %807
        %809 = vrot.lane.b32.xlu0 %v798, 96
        %v810 = vpop.permute.xlu0 %809
        %v812 = vsel %vm521, %v795, 0
        %v815 = vsel %vm521, %v796, 0
        %v818 = vsel %vm521, %v797, 0
        %v821 = vsel %vm521, %v798, 0
        %v824 = vsel %vm521, %v804, 0
        %v827 = vsel %vm521, %v806, 0
        %v830 = vsel %vm521, %v808, 0
        %v833 = vsel %vm521, %v810, 0
        %835 = vmatprep.subr.bf16.mxu0 0
        %836 = vmatpush1.bf16.xpose.msra.mxu0 0
        %837 = vmatprep.subr.bf16.mxu0 0
        %838 = vmatpush1.bf16.xpose.msra.mxu0 0
        %839 = vmatprep.subr.bf16.mxu0 0
        %840 = vmatpush1.bf16.xpose.msra.mxu0 0
        %841 = vmatprep.subr.bf16.mxu0 0
        %842 = vmatpush1.bf16.xpose.msra.mxu0 0
        %843 = vmatprep.subr.bf16.mxu0 0
        %844 = vmatpush1.bf16.xpose.msra.mxu0 %v833
        %845 = vmatprep.subr.bf16.mxu0 0
        %846 = vmatpush1.bf16.xpose.msra.mxu0 %v830
        %847 = vmatprep.subr.bf16.mxu0 0
        %848 = vmatpush1.bf16.xpose.msra.mxu0 %v827
        %849 = vmatprep.subr.bf16.mxu0 0
        %850 = vmatpush1.bf16.xpose.msra.mxu0 %v824
        %851 = vmatprep.subr.bf16.mxu0 0
        %852 = vmatpush2.bf16.xpose.msra.mxu0 0
        %853 = vmatprep.subr.bf16.mxu0 0
        %854 = vmatpush2.bf16.xpose.msra.mxu0 0
        %855 = vmatprep.subr.bf16.mxu0 0
        %856 = vmatpush2.bf16.xpose.msra.mxu0 0
        %857 = vmatprep.subr.bf16.mxu0 0
        %858 = vmatpush2.bf16.xpose.msra.mxu0 0
        %859 = vmatprep.subr.bf16.mxu0 0
        %860 = vmatpush2.bf16.xpose.msra.mxu0 0
        %861 = vmatprep.subr.bf16.mxu0 0
        %862 = vmatpush2.bf16.xpose.msra.mxu0 0
        %863 = vmatprep.subr.bf16.mxu0 0
        %864 = vmatpush2.bf16.xpose.msra.mxu0 0
        %865 = vmatprep.subr.bf16.mxu0 0
        %866 = vmatpush2.bf16.xpose.msra.mxu0 0
        %867 = vmatprep.mubr.bf16.mxu0 0
        %868 = vmatmul.mubr.bf16.gmra.mxu0 %v812
        %v869 = vpop.f32.mrf.mxu0
        %v870 = vadd.f32 %v787, %v869
        %v871 = vpop.f32.mrf.mxu0
        %v872 = vpop.f32.mrf.mxu0
        %v873 = vadd.f32 %v788, %v872
        %v874 = vpop.f32.mrf.mxu0
        %875 = vmatprep.mubr.bf16.mxu0 0
        %876 = vmatmul.mubr.bf16.gmra.mxu0 %v815
        %v877 = vpop.f32.mrf.mxu0
        %v878 = vadd.f32 %v789, %v877
        %v879 = vpop.f32.mrf.mxu0
        %v880 = vpop.f32.mrf.mxu0
        %v881 = vadd.f32 %v790, %v880
        %v882 = vpop.f32.mrf.mxu0
        %883 = vmatprep.mubr.bf16.mxu0 0
        %884 = vmatmul.mubr.bf16.gmra.mxu0 %v818
        %v885 = vpop.f32.mrf.mxu0
        %v886 = vadd.f32 %v791, %v885
        %v887 = vpop.f32.mrf.mxu0
        %v888 = vpop.f32.mrf.mxu0
        %v889 = vadd.f32 %v792, %v888
        %v890 = vpop.f32.mrf.mxu0
        %891 = vmatprep.mubr.bf16.mxu0 0
        %892 = vmatmul.mubr.bf16.gmra.mxu0 %v821
        %v893 = vpop.f32.mrf.mxu0
        %v894 = vadd.f32 %v793, %v893
        %v895 = vpop.f32.mrf.mxu0
        %v896 = vpop.f32.mrf.mxu0
        %v897 = vadd.f32 %v794, %v896
        %v898 = vpop.f32.mrf.mxu0
        %899 = vdwg.mxu0
        %vm900 = vcmask 523264
        %v901 = vsel %vm900, %v870, -inf
        %902 = vmax.xlane.f32.xlu0 %v901
        %v903 = vpop.xlane.xlu0 %902
        %v904 = vsel %vm900, %v873, -inf
        %905 = vmax.xlane.f32.xlu0 %v904
        %v906 = vpop.xlane.xlu0 %905
        %v907 = vsel %vm900, %v878, -inf
        %908 = vmax.xlane.f32.xlu0 %v907
        %v909 = vpop.xlane.xlu0 %908
        %v910 = vsel %vm900, %v881, -inf
        %911 = vmax.xlane.f32.xlu0 %v910
        %v912 = vpop.xlane.xlu0 %911
        %v913 = vsel %vm900, %v886, -inf
        %914 = vmax.xlane.f32.xlu0 %v913
        %v915 = vpop.xlane.xlu0 %914
        %v916 = vsel %vm900, %v889, -inf
        %917 = vmax.xlane.f32.xlu0 %v916
        %v918 = vpop.xlane.xlu0 %917
        %v919 = vsel %vm900, %v894, -inf
        %920 = vmax.xlane.f32.xlu0 %v919
        %v921 = vpop.xlane.xlu0 %920
        %v922 = vsel %vm900, %v897, -inf
        %923 = vmax.xlane.f32.xlu0 %v922
        %v924 = vpop.xlane.xlu0 %923
        %v925 = vsub.f32 %v870, %v903
        %v926 = vsub.f32 %v873, %v906
        %v927 = vsub.f32 %v878, %v909
        %v928 = vsub.f32 %v881, %v912
        %v929 = vsub.f32 %v886, %v915
        %v930 = vsub.f32 %v889, %v918
        %v931 = vsub.f32 %v894, %v921
        %v932 = vsub.f32 %v897, %v924
        %v933 = vmul.f32 %v925, 1.442695
        %v934 = vpow.pop %v933
        %v935 = vmul.f32 %v926, 1.442695
        %v936 = vpow.pop %v935
        %v937 = vmul.f32 %v927, 1.442695
        %v938 = vpow.pop %v937
        %v939 = vmul.f32 %v928, 1.442695
        %v940 = vpow.pop %v939
        %v941 = vmul.f32 %v929, 1.442695
        %v942 = vpow.pop %v941
        %v943 = vmul.f32 %v930, 1.442695
        %v944 = vpow.pop %v943
        %v945 = vmul.f32 %v931, 1.442695
        %v946 = vpow.pop %v945
        %v947 = vmul.f32 %v932, 1.442695
        %v948 = vpow.pop %v947
        %v949 = vsel %vm900, %v934, 0.0
        %950 = vadd.xlane.f32.xlu0 %v949
        %v951 = vpop.xlane.xlu0 %950
        %v952 = vsel %vm900, %v936, 0.0
        %953 = vadd.xlane.f32.xlu0 %v952
        %v954 = vpop.xlane.xlu0 %953
        %v955 = vsel %vm900, %v938, 0.0
        %956 = vadd.xlane.f32.xlu0 %v955
        %v957 = vpop.xlane.xlu0 %956
        %v958 = vsel %vm900, %v940, 0.0
        %959 = vadd.xlane.f32.xlu0 %v958
        %v960 = vpop.xlane.xlu0 %959
        %v961 = vsel %vm900, %v942, 0.0
        %962 = vadd.xlane.f32.xlu0 %v961
        %v963 = vpop.xlane.xlu0 %962
        %v964 = vsel %vm900, %v944, 0.0
        %965 = vadd.xlane.f32.xlu0 %v964
        %v966 = vpop.xlane.xlu0 %965
        %v967 = vsel %vm900, %v946, 0.0
        %968 = vadd.xlane.f32.xlu0 %v967
        %v969 = vpop.xlane.xlu0 %968
        %v970 = vsel %vm900, %v948, 0.0
        %971 = vadd.xlane.f32.xlu0 %v970
        %v972 = vpop.xlane.xlu0 %971
        %v973 = vrcp.pop %v951
        %v974 = vmul.f32 %v934, %v973
        %v975 = vrcp.pop %v954
        %v976 = vmul.f32 %v936, %v975
        %v977 = vrcp.pop %v957
        %v978 = vmul.f32 %v938, %v977
        %v979 = vrcp.pop %v960
        %v980 = vmul.f32 %v940, %v979
        %v981 = vrcp.pop %v963
        %v982 = vmul.f32 %v942, %v981
        %v983 = vrcp.pop %v966
        %v984 = vmul.f32 %v944, %v983
        %v985 = vrcp.pop %v969
        %v986 = vmul.f32 %v946, %v985
        %v987 = vrcp.pop %v972
        %v988 = vmul.f32 %v948, %v987
        %v989 = vpack.c.bf16 %v976, %v974
        %v990 = vpack.c.bf16 %v980, %v978
        %v991 = vpack.c.bf16 %v984, %v982
        %v992 = vpack.c.bf16 %v988, %v986
        %993 = vrot.lane.b32.xlu0 %v795, 64
        %v994 = vpop.permute.xlu0 %993
        %995 = vrot.lane.b32.xlu0 %v796, 64
        %v996 = vpop.permute.xlu0 %995
        %997 = vrot.lane.b32.xlu0 %v797, 64
        %v998 = vpop.permute.xlu0 %997
        %999 = vrot.lane.b32.xlu0 %v798, 64
        %v1000 = vpop.permute.xlu0 %999
        %v1006 = vsel %vm900, %v989, 0
        %v1009 = vsel %vm900, %v990, 0
        %v1012 = vsel %vm900, %v991, 0
        %v1015 = vsel %vm900, %v992, 0
        %1017 = vmatprep.subr.bf16.mxu0 0
        %1018 = vmatpush1.bf16.msra.mxu0 0
        %1019 = vmatprep.subr.bf16.mxu0 0
        %1020 = vmatpush1.bf16.msra.mxu0 0
        %1021 = vmatprep.subr.bf16.mxu0 0
        %1022 = vmatpush1.bf16.msra.mxu0 0
        %1023 = vmatprep.subr.bf16.mxu0 0
        %1024 = vmatpush1.bf16.msra.mxu0 0
        %1025 = vmatprep.subr.bf16.mxu0 0
        %1026 = vmatpush1.bf16.msra.mxu0 %v1000
        %1027 = vmatprep.subr.bf16.mxu0 0
        %1028 = vmatpush1.bf16.msra.mxu0 %v998
        %1029 = vmatprep.subr.bf16.mxu0 0
        %1030 = vmatpush1.bf16.msra.mxu0 %v996
        %1031 = vmatprep.subr.bf16.mxu0 0
        %1032 = vmatpush1.bf16.msra.mxu0 %v994
        %1033 = vmatprep.subr.bf16.mxu0 0
        %1034 = vmatpush2.bf16.msra.mxu0 0
        %1035 = vmatprep.subr.bf16.mxu0 0
        %1036 = vmatpush2.bf16.msra.mxu0 0
        %1037 = vmatprep.subr.bf16.mxu0 0
        %1038 = vmatpush2.bf16.msra.mxu0 0
        %1039 = vmatprep.subr.bf16.mxu0 0
        %1040 = vmatpush2.bf16.msra.mxu0 0
        %1041 = vmatprep.subr.bf16.mxu0 0
        %1042 = vmatpush2.bf16.msra.mxu0 0
        %1043 = vmatprep.subr.bf16.mxu0 0
        %1044 = vmatpush2.bf16.msra.mxu0 0
        %1045 = vmatprep.subr.bf16.mxu0 0
        %1046 = vmatpush2.bf16.msra.mxu0 0
        %1047 = vmatprep.subr.bf16.mxu0 0
        %1048 = vmatpush2.bf16.msra.mxu0 0
        %1049 = vmatprep.mubr.bf16.mxu0 0
        %1050 = vmatmul.mubr.bf16.gmra.mxu0 %v1006
        %v1051 = vpop.f32.mrf.mxu0
        %v1052 = vadd.f32 0.0, %v1051
        %v1053 = vpop.f32.mrf.mxu0
        %v1054 = vpop.f32.mrf.mxu0
        %v1055 = vadd.f32 0.0, %v1054
        %v1056 = vpop.f32.mrf.mxu0
        %1057 = vmatprep.mubr.bf16.mxu0 0
        %1058 = vmatmul.mubr.bf16.gmra.mxu0 %v1009
        %v1059 = vpop.f32.mrf.mxu0
        %v1060 = vadd.f32 0.0, %v1059
        %v1061 = vpop.f32.mrf.mxu0
        %v1062 = vpop.f32.mrf.mxu0
        %v1063 = vadd.f32 0.0, %v1062
        %v1064 = vpop.f32.mrf.mxu0
        %1065 = vmatprep.mubr.bf16.mxu0 0
        %1066 = vmatmul.mubr.bf16.gmra.mxu0 %v1012
        %v1067 = vpop.f32.mrf.mxu0
        %v1068 = vadd.f32 0.0, %v1067
        %v1069 = vpop.f32.mrf.mxu0
        %v1070 = vpop.f32.mrf.mxu0
        %v1071 = vadd.f32 0.0, %v1070
        %v1072 = vpop.f32.mrf.mxu0
        %1073 = vmatprep.mubr.bf16.mxu0 0
        %1074 = vmatmul.mubr.bf16.gmra.mxu0 %v1015
        %v1075 = vpop.f32.mrf.mxu0
        %v1076 = vadd.f32 0.0, %v1075
        %v1077 = vpop.f32.mrf.mxu0
        %v1078 = vpop.f32.mrf.mxu0
        %v1079 = vadd.f32 0.0, %v1078
        %v1080 = vpop.f32.mrf.mxu0
        %1081 = vdwg.mxu0
        %1082 = vrot.lane.b32.xlu0 %v795, 112
        %v1083 = vpop.permute.xlu0 %1082
        %1084 = vrot.lane.b32.xlu0 %v796, 112
        %v1085 = vpop.permute.xlu0 %1084
        %1086 = vrot.lane.b32.xlu0 %v797, 112
        %v1087 = vpop.permute.xlu0 %1086
        %1088 = vrot.lane.b32.xlu0 %v798, 112
        %v1089 = vpop.permute.xlu0 %1088
        %1090 = vrot.lane.b32.xlu0 %v795, 80
        %v1091 = vpop.permute.xlu0 %1090
        %1092 = vrot.lane.b32.xlu0 %v796, 80
        %v1093 = vpop.permute.xlu0 %1092
        %1094 = vrot.lane.b32.xlu0 %v797, 80
        %v1095 = vpop.permute.xlu0 %1094
        %1096 = vrot.lane.b32.xlu0 %v798, 80
        %v1097 = vpop.permute.xlu0 %1096
        %v1099 = vsel %vm521, %v1083, 0
        %v1102 = vsel %vm521, %v1085, 0
        %v1105 = vsel %vm521, %v1087, 0
        %v1108 = vsel %vm521, %v1089, 0
        %v1111 = vsel %vm521, %v1091, 0
        %v1114 = vsel %vm521, %v1093, 0
        %v1117 = vsel %vm521, %v1095, 0
        %v1120 = vsel %vm521, %v1097, 0
        %1122 = vmatprep.subr.bf16.mxu0 0
        %1123 = vmatpush1.bf16.xpose.msra.mxu0 0
        %1124 = vmatprep.subr.bf16.mxu0 0
        %1125 = vmatpush1.bf16.xpose.msra.mxu0 0
        %1126 = vmatprep.subr.bf16.mxu0 0
        %1127 = vmatpush1.bf16.xpose.msra.mxu0 0
        %1128 = vmatprep.subr.bf16.mxu0 0
        %1129 = vmatpush1.bf16.xpose.msra.mxu0 0
        %1130 = vmatprep.subr.bf16.mxu0 0
        %1131 = vmatpush1.bf16.xpose.msra.mxu0 %v1120
        %1132 = vmatprep.subr.bf16.mxu0 0
        %1133 = vmatpush1.bf16.xpose.msra.mxu0 %v1117
        %1134 = vmatprep.subr.bf16.mxu0 0
        %1135 = vmatpush1.bf16.xpose.msra.mxu0 %v1114
        %1136 = vmatprep.subr.bf16.mxu0 0
        %1137 = vmatpush1.bf16.xpose.msra.mxu0 %v1111
        %1138 = vmatprep.subr.bf16.mxu0 0
        %1139 = vmatpush2.bf16.xpose.msra.mxu0 0
        %1140 = vmatprep.subr.bf16.mxu0 0
        %1141 = vmatpush2.bf16.xpose.msra.mxu0 0
        %1142 = vmatprep.subr.bf16.mxu0 0
        %1143 = vmatpush2.bf16.xpose.msra.mxu0 0
        %1144 = vmatprep.subr.bf16.mxu0 0
        %1145 = vmatpush2.bf16.xpose.msra.mxu0 0
        %1146 = vmatprep.subr.bf16.mxu0 0
        %1147 = vmatpush2.bf16.xpose.msra.mxu0 0
        %1148 = vmatprep.subr.bf16.mxu0 0
        %1149 = vmatpush2.bf16.xpose.msra.mxu0 0
        %1150 = vmatprep.subr.bf16.mxu0 0
        %1151 = vmatpush2.bf16.xpose.msra.mxu0 0
        %1152 = vmatprep.subr.bf16.mxu0 0
        %1153 = vmatpush2.bf16.xpose.msra.mxu0 0
        %1154 = vmatprep.mubr.bf16.mxu0 0
        %1155 = vmatmul.mubr.bf16.gmra.mxu0 %v1099
        %v1156 = vpop.f32.mrf.mxu0
        %v1157 = vadd.f32 %v787, %v1156
        %v1158 = vpop.f32.mrf.mxu0
        %v1159 = vpop.f32.mrf.mxu0
        %v1160 = vadd.f32 %v788, %v1159
        %v1161 = vpop.f32.mrf.mxu0
        %1162 = vmatprep.mubr.bf16.mxu0 0
        %1163 = vmatmul.mubr.bf16.gmra.mxu0 %v1102
        %v1164 = vpop.f32.mrf.mxu0
        %v1165 = vadd.f32 %v789, %v1164
        %v1166 = vpop.f32.mrf.mxu0
        %v1167 = vpop.f32.mrf.mxu0
        %v1168 = vadd.f32 %v790, %v1167
        %v1169 = vpop.f32.mrf.mxu0
        %1170 = vmatprep.mubr.bf16.mxu0 0
        %1171 = vmatmul.mubr.bf16.gmra.mxu0 %v1105
        %v1172 = vpop.f32.mrf.mxu0
        %v1173 = vadd.f32 %v791, %v1172
        %v1174 = vpop.f32.mrf.mxu0
        %v1175 = vpop.f32.mrf.mxu0
        %v1176 = vadd.f32 %v792, %v1175
        %v1177 = vpop.f32.mrf.mxu0
        %1178 = vmatprep.mubr.bf16.mxu0 0
        %1179 = vmatmul.mubr.bf16.gmra.mxu0 %v1108
        %v1180 = vpop.f32.mrf.mxu0
        %v1181 = vadd.f32 %v793, %v1180
        %v1182 = vpop.f32.mrf.mxu0
        %v1183 = vpop.f32.mrf.mxu0
        %v1184 = vadd.f32 %v794, %v1183
        %v1185 = vpop.f32.mrf.mxu0
        %1186 = vdwg.mxu0
        %v1187 = vsel %vm900, %v1157, -inf
        %1188 = vmax.xlane.f32.xlu0 %v1187
        %v1189 = vpop.xlane.xlu0 %1188
        %v1190 = vsel %vm900, %v1160, -inf
        %1191 = vmax.xlane.f32.xlu0 %v1190
        %v1192 = vpop.xlane.xlu0 %1191
        %v1193 = vsel %vm900, %v1165, -inf
        %1194 = vmax.xlane.f32.xlu0 %v1193
        %v1195 = vpop.xlane.xlu0 %1194
        %v1196 = vsel %vm900, %v1168, -inf
        %1197 = vmax.xlane.f32.xlu0 %v1196
        %v1198 = vpop.xlane.xlu0 %1197
        %v1199 = vsel %vm900, %v1173, -inf
        %1200 = vmax.xlane.f32.xlu0 %v1199
        %v1201 = vpop.xlane.xlu0 %1200
        %v1202 = vsel %vm900, %v1176, -inf
        %1203 = vmax.xlane.f32.xlu0 %v1202
        %v1204 = vpop.xlane.xlu0 %1203
        %v1205 = vsel %vm900, %v1181, -inf
        %1206 = vmax.xlane.f32.xlu0 %v1205
        %v1207 = vpop.xlane.xlu0 %1206
        %v1208 = vsel %vm900, %v1184, -inf
        %1209 = vmax.xlane.f32.xlu0 %v1208
        %v1210 = vpop.xlane.xlu0 %1209
        %v1211 = vsub.f32 %v1157, %v1189
        %v1212 = vsub.f32 %v1160, %v1192
        %v1213 = vsub.f32 %v1165, %v1195
        %v1214 = vsub.f32 %v1168, %v1198
        %v1215 = vsub.f32 %v1173, %v1201
        %v1216 = vsub.f32 %v1176, %v1204
        %v1217 = vsub.f32 %v1181, %v1207
        %v1218 = vsub.f32 %v1184, %v1210
        %v1219 = vmul.f32 %v1211, 1.442695
        %v1220 = vpow.pop %v1219
        %v1221 = vmul.f32 %v1212, 1.442695
        %v1222 = vpow.pop %v1221
        %v1223 = vmul.f32 %v1213, 1.442695
        %v1224 = vpow.pop %v1223
        %v1225 = vmul.f32 %v1214, 1.442695
        %v1226 = vpow.pop %v1225
        %v1227 = vmul.f32 %v1215, 1.442695
        %v1228 = vpow.pop %v1227
        %v1229 = vmul.f32 %v1216, 1.442695
        %v1230 = vpow.pop %v1229
        %v1231 = vmul.f32 %v1217, 1.442695
        %v1232 = vpow.pop %v1231
        %v1233 = vmul.f32 %v1218, 1.442695
        %v1234 = vpow.pop %v1233
        %v1235 = vsel %vm900, %v1220, 0.0
        %1236 = vadd.xlane.f32.xlu0 %v1235
        %v1237 = vpop.xlane.xlu0 %1236
        %v1238 = vsel %vm900, %v1222, 0.0
        %1239 = vadd.xlane.f32.xlu0 %v1238
        %v1240 = vpop.xlane.xlu0 %1239
        %v1241 = vsel %vm900, %v1224, 0.0
        %1242 = vadd.xlane.f32.xlu0 %v1241
        %v1243 = vpop.xlane.xlu0 %1242
        %v1244 = vsel %vm900, %v1226, 0.0
        %1245 = vadd.xlane.f32.xlu0 %v1244
        %v1246 = vpop.xlane.xlu0 %1245
        %v1247 = vsel %vm900, %v1228, 0.0
        %1248 = vadd.xlane.f32.xlu0 %v1247
        %v1249 = vpop.xlane.xlu0 %1248
        %v1250 = vsel %vm900, %v1230, 0.0
        %1251 = vadd.xlane.f32.xlu0 %v1250
        %v1252 = vpop.xlane.xlu0 %1251
        %v1253 = vsel %vm900, %v1232, 0.0
        %1254 = vadd.xlane.f32.xlu0 %v1253
        %v1255 = vpop.xlane.xlu0 %1254
        %v1256 = vsel %vm900, %v1234, 0.0
        %1257 = vadd.xlane.f32.xlu0 %v1256
        %v1258 = vpop.xlane.xlu0 %1257
        %v1259 = vrcp.pop %v1237
        %v1260 = vmul.f32 %v1220, %v1259
        %v1261 = vrcp.pop %v1240
        %v1262 = vmul.f32 %v1222, %v1261
        %v1263 = vrcp.pop %v1243
        %v1264 = vmul.f32 %v1224, %v1263
        %v1265 = vrcp.pop %v1246
        %v1266 = vmul.f32 %v1226, %v1265
        %v1267 = vrcp.pop %v1249
        %v1268 = vmul.f32 %v1228, %v1267
        %v1269 = vrcp.pop %v1252
        %v1270 = vmul.f32 %v1230, %v1269
        %v1271 = vrcp.pop %v1255
        %v1272 = vmul.f32 %v1232, %v1271
        %v1273 = vrcp.pop %v1258
        %v1274 = vmul.f32 %v1234, %v1273
        %v1275 = vpack.c.bf16 %v1262, %v1260
        %v1276 = vpack.c.bf16 %v1266, %v1264
        %v1277 = vpack.c.bf16 %v1270, %v1268
        %v1278 = vpack.c.bf16 %v1274, %v1272
        %1279 = vrot.lane.b32.xlu0 %v795, 48
        %v1280 = vpop.permute.xlu0 %1279
        %1281 = vrot.lane.b32.xlu0 %v796, 48
        %v1282 = vpop.permute.xlu0 %1281
        %1283 = vrot.lane.b32.xlu0 %v797, 48
        %v1284 = vpop.permute.xlu0 %1283
        %1285 = vrot.lane.b32.xlu0 %v798, 48
        %v1286 = vpop.permute.xlu0 %1285
        %v1292 = vsel %vm900, %v1275, 0
        %v1295 = vsel %vm900, %v1276, 0
        %v1298 = vsel %vm900, %v1277, 0
        %v1301 = vsel %vm900, %v1278, 0
        %1303 = vmatprep.subr.bf16.mxu0 0
        %1304 = vmatpush1.bf16.msra.mxu0 0
        %1305 = vmatprep.subr.bf16.mxu0 0
        %1306 = vmatpush1.bf16.msra.mxu0 0
        %1307 = vmatprep.subr.bf16.mxu0 0
        %1308 = vmatpush1.bf16.msra.mxu0 0
        %1309 = vmatprep.subr.bf16.mxu0 0
        %1310 = vmatpush1.bf16.msra.mxu0 0
        %1311 = vmatprep.subr.bf16.mxu0 0
        %1312 = vmatpush1.bf16.msra.mxu0 %v1286
        %1313 = vmatprep.subr.bf16.mxu0 0
        %1314 = vmatpush1.bf16.msra.mxu0 %v1284
        %1315 = vmatprep.subr.bf16.mxu0 0
        %1316 = vmatpush1.bf16.msra.mxu0 %v1282
        %1317 = vmatprep.subr.bf16.mxu0 0
        %1318 = vmatpush1.bf16.msra.mxu0 %v1280
        %1319 = vmatprep.subr.bf16.mxu0 0
        %1320 = vmatpush2.bf16.msra.mxu0 0
        %1321 = vmatprep.subr.bf16.mxu0 0
        %1322 = vmatpush2.bf16.msra.mxu0 0
        %1323 = vmatprep.subr.bf16.mxu0 0
        %1324 = vmatpush2.bf16.msra.mxu0 0
        %1325 = vmatprep.subr.bf16.mxu0 0
        %1326 = vmatpush2.bf16.msra.mxu0 0
        %1327 = vmatprep.subr.bf16.mxu0 0
        %1328 = vmatpush2.bf16.msra.mxu0 0
        %1329 = vmatprep.subr.bf16.mxu0 0
        %1330 = vmatpush2.bf16.msra.mxu0 0
        %1331 = vmatprep.subr.bf16.mxu0 0
        %1332 = vmatpush2.bf16.msra.mxu0 0
        %1333 = vmatprep.subr.bf16.mxu0 0
        %1334 = vmatpush2.bf16.msra.mxu0 0
        %1335 = vmatprep.mubr.bf16.mxu0 0
        %1336 = vmatmul.mubr.bf16.gmra.mxu0 %v1292
        %v1337 = vpop.f32.mrf.mxu0
        %v1338 = vadd.f32 0.0, %v1337
        %v1339 = vpop.f32.mrf.mxu0
        %v1340 = vpop.f32.mrf.mxu0
        %v1341 = vadd.f32 0.0, %v1340
        %v1342 = vpop.f32.mrf.mxu0
        %1343 = vmatprep.mubr.bf16.mxu0 0
        %1344 = vmatmul.mubr.bf16.gmra.mxu0 %v1295
        %v1345 = vpop.f32.mrf.mxu0
        %v1346 = vadd.f32 0.0, %v1345
        %v1347 = vpop.f32.mrf.mxu0
        %v1348 = vpop.f32.mrf.mxu0
        %v1349 = vadd.f32 0.0, %v1348
        %v1350 = vpop.f32.mrf.mxu0
        %1351 = vmatprep.mubr.bf16.mxu0 0
        %1352 = vmatmul.mubr.bf16.gmra.mxu0 %v1298
        %v1353 = vpop.f32.mrf.mxu0
        %v1354 = vadd.f32 0.0, %v1353
        %v1355 = vpop.f32.mrf.mxu0
        %v1356 = vpop.f32.mrf.mxu0
        %v1357 = vadd.f32 0.0, %v1356
        %v1358 = vpop.f32.mrf.mxu0
        %1359 = vmatprep.mubr.bf16.mxu0 0
        %1360 = vmatmul.mubr.bf16.gmra.mxu0 %v1301
        %v1361 = vpop.f32.mrf.mxu0
        %v1362 = vadd.f32 0.0, %v1361
        %v1363 = vpop.f32.mrf.mxu0
        %v1364 = vpop.f32.mrf.mxu0
        %v1365 = vadd.f32 0.0, %v1364
        %v1366 = vpop.f32.mrf.mxu0
        %1367 = vdwg.mxu0
        %1376 = vrot.lane.b32.xlu0 %v1338, 16
        %v1377 = vpop.permute.xlu0 %1376
        %1378 = vrot.lane.b32.xlu0 %v1341, 16
        %v1379 = vpop.permute.xlu0 %1378
        %1380 = vrot.lane.b32.xlu0 %v1346, 16
        %v1381 = vpop.permute.xlu0 %1380
        %1382 = vrot.lane.b32.xlu0 %v1349, 16
        %v1383 = vpop.permute.xlu0 %1382
        %1384 = vrot.lane.b32.xlu0 %v1354, 16
        %v1385 = vpop.permute.xlu0 %1384
        %1386 = vrot.lane.b32.xlu0 %v1357, 16
        %v1387 = vpop.permute.xlu0 %1386
        %1388 = vrot.lane.b32.xlu0 %v1362, 16
        %v1389 = vpop.permute.xlu0 %1388
        %1390 = vrot.lane.b32.xlu0 %v1365, 16
        %v1391 = vpop.permute.xlu0 %1390
        %v1400 = vsel %vm521, %v1052, %v1377
        %v1401 = vsel %vm521, %v1055, %v1379
        %v1402 = vsel %vm521, %v1060, %v1381
        %v1403 = vsel %vm521, %v1063, %v1383
        %v1404 = vsel %vm521, %v1068, %v1385
        %v1405 = vsel %vm521, %v1071, %v1387
        %v1406 = vsel %vm521, %v1076, %v1389
        %v1407 = vsel %vm521, %v1079, %v1391
        %v1408 = vpack.c.bf16 %v1401, %v1400
        %v1409 = vpack.c.bf16 %v1403, %v1402
        %v1410 = vpack.c.bf16 %v1405, %v1404
        %v1411 = vpack.c.bf16 %v1407, %v1406
        %v1412 = vld [vmem:[%s6] sm:$0xf]
        %v1413 = vld [vmem:[%s6 + $0x4] sm:$0xf]
        %v1414 = vld [vmem:[%s6 + $0x8] sm:$0xf]
        %v1415 = vld [vmem:[%s6 + $0xc] sm:$0xf]
        %v1416 = vld [vmem:[%s7] sm:$0x1]
        %v1418 = vlaneseq
        %v1419 = vshrl.u32 %v1418, 7
        %v1420 = vsub.s32 0, %v1419
        %v1421 = vrot.slane %v1416, %v1420
        %v1427 = vunpack.c.l.b16 %v1412
        %v1428 = vunpack.c.l.b16 %v1413
        %v1429 = vunpack.c.l.b16 %v1414
        %v1430 = vunpack.c.l.b16 %v1415
        %v1431 = vpack.c.b16 %v1428, %v1427
        %v1432 = vpack.c.b16 %v1430, %v1429
        %v1436 = vsel %vm609, %v1408, 0
        %v1439 = vsel %vm609, %v1409, 0
        %v1442 = vsel %vm609, %v1410, 0
        %v1445 = vsel %vm609, %v1411, 0
        %1447 = vmatprep.subr.bf16.mxu0 0
        %1448 = vmatpush1.bf16.msra.mxu0 0
        %1449 = vmatprep.subr.bf16.mxu0 0
        %1450 = vmatpush1.bf16.msra.mxu0 0
        %1451 = vmatprep.subr.bf16.mxu0 0
        %1452 = vmatpush1.bf16.msra.mxu0 0
        %1453 = vmatprep.subr.bf16.mxu0 0
        %1454 = vmatpush1.bf16.msra.mxu0 0
        %1455 = vmatprep.subr.bf16.mxu0 0
        %1456 = vmatpush1.bf16.msra.mxu0 0
        %1457 = vmatprep.subr.bf16.mxu0 0
        %1458 = vmatpush1.bf16.msra.mxu0 0
        %1459 = vmatprep.subr.bf16.mxu0 0
        %1460 = vmatpush1.bf16.msra.mxu0 %v1432
        %1461 = vmatprep.subr.bf16.mxu0 0
        %1462 = vmatpush1.bf16.msra.mxu0 %v1431
        %1463 = vmatprep.subr.bf16.mxu0 0
        %1464 = vmatpush2.bf16.msra.mxu0 0
        %1465 = vmatprep.subr.bf16.mxu0 0
        %1466 = vmatpush2.bf16.msra.mxu0 0
        %1467 = vmatprep.subr.bf16.mxu0 0
        %1468 = vmatpush2.bf16.msra.mxu0 0
        %1469 = vmatprep.subr.bf16.mxu0 0
        %1470 = vmatpush2.bf16.msra.mxu0 0
        %1471 = vmatprep.subr.bf16.mxu0 0
        %1472 = vmatpush2.bf16.msra.mxu0 0
        %1473 = vmatprep.subr.bf16.mxu0 0
        %1474 = vmatpush2.bf16.msra.mxu0 0
        %1475 = vmatprep.subr.bf16.mxu0 0
        %1476 = vmatpush2.bf16.msra.mxu0 0
        %1477 = vmatprep.subr.bf16.mxu0 0
        %1478 = vmatpush2.bf16.msra.mxu0 0
        %1479 = vmatprep.mubr.bf16.mxu0 0
        %1480 = vmatmul.mubr.bf16.gmra.mxu0 %v1436
        %v1481 = vpop.f32.mrf.mxu0
        %v1482 = vadd.f32 %v1421, %v1481
        %v1483 = vpop.f32.mrf.mxu0
        %v1484 = vpop.f32.mrf.mxu0
        %v1485 = vadd.f32 %v1421, %v1484
        %v1486 = vpop.f32.mrf.mxu0
        %1487 = vmatprep.mubr.bf16.mxu0 0
        %1488 = vmatmul.mubr.bf16.gmra.mxu0 %v1439
        %v1489 = vpop.f32.mrf.mxu0
        %v1490 = vadd.f32 %v1421, %v1489
        %v1491 = vpop.f32.mrf.mxu0
        %v1492 = vpop.f32.mrf.mxu0
        %v1493 = vadd.f32 %v1421, %v1492
        %v1494 = vpop.f32.mrf.mxu0
        %1495 = vmatprep.mubr.bf16.mxu0 0
        %1496 = vmatmul.mubr.bf16.gmra.mxu0 %v1442
        %v1497 = vpop.f32.mrf.mxu0
        %v1498 = vadd.f32 %v1421, %v1497
        %v1499 = vpop.f32.mrf.mxu0
        %v1500 = vpop.f32.mrf.mxu0
        %v1501 = vadd.f32 %v1421, %v1500
        %v1502 = vpop.f32.mrf.mxu0
        %1503 = vmatprep.mubr.bf16.mxu0 0
        %1504 = vmatmul.mubr.bf16.gmra.mxu0 %v1445
        %v1505 = vpop.f32.mrf.mxu0
        %v1506 = vadd.f32 %v1421, %v1505
        %v1507 = vpop.f32.mrf.mxu0
        %v1508 = vpop.f32.mrf.mxu0
        %v1509 = vadd.f32 %v1421, %v1508
        %v1510 = vpop.f32.mrf.mxu0
        %1511 = vdwg.mxu0
        %v1512 = vadd.f32 %v1482, %v569
        %v1513 = vadd.f32 %v1485, %v572
        %v1514 = vadd.f32 %v1490, %v577
        %v1515 = vadd.f32 %v1493, %v580
        %v1516 = vadd.f32 %v1498, %v585
        %v1517 = vadd.f32 %v1501, %v588
        %v1518 = vadd.f32 %v1506, %v593
        %v1519 = vadd.f32 %v1509, %v596
        %v1520 = vld [vmem:[%s9] sm:$0x1]
        %v1521 = vld [vmem:[%s10] sm:$0x1]
        %v1522 = vmul.f32 %v1512, %v1512
        %v1523 = vmul.f32 %v1513, %v1513
        %v1524 = vmul.f32 %v1514, %v1514
        %v1525 = vmul.f32 %v1515, %v1515
        %v1526 = vmul.f32 %v1516, %v1516
        %v1527 = vmul.f32 %v1517, %v1517
        %v1528 = vmul.f32 %v1518, %v1518
        %v1529 = vmul.f32 %v1519, %v1519
        %v1530 = vsel %vm609, %v1522, 0.0
        %v1531 = vsel %vm609, %v1523, 0.0
        %v1532 = vadd.f32 %v1530, %v1531
        %v1533 = vsel %vm609, %v1524, 0.0
        %v1534 = vadd.f32 %v1532, %v1533
        %v1535 = vsel %vm609, %v1525, 0.0
        %v1536 = vadd.f32 %v1534, %v1535
        %v1537 = vsel %vm609, %v1526, 0.0
        %v1538 = vadd.f32 %v1536, %v1537
        %v1539 = vsel %vm609, %v1527, 0.0
        %v1540 = vadd.f32 %v1538, %v1539
        %v1541 = vsel %vm609, %v1528, 0.0
        %v1542 = vadd.f32 %v1540, %v1541
        %v1543 = vsel %vm609, %v1529, 0.0
        %v1544 = vadd.f32 %v1542, %v1543
        %v1545 = vrot.slane %v1544, 4
        %v1546 = vadd.f32 %v1544, %v1545
        %v1547 = vrot.slane %v1546, 2
        %v1548 = vadd.f32 %v1546, %v1547
        %v1549 = vrot.slane %v1548, 1
        %v1550 = vadd.f32 %v1548, %v1549
        %v1551 = vrsqrt.pop %v1550
        %v1552 = vmul.f32 %v1550, %v1551
        %vm1553 = vcmp.eq.f32.partialorder %v1550, inf
        %v1554 = vsel %vm1553, %v1550, %v1552
        %vm1555 = vcmp.eq.f32.partialorder %v1550, 0.0
        %v1556 = vand.u32 %v1550, 2147483648
        %v1557 = vsel %vm1555, %v1556, %v1554
        %v1558 = vsel %vm609, %v1557, 0.0
        %1559 = vadd.xlane.f32.xlu0 %v1558
        %v1560 = vpop.xlane.xlu0 %1559
        %v1561 = vmul.f32 %v1560, %v641
        %v1562 = vadd.f32 %v1561, 1e-06
        %v1563 = vrcp.pop %v1562
        %v1564 = vmul.f32 %v1557, %v1563
        %v1565 = vmul.f32 %v1512, %v1564
        %v1566 = vmul.f32 %v1513, %v1564
        %v1567 = vmul.f32 %v1514, %v1564
        %v1568 = vmul.f32 %v1515, %v1564
        %v1569 = vmul.f32 %v1516, %v1564
        %v1570 = vmul.f32 %v1517, %v1564
        %v1571 = vmul.f32 %v1518, %v1564
        %v1572 = vmul.f32 %v1519, %v1564
        %v1574 = vlaneseq
        %v1575 = vshrl.u32 %v1574, 7
        %v1576 = vsub.s32 0, %v1575
        %v1577 = vrot.slane %v1520, %v1576
        %v1579 = vmul.f32 %v1577, %v1565
        %v1580 = vmul.f32 %v1577, %v1566
        %v1581 = vmul.f32 %v1577, %v1567
        %v1582 = vmul.f32 %v1577, %v1568
        %v1583 = vmul.f32 %v1577, %v1569
        %v1584 = vmul.f32 %v1577, %v1570
        %v1585 = vmul.f32 %v1577, %v1571
        %v1586 = vmul.f32 %v1577, %v1572
        %v1588 = vlaneseq
        %v1589 = vshrl.u32 %v1588, 7
        %v1590 = vsub.s32 0, %v1589
        %v1591 = vrot.slane %v1521, %v1590
        %v1593 = vadd.f32 %v1579, %v1591
        %v1594 = vadd.f32 %v1580, %v1591
        %v1595 = vadd.f32 %v1581, %v1591
        %v1596 = vadd.f32 %v1582, %v1591
        %v1597 = vadd.f32 %v1583, %v1591
        %v1598 = vadd.f32 %v1584, %v1591
        %v1599 = vadd.f32 %v1585, %v1591
        %v1600 = vadd.f32 %v1586, %v1591
        %v1601 = vadd.f32 %v1593, %v1512
        %v1602 = vadd.f32 %v1594, %v1513
        %v1603 = vadd.f32 %v1595, %v1514
        %v1604 = vadd.f32 %v1596, %v1515
        %v1605 = vadd.f32 %v1597, %v1516
        %v1606 = vadd.f32 %v1598, %v1517
        %v1607 = vadd.f32 %v1599, %v1518
        %v1608 = vadd.f32 %v1600, %v1519
        %v1609 = vpack.c.bf16 %v1602, %v1601
        %v1610 = vpack.c.bf16 %v1604, %v1603
        %v1611 = vpack.c.bf16 %v1606, %v1605
        %v1612 = vpack.c.bf16 %v1608, %v1607
        %v1613 = vld [vmem:[%s11] sm:$0xf]
        %v1614 = vld [vmem:[%s11 + $0x4] sm:$0xf]
        %v1615 = vld [vmem:[%s11 + $0x8] sm:$0xf]
        %v1616 = vld [vmem:[%s11 + $0xc] sm:$0xf]
        %v1617 = vld [vmem:[%s12] sm:$0x1]
        %v1619 = vlaneseq
        %v1620 = vshrl.u32 %v1619, 7
        %v1621 = vsub.s32 0, %v1620
        %v1622 = vrot.slane %v1617, %v1621
        %v1628 = vunpack.c.l.b16 %v1613
        %v1629 = vunpack.c.l.b16 %v1614
        %v1630 = vunpack.c.l.b16 %v1615
        %v1631 = vunpack.c.l.b16 %v1616
        %v1632 = vpack.c.b16 %v1629, %v1628
        %v1633 = vpack.c.b16 %v1631, %v1630
        %v1637 = vsel %vm609, %v1609, 0
        %v1640 = vsel %vm609, %v1610, 0
        %v1643 = vsel %vm609, %v1611, 0
        %v1646 = vsel %vm609, %v1612, 0
        %1648 = vmatprep.subr.bf16.mxu0 0
        %1649 = vmatpush1.bf16.msra.mxu0 0
        %1650 = vmatprep.subr.bf16.mxu0 0
        %1651 = vmatpush1.bf16.msra.mxu0 0
        %1652 = vmatprep.subr.bf16.mxu0 0
        %1653 = vmatpush1.bf16.msra.mxu0 0
        %1654 = vmatprep.subr.bf16.mxu0 0
        %1655 = vmatpush1.bf16.msra.mxu0 0
        %1656 = vmatprep.subr.bf16.mxu0 0
        %1657 = vmatpush1.bf16.msra.mxu0 0
        %1658 = vmatprep.subr.bf16.mxu0 0
        %1659 = vmatpush1.bf16.msra.mxu0 0
        %1660 = vmatprep.subr.bf16.mxu0 0
        %1661 = vmatpush1.bf16.msra.mxu0 %v1633
        %1662 = vmatprep.subr.bf16.mxu0 0
        %1663 = vmatpush1.bf16.msra.mxu0 %v1632
        %1664 = vmatprep.subr.bf16.mxu0 0
        %1665 = vmatpush2.bf16.msra.mxu0 0
        %1666 = vmatprep.subr.bf16.mxu0 0
        %1667 = vmatpush2.bf16.msra.mxu0 0
        %1668 = vmatprep.subr.bf16.mxu0 0
        %1669 = vmatpush2.bf16.msra.mxu0 0
        %1670 = vmatprep.subr.bf16.mxu0 0
        %1671 = vmatpush2.bf16.msra.mxu0 0
        %1672 = vmatprep.subr.bf16.mxu0 0
        %1673 = vmatpush2.bf16.msra.mxu0 0
        %1674 = vmatprep.subr.bf16.mxu0 0
        %1675 = vmatpush2.bf16.msra.mxu0 0
        %1676 = vmatprep.subr.bf16.mxu0 0
        %1677 = vmatpush2.bf16.msra.mxu0 0
        %1678 = vmatprep.subr.bf16.mxu0 0
        %1679 = vmatpush2.bf16.msra.mxu0 0
        %1680 = vmatprep.mubr.bf16.mxu0 0
        %1681 = vmatmul.mubr.bf16.gmra.mxu0 %v1637
        %v1682 = vpop.f32.mrf.mxu0
        %v1683 = vadd.f32 %v1622, %v1682
        %v1684 = vpop.f32.mrf.mxu0
        %v1685 = vpop.f32.mrf.mxu0
        %v1686 = vadd.f32 %v1622, %v1685
        %v1687 = vpop.f32.mrf.mxu0
        %1688 = vmatprep.mubr.bf16.mxu0 0
        %1689 = vmatmul.mubr.bf16.gmra.mxu0 %v1640
        %v1690 = vpop.f32.mrf.mxu0
        %v1691 = vadd.f32 %v1622, %v1690
        %v1692 = vpop.f32.mrf.mxu0
        %v1693 = vpop.f32.mrf.mxu0
        %v1694 = vadd.f32 %v1622, %v1693
        %v1695 = vpop.f32.mrf.mxu0
        %1696 = vmatprep.mubr.bf16.mxu0 0
        %1697 = vmatmul.mubr.bf16.gmra.mxu0 %v1643
        %v1698 = vpop.f32.mrf.mxu0
        %v1699 = vadd.f32 %v1622, %v1698
        %v1700 = vpop.f32.mrf.mxu0
        %v1701 = vpop.f32.mrf.mxu0
        %v1702 = vadd.f32 %v1622, %v1701
        %v1703 = vpop.f32.mrf.mxu0
        %1704 = vmatprep.mubr.bf16.mxu0 0
        %1705 = vmatmul.mubr.bf16.gmra.mxu0 %v1646
        %v1706 = vpop.f32.mrf.mxu0
        %v1707 = vadd.f32 %v1622, %v1706
        %v1708 = vpop.f32.mrf.mxu0
        %v1709 = vpop.f32.mrf.mxu0
        %v1710 = vadd.f32 %v1622, %v1709
        %v1711 = vpop.f32.mrf.mxu0
        %1712 = vdwg.mxu0
        %v1713 = vmul.f32 %v1683, 0.5
        %v1714 = vmul.f32 %v1686, 0.5
        %v1715 = vmul.f32 %v1691, 0.5
        %v1716 = vmul.f32 %v1694, 0.5
        %v1717 = vmul.f32 %v1699, 0.5
        %v1718 = vmul.f32 %v1702, 0.5
        %v1719 = vmul.f32 %v1707, 0.5
        %v1720 = vmul.f32 %v1710, 0.5
        %v1721 = vmul.f32 %v1683, 0.70710677
        %v1722 = vmul.f32 %v1686, 0.70710677
        %v1723 = vmul.f32 %v1691, 0.70710677
        %v1724 = vmul.f32 %v1694, 0.70710677
        %v1725 = vmul.f32 %v1699, 0.70710677
        %v1726 = vmul.f32 %v1702, 0.70710677
        %v1727 = vmul.f32 %v1707, 0.70710677
        %v1728 = vmul.f32 %v1710, 0.70710677
        %v1729 = verf.f32.pop %v1721
        %v1730 = verf.f32.pop %v1722
        %v1731 = verf.f32.pop %v1723
        %v1732 = verf.f32.pop %v1724
        %v1733 = verf.f32.pop %v1725
        %v1734 = verf.f32.pop %v1726
        %v1735 = verf.f32.pop %v1727
        %v1736 = verf.f32.pop %v1728
        %v1737 = vadd.f32 %v1729, 1.0
        %v1738 = vadd.f32 %v1730, 1.0
        %v1739 = vadd.f32 %v1731, 1.0
        %v1740 = vadd.f32 %v1732, 1.0
        %v1741 = vadd.f32 %v1733, 1.0
        %v1742 = vadd.f32 %v1734, 1.0
        %v1743 = vadd.f32 %v1735, 1.0
        %v1744 = vadd.f32 %v1736, 1.0
        %v1745 = vmul.f32 %v1713, %v1737
        %v1746 = vmul.f32 %v1714, %v1738
        %v1747 = vmul.f32 %v1715, %v1739
        %v1748 = vmul.f32 %v1716, %v1740
        %v1749 = vmul.f32 %v1717, %v1741
        %v1750 = vmul.f32 %v1718, %v1742
        %v1751 = vmul.f32 %v1719, %v1743
        %v1752 = vmul.f32 %v1720, %v1744
        %v1753 = vpack.c.bf16 %v1746, %v1745
        %v1754 = vpack.c.bf16 %v1748, %v1747
        %v1755 = vpack.c.bf16 %v1750, %v1749
        %v1756 = vpack.c.bf16 %v1752, %v1751
        %v1757 = vld [vmem:[%s13] sm:$0xf]
        %v1758 = vld [vmem:[%s13 + $0x4] sm:$0xf]
        %v1759 = vld [vmem:[%s13 + $0x8] sm:$0xf]
        %v1760 = vld [vmem:[%s13 + $0xc] sm:$0xf]
        %v1761 = vld [vmem:[%s13 + $0x10] sm:$0xf]
        %v1762 = vld [vmem:[%s13 + $0x14] sm:$0xf]
        %v1763 = vld [vmem:[%s13 + $0x18] sm:$0xf]
        %v1764 = vld [vmem:[%s13 + $0x1c] sm:$0xf]
        %v1765 = vld [vmem:[%s13 + $0x20] sm:$0xf]
        %v1766 = vld [vmem:[%s13 + $0x24] sm:$0xf]
        %v1767 = vld [vmem:[%s13 + $0x28] sm:$0xf]
        %v1768 = vld [vmem:[%s13 + $0x2c] sm:$0xf]
        %v1769 = vld [vmem:[%s13 + $0x30] sm:$0xf]
        %v1770 = vld [vmem:[%s13 + $0x34] sm:$0xf]
        %v1771 = vld [vmem:[%s13 + $0x38] sm:$0xf]
        %v1772 = vld [vmem:[%s13 + $0x3c] sm:$0xf]
        %v1789 = vunpack.c.l.b16 %v1757
        %v1790 = vunpack.c.l.b16 %v1758
        %v1791 = vunpack.c.l.b16 %v1759
        %v1792 = vunpack.c.l.b16 %v1760
        %v1793 = vunpack.c.l.b16 %v1761
        %v1794 = vunpack.c.l.b16 %v1762
        %v1795 = vunpack.c.l.b16 %v1763
        %v1796 = vunpack.c.l.b16 %v1764
        %v1797 = vunpack.c.l.b16 %v1765
        %v1798 = vunpack.c.l.b16 %v1766
        %v1799 = vunpack.c.l.b16 %v1767
        %v1800 = vunpack.c.l.b16 %v1768
        %v1801 = vunpack.c.l.b16 %v1769
        %v1802 = vunpack.c.l.b16 %v1770
        %v1803 = vunpack.c.l.b16 %v1771
        %v1804 = vunpack.c.l.b16 %v1772
        %v1805 = vpack.c.b16 %v1790, %v1789
        %v1806 = vpack.c.b16 %v1792, %v1791
        %v1807 = vpack.c.b16 %v1794, %v1793
        %v1808 = vpack.c.b16 %v1796, %v1795
        %v1809 = vpack.c.b16 %v1798, %v1797
        %v1810 = vpack.c.b16 %v1800, %v1799
        %v1811 = vpack.c.b16 %v1802, %v1801
        %v1812 = vpack.c.b16 %v1804, %v1803
        %1821 = vmatprep.subr.bf16.mxu0 0
        %1822 = vmatpush1.bf16.msra.mxu0 %v1812
        %1823 = vmatprep.subr.bf16.mxu0 0
        %1824 = vmatpush1.bf16.msra.mxu0 %v1811
        %1825 = vmatprep.subr.bf16.mxu0 0
        %1826 = vmatpush1.bf16.msra.mxu0 %v1810
        %1827 = vmatprep.subr.bf16.mxu0 0
        %1828 = vmatpush1.bf16.msra.mxu0 %v1809
        %1829 = vmatprep.subr.bf16.mxu0 0
        %1830 = vmatpush1.bf16.msra.mxu0 %v1808
        %1831 = vmatprep.subr.bf16.mxu0 0
        %1832 = vmatpush1.bf16.msra.mxu0 %v1807
        %1833 = vmatprep.subr.bf16.mxu0 0
        %1834 = vmatpush1.bf16.msra.mxu0 %v1806
        %1835 = vmatprep.subr.bf16.mxu0 0
        %1836 = vmatpush1.bf16.msra.mxu0 %v1805
        %1837 = vmatprep.subr.bf16.mxu0 0
        %1838 = vmatpush2.bf16.msra.mxu0 0
        %1839 = vmatprep.subr.bf16.mxu0 0
        %1840 = vmatpush2.bf16.msra.mxu0 0
        %1841 = vmatprep.subr.bf16.mxu0 0
        %1842 = vmatpush2.bf16.msra.mxu0 0
        %1843 = vmatprep.subr.bf16.mxu0 0
        %1844 = vmatpush2.bf16.msra.mxu0 0
        %1845 = vmatprep.subr.bf16.mxu0 0
        %1846 = vmatpush2.bf16.msra.mxu0 0
        %1847 = vmatprep.subr.bf16.mxu0 0
        %1848 = vmatpush2.bf16.msra.mxu0 0
        %1849 = vmatprep.subr.bf16.mxu0 0
        %1850 = vmatpush2.bf16.msra.mxu0 0
        %1851 = vmatprep.subr.bf16.mxu0 0
        %1852 = vmatpush2.bf16.msra.mxu0 0
        %1853 = vmatprep.mubr.bf16.mxu0 0
        %1854 = vmatmul.mubr.bf16.gmra.mxu0 %v1753
        %v1855 = vpop.f32.mrf.mxu0
        %v1856 = vadd.f32 0.0, %v1855
        %v1857 = vpop.f32.mrf.mxu0
        %v1858 = vpop.f32.mrf.mxu0
        %v1859 = vadd.f32 0.0, %v1858
        %v1860 = vpop.f32.mrf.mxu0
        %1861 = vmatprep.mubr.bf16.mxu0 0
        %1862 = vmatmul.mubr.bf16.gmra.mxu0 %v1754
        %v1863 = vpop.f32.mrf.mxu0
        %v1864 = vadd.f32 0.0, %v1863
        %v1865 = vpop.f32.mrf.mxu0
        %v1866 = vpop.f32.mrf.mxu0
        %v1867 = vadd.f32 0.0, %v1866
        %v1868 = vpop.f32.mrf.mxu0
        %1869 = vmatprep.mubr.bf16.mxu0 0
        %1870 = vmatmul.mubr.bf16.gmra.mxu0 %v1755
        %v1871 = vpop.f32.mrf.mxu0
        %v1872 = vadd.f32 0.0, %v1871
        %v1873 = vpop.f32.mrf.mxu0
        %v1874 = vpop.f32.mrf.mxu0
        %v1875 = vadd.f32 0.0, %v1874
        %v1876 = vpop.f32.mrf.mxu0
        %1877 = vmatprep.mubr.bf16.mxu0 0
        %1878 = vmatmul.mubr.bf16.gmra.mxu0 %v1756
        %v1879 = vpop.f32.mrf.mxu0
        %v1880 = vadd.f32 0.0, %v1879
        %v1881 = vpop.f32.mrf.mxu0
        %v1882 = vpop.f32.mrf.mxu0
        %v1883 = vadd.f32 0.0, %v1882
        %v1884 = vpop.f32.mrf.mxu0
        %1885 = vdwg.mxu0
        %v1886 = vadd.f32 %v1512, %v1856
        %v1887 = vadd.f32 %v1513, %v1859
        %v1888 = vadd.f32 %v1514, %v1864
        %v1889 = vadd.f32 %v1515, %v1867
        %v1890 = vadd.f32 %v1516, %v1872
        %v1891 = vadd.f32 %v1517, %v1875
        %v1892 = vadd.f32 %v1518, %v1880
        %v1893 = vadd.f32 %v1519, %v1883
        %v1894 = vld [vmem:[%s14] sm:$0x1]
        %v1896 = vlaneseq
        %v1897 = vshrl.u32 %v1896, 7
        %v1898 = vsub.s32 0, %v1897
        %v1899 = vrot.slane %v1894, %v1898
        %v1901 = vadd.f32 %v1886, %v1899
        %v1902 = vadd.f32 %v1887, %v1899
        %v1903 = vadd.f32 %v1888, %v1899
        %v1904 = vadd.f32 %v1889, %v1899
        %v1905 = vadd.f32 %v1890, %v1899
        %v1906 = vadd.f32 %v1891, %v1899
        %v1907 = vadd.f32 %v1892, %v1899
        %v1908 = vadd.f32 %v1893, %v1899
        %s1909 = scalar_lea.vmem %s3, 1
        %v1910 = vld [vmem:[%s1909] sm:$0x1]
        %s1911 = scalar_lea.vmem %s4, 1
        %v1912 = vld [vmem:[%s1911] sm:$0x1]
        %v1913 = vmul.f32 %v1901, %v1901
        %v1914 = vmul.f32 %v1902, %v1902
        %v1915 = vmul.f32 %v1903, %v1903
        %v1916 = vmul.f32 %v1904, %v1904
        %v1917 = vmul.f32 %v1905, %v1905
        %v1918 = vmul.f32 %v1906, %v1906
        %v1919 = vmul.f32 %v1907, %v1907
        %v1920 = vmul.f32 %v1908, %v1908
        %v1921 = vsel %vm609, %v1913, 0.0
        %v1922 = vsel %vm609, %v1914, 0.0
        %v1923 = vadd.f32 %v1921, %v1922
        %v1924 = vsel %vm609, %v1915, 0.0
        %v1925 = vadd.f32 %v1923, %v1924
        %v1926 = vsel %vm609, %v1916, 0.0
        %v1927 = vadd.f32 %v1925, %v1926
        %v1928 = vsel %vm609, %v1917, 0.0
        %v1929 = vadd.f32 %v1927, %v1928
        %v1930 = vsel %vm609, %v1918, 0.0
        %v1931 = vadd.f32 %v1929, %v1930
        %v1932 = vsel %vm609, %v1919, 0.0
        %v1933 = vadd.f32 %v1931, %v1932
        %v1934 = vsel %vm609, %v1920, 0.0
        %v1935 = vadd.f32 %v1933, %v1934
        %v1936 = vrot.slane %v1935, 4
        %v1937 = vadd.f32 %v1935, %v1936
        %v1938 = vrot.slane %v1937, 2
        %v1939 = vadd.f32 %v1937, %v1938
        %v1940 = vrot.slane %v1939, 1
        %v1941 = vadd.f32 %v1939, %v1940
        %v1942 = vrsqrt.pop %v1941
        %v1943 = vmul.f32 %v1941, %v1942
        %vm1944 = vcmp.eq.f32.partialorder %v1941, inf
        %v1945 = vsel %vm1944, %v1941, %v1943
        %vm1946 = vcmp.eq.f32.partialorder %v1941, 0.0
        %v1947 = vand.u32 %v1941, 2147483648
        %v1948 = vsel %vm1946, %v1947, %v1945
        %v1949 = vsel %vm609, %v1948, 0.0
        %1950 = vadd.xlane.f32.xlu0 %v1949
        %v1951 = vpop.xlane.xlu0 %1950
        %v1952 = vmul.f32 %v1951, %v641
        %v1953 = vadd.f32 %v1952, 1e-06
        %v1954 = vrcp.pop %v1953
        %v1955 = vmul.f32 %v1948, %v1954
        %v1956 = vmul.f32 %v1901, %v1955
        %v1957 = vmul.f32 %v1902, %v1955
        %v1958 = vmul.f32 %v1903, %v1955
        %v1959 = vmul.f32 %v1904, %v1955
        %v1960 = vmul.f32 %v1905, %v1955
        %v1961 = vmul.f32 %v1906, %v1955
        %v1962 = vmul.f32 %v1907, %v1955
        %v1963 = vmul.f32 %v1908, %v1955
        %v1965 = vlaneseq
        %v1966 = vshrl.u32 %v1965, 7
        %v1967 = vsub.s32 0, %v1966
        %v1968 = vrot.slane %v1910, %v1967
        %v1970 = vmul.f32 %v1968, %v1956
        %v1971 = vmul.f32 %v1968, %v1957
        %v1972 = vmul.f32 %v1968, %v1958
        %v1973 = vmul.f32 %v1968, %v1959
        %v1974 = vmul.f32 %v1968, %v1960
        %v1975 = vmul.f32 %v1968, %v1961
        %v1976 = vmul.f32 %v1968, %v1962
        %v1977 = vmul.f32 %v1968, %v1963
        %v1979 = vlaneseq
        %v1980 = vshrl.u32 %v1979, 7
        %v1981 = vsub.s32 0, %v1980
        %v1982 = vrot.slane %v1912, %v1981
        %v1984 = vadd.f32 %v1970, %v1982
        %v1985 = vadd.f32 %v1971, %v1982
        %v1986 = vadd.f32 %v1972, %v1982
        %v1987 = vadd.f32 %v1973, %v1982
        %v1988 = vadd.f32 %v1974, %v1982
        %v1989 = vadd.f32 %v1975, %v1982
        %v1990 = vadd.f32 %v1976, %v1982
        %v1991 = vadd.f32 %v1977, %v1982
        %v1992 = vadd.f32 %v1984, %v1901
        %v1993 = vadd.f32 %v1985, %v1902
        %v1994 = vadd.f32 %v1986, %v1903
        %v1995 = vadd.f32 %v1987, %v1904
        %v1996 = vadd.f32 %v1988, %v1905
        %v1997 = vadd.f32 %v1989, %v1906
        %v1998 = vadd.f32 %v1990, %v1907
        %v1999 = vadd.f32 %v1991, %v1908
        %v2000 = vpack.c.bf16 %v1993, %v1992
        %v2001 = vpack.c.bf16 %v1995, %v1994
        %v2002 = vpack.c.bf16 %v1997, %v1996
        %v2003 = vpack.c.bf16 %v1999, %v1998
        %s2004 = scalar_lea.vmem %s5, 16
        %v2005 = vld [vmem:[%s2004] sm:$0xf]
        %v2006 = vld [vmem:[%s2004 + $0x4] sm:$0xf]
        %v2007 = vld [vmem:[%s2004 + $0x8] sm:$0xf]
        %v2008 = vld [vmem:[%s2004 + $0xc] sm:$0xf]
        %v2013 = vunpack.c.l.b16 %v2005
        %v2014 = vunpack.c.l.b16 %v2006
        %v2015 = vunpack.c.l.b16 %v2007
        %v2016 = vunpack.c.l.b16 %v2008
        %v2017 = vpack.c.b16 %v2014, %v2013
        %v2018 = vpack.c.b16 %v2016, %v2015
        %v2022 = vsel %vm609, %v2000, 0
        %v2025 = vsel %vm609, %v2001, 0
        %v2028 = vsel %vm609, %v2002, 0
        %v2031 = vsel %vm609, %v2003, 0
        %2033 = vmatprep.subr.bf16.mxu0 0
        %2034 = vmatpush1.bf16.msra.mxu0 0
        %2035 = vmatprep.subr.bf16.mxu0 0
        %2036 = vmatpush1.bf16.msra.mxu0 0
        %2037 = vmatprep.subr.bf16.mxu0 0
        %2038 = vmatpush1.bf16.msra.mxu0 0
        %2039 = vmatprep.subr.bf16.mxu0 0
        %2040 = vmatpush1.bf16.msra.mxu0 0
        %2041 = vmatprep.subr.bf16.mxu0 0
        %2042 = vmatpush1.bf16.msra.mxu0 0
        %2043 = vmatprep.subr.bf16.mxu0 0
        %2044 = vmatpush1.bf16.msra.mxu0 0
        %2045 = vmatprep.subr.bf16.mxu0 0
        %2046 = vmatpush1.bf16.msra.mxu0 %v2018
        %2047 = vmatprep.subr.bf16.mxu0 0
        %2048 = vmatpush1.bf16.msra.mxu0 %v2017
        %2049 = vmatprep.subr.bf16.mxu0 0
        %2050 = vmatpush2.bf16.msra.mxu0 0
        %2051 = vmatprep.subr.bf16.mxu0 0
        %2052 = vmatpush2.bf16.msra.mxu0 0
        %2053 = vmatprep.subr.bf16.mxu0 0
        %2054 = vmatpush2.bf16.msra.mxu0 0
        %2055 = vmatprep.subr.bf16.mxu0 0
        %2056 = vmatpush2.bf16.msra.mxu0 0
        %2057 = vmatprep.subr.bf16.mxu0 0
        %2058 = vmatpush2.bf16.msra.mxu0 0
        %2059 = vmatprep.subr.bf16.mxu0 0
        %2060 = vmatpush2.bf16.msra.mxu0 0
        %2061 = vmatprep.subr.bf16.mxu0 0
        %2062 = vmatpush2.bf16.msra.mxu0 0
        %2063 = vmatprep.subr.bf16.mxu0 0
        %2064 = vmatpush2.bf16.msra.mxu0 0
        %2065 = vmatprep.mubr.bf16.mxu0 0
        %2066 = vmatmul.mubr.bf16.gmra.mxu0 %v2022
        %v2067 = vpop.f32.mrf.mxu0
        %v2068 = vadd.f32 0.0, %v2067
        %v2069 = vpop.f32.mrf.mxu0
        %v2070 = vpop.f32.mrf.mxu0
        %v2071 = vadd.f32 0.0, %v2070
        %v2072 = vpop.f32.mrf.mxu0
        %2073 = vmatprep.mubr.bf16.mxu0 0
        %2074 = vmatmul.mubr.bf16.gmra.mxu0 %v2025
        %v2075 = vpop.f32.mrf.mxu0
        %v2076 = vadd.f32 0.0, %v2075
        %v2077 = vpop.f32.mrf.mxu0
        %v2078 = vpop.f32.mrf.mxu0
        %v2079 = vadd.f32 0.0, %v2078
        %v2080 = vpop.f32.mrf.mxu0
        %2081 = vmatprep.mubr.bf16.mxu0 0
        %2082 = vmatmul.mubr.bf16.gmra.mxu0 %v2028
        %v2083 = vpop.f32.mrf.mxu0
        %v2084 = vadd.f32 0.0, %v2083
        %v2085 = vpop.f32.mrf.mxu0
        %v2086 = vpop.f32.mrf.mxu0
        %v2087 = vadd.f32 0.0, %v2086
        %v2088 = vpop.f32.mrf.mxu0
        %2089 = vmatprep.mubr.bf16.mxu0 0
        %2090 = vmatmul.mubr.bf16.gmra.mxu0 %v2031
        %v2091 = vpop.f32.mrf.mxu0
        %v2092 = vadd.f32 0.0, %v2091
        %v2093 = vpop.f32.mrf.mxu0
        %v2094 = vpop.f32.mrf.mxu0
        %v2095 = vadd.f32 0.0, %v2094
        %v2096 = vpop.f32.mrf.mxu0
        %2097 = vdwg.mxu0
        %s2098 = scalar_lea.vmem %s8, 64
        %v2099 = vld [vmem:[%s2098] sm:$0xff]
        %v2100 = vld [vmem:[%s2098 + $0x8] sm:$0xff]
        %v2101 = vld [vmem:[%s2098 + $0x10] sm:$0xff]
        %v2102 = vld [vmem:[%s2098 + $0x18] sm:$0xff]
        %v2103 = vld [vmem:[%s2098 + $0x20] sm:$0xff]
        %v2104 = vld [vmem:[%s2098 + $0x28] sm:$0xff]
        %v2105 = vld [vmem:[%s2098 + $0x30] sm:$0xff]
        %v2106 = vld [vmem:[%s2098 + $0x38] sm:$0xff]
        %v2107 = vpack.c.bf16 %v2071, %v2068
        %v2108 = vpack.c.bf16 %v2079, %v2076
        %v2109 = vpack.c.bf16 %v2087, %v2084
        %v2110 = vpack.c.bf16 %v2095, %v2092
        %2115 = vrot.lane.b32.xlu0 %v2107, 96
        %v2116 = vpop.permute.xlu0 %2115
        %2117 = vrot.lane.b32.xlu0 %v2108, 96
        %v2118 = vpop.permute.xlu0 %2117
        %2119 = vrot.lane.b32.xlu0 %v2109, 96
        %v2120 = vpop.permute.xlu0 %2119
        %2121 = vrot.lane.b32.xlu0 %v2110, 96
        %v2122 = vpop.permute.xlu0 %2121
        %v2124 = vsel %vm521, %v2107, 0
        %v2127 = vsel %vm521, %v2108, 0
        %v2130 = vsel %vm521, %v2109, 0
        %v2133 = vsel %vm521, %v2110, 0
        %v2136 = vsel %vm521, %v2116, 0
        %v2139 = vsel %vm521, %v2118, 0
        %v2142 = vsel %vm521, %v2120, 0
        %v2145 = vsel %vm521, %v2122, 0
        %2147 = vmatprep.subr.bf16.mxu0 0
        %2148 = vmatpush1.bf16.xpose.msra.mxu0 0
        %2149 = vmatprep.subr.bf16.mxu0 0
        %2150 = vmatpush1.bf16.xpose.msra.mxu0 0
        %2151 = vmatprep.subr.bf16.mxu0 0
        %2152 = vmatpush1.bf16.xpose.msra.mxu0 0
        %2153 = vmatprep.subr.bf16.mxu0 0
        %2154 = vmatpush1.bf16.xpose.msra.mxu0 0
        %2155 = vmatprep.subr.bf16.mxu0 0
        %2156 = vmatpush1.bf16.xpose.msra.mxu0 %v2145
        %2157 = vmatprep.subr.bf16.mxu0 0
        %2158 = vmatpush1.bf16.xpose.msra.mxu0 %v2142
        %2159 = vmatprep.subr.bf16.mxu0 0
        %2160 = vmatpush1.bf16.xpose.msra.mxu0 %v2139
        %2161 = vmatprep.subr.bf16.mxu0 0
        %2162 = vmatpush1.bf16.xpose.msra.mxu0 %v2136
        %2163 = vmatprep.subr.bf16.mxu0 0
        %2164 = vmatpush2.bf16.xpose.msra.mxu0 0
        %2165 = vmatprep.subr.bf16.mxu0 0
        %2166 = vmatpush2.bf16.xpose.msra.mxu0 0
        %2167 = vmatprep.subr.bf16.mxu0 0
        %2168 = vmatpush2.bf16.xpose.msra.mxu0 0
        %2169 = vmatprep.subr.bf16.mxu0 0
        %2170 = vmatpush2.bf16.xpose.msra.mxu0 0
        %2171 = vmatprep.subr.bf16.mxu0 0
        %2172 = vmatpush2.bf16.xpose.msra.mxu0 0
        %2173 = vmatprep.subr.bf16.mxu0 0
        %2174 = vmatpush2.bf16.xpose.msra.mxu0 0
        %2175 = vmatprep.subr.bf16.mxu0 0
        %2176 = vmatpush2.bf16.xpose.msra.mxu0 0
        %2177 = vmatprep.subr.bf16.mxu0 0
        %2178 = vmatpush2.bf16.xpose.msra.mxu0 0
        %2179 = vmatprep.mubr.bf16.mxu0 0
        %2180 = vmatmul.mubr.bf16.gmra.mxu0 %v2124
        %v2181 = vpop.f32.mrf.mxu0
        %v2182 = vadd.f32 %v2099, %v2181
        %v2183 = vpop.f32.mrf.mxu0
        %v2184 = vpop.f32.mrf.mxu0
        %v2185 = vadd.f32 %v2100, %v2184
        %v2186 = vpop.f32.mrf.mxu0
        %2187 = vmatprep.mubr.bf16.mxu0 0
        %2188 = vmatmul.mubr.bf16.gmra.mxu0 %v2127
        %v2189 = vpop.f32.mrf.mxu0
        %v2190 = vadd.f32 %v2101, %v2189
        %v2191 = vpop.f32.mrf.mxu0
        %v2192 = vpop.f32.mrf.mxu0
        %v2193 = vadd.f32 %v2102, %v2192
        %v2194 = vpop.f32.mrf.mxu0
        %2195 = vmatprep.mubr.bf16.mxu0 0
        %2196 = vmatmul.mubr.bf16.gmra.mxu0 %v2130
        %v2197 = vpop.f32.mrf.mxu0
        %v2198 = vadd.f32 %v2103, %v2197
        %v2199 = vpop.f32.mrf.mxu0
        %v2200 = vpop.f32.mrf.mxu0
        %v2201 = vadd.f32 %v2104, %v2200
        %v2202 = vpop.f32.mrf.mxu0
        %2203 = vmatprep.mubr.bf16.mxu0 0
        %2204 = vmatmul.mubr.bf16.gmra.mxu0 %v2133
        %v2205 = vpop.f32.mrf.mxu0
        %v2206 = vadd.f32 %v2105, %v2205
        %v2207 = vpop.f32.mrf.mxu0
        %v2208 = vpop.f32.mrf.mxu0
        %v2209 = vadd.f32 %v2106, %v2208
        %v2210 = vpop.f32.mrf.mxu0
        %2211 = vdwg.mxu0
        %v2212 = vsel %vm900, %v2182, -inf
        %2213 = vmax.xlane.f32.xlu0 %v2212
        %v2214 = vpop.xlane.xlu0 %2213
        %v2215 = vsel %vm900, %v2185, -inf
        %2216 = vmax.xlane.f32.xlu0 %v2215
        %v2217 = vpop.xlane.xlu0 %2216
        %v2218 = vsel %vm900, %v2190, -inf
        %2219 = vmax.xlane.f32.xlu0 %v2218
        %v2220 = vpop.xlane.xlu0 %2219
        %v2221 = vsel %vm900, %v2193, -inf
        %2222 = vmax.xlane.f32.xlu0 %v2221
        %v2223 = vpop.xlane.xlu0 %2222
        %v2224 = vsel %vm900, %v2198, -inf
        %2225 = vmax.xlane.f32.xlu0 %v2224
        %v2226 = vpop.xlane.xlu0 %2225
        %v2227 = vsel %vm900, %v2201, -inf
        %2228 = vmax.xlane.f32.xlu0 %v2227
        %v2229 = vpop.xlane.xlu0 %2228
        %v2230 = vsel %vm900, %v2206, -inf
        %2231 = vmax.xlane.f32.xlu0 %v2230
        %v2232 = vpop.xlane.xlu0 %2231
        %v2233 = vsel %vm900, %v2209, -inf
        %2234 = vmax.xlane.f32.xlu0 %v2233
        %v2235 = vpop.xlane.xlu0 %2234
        %v2236 = vsub.f32 %v2182, %v2214
        %v2237 = vsub.f32 %v2185, %v2217
        %v2238 = vsub.f32 %v2190, %v2220
        %v2239 = vsub.f32 %v2193, %v2223
        %v2240 = vsub.f32 %v2198, %v2226
        %v2241 = vsub.f32 %v2201, %v2229
        %v2242 = vsub.f32 %v2206, %v2232
        %v2243 = vsub.f32 %v2209, %v2235
        %v2244 = vmul.f32 %v2236, 1.442695
        %v2245 = vpow.pop %v2244
        %v2246 = vmul.f32 %v2237, 1.442695
        %v2247 = vpow.pop %v2246
        %v2248 = vmul.f32 %v2238, 1.442695
        %v2249 = vpow.pop %v2248
        %v2250 = vmul.f32 %v2239, 1.442695
        %v2251 = vpow.pop %v2250
        %v2252 = vmul.f32 %v2240, 1.442695
        %v2253 = vpow.pop %v2252
        %v2254 = vmul.f32 %v2241, 1.442695
        %v2255 = vpow.pop %v2254
        %v2256 = vmul.f32 %v2242, 1.442695
        %v2257 = vpow.pop %v2256
        %v2258 = vmul.f32 %v2243, 1.442695
        %v2259 = vpow.pop %v2258
        %v2260 = vsel %vm900, %v2245, 0.0
        %2261 = vadd.xlane.f32.xlu0 %v2260
        %v2262 = vpop.xlane.xlu0 %2261
        %v2263 = vsel %vm900, %v2247, 0.0
        %2264 = vadd.xlane.f32.xlu0 %v2263
        %v2265 = vpop.xlane.xlu0 %2264
        %v2266 = vsel %vm900, %v2249, 0.0
        %2267 = vadd.xlane.f32.xlu0 %v2266
        %v2268 = vpop.xlane.xlu0 %2267
        %v2269 = vsel %vm900, %v2251, 0.0
        %2270 = vadd.xlane.f32.xlu0 %v2269
        %v2271 = vpop.xlane.xlu0 %2270
        %v2272 = vsel %vm900, %v2253, 0.0
        %2273 = vadd.xlane.f32.xlu0 %v2272
        %v2274 = vpop.xlane.xlu0 %2273
        %v2275 = vsel %vm900, %v2255, 0.0
        %2276 = vadd.xlane.f32.xlu0 %v2275
        %v2277 = vpop.xlane.xlu0 %2276
        %v2278 = vsel %vm900, %v2257, 0.0
        %2279 = vadd.xlane.f32.xlu0 %v2278
        %v2280 = vpop.xlane.xlu0 %2279
        %v2281 = vsel %vm900, %v2259, 0.0
        %2282 = vadd.xlane.f32.xlu0 %v2281
        %v2283 = vpop.xlane.xlu0 %2282
        %v2284 = vrcp.pop %v2262
        %v2285 = vmul.f32 %v2245, %v2284
        %v2286 = vrcp.pop %v2265
        %v2287 = vmul.f32 %v2247, %v2286
        %v2288 = vrcp.pop %v2268
        %v2289 = vmul.f32 %v2249, %v2288
        %v2290 = vrcp.pop %v2271
        %v2291 = vmul.f32 %v2251, %v2290
        %v2292 = vrcp.pop %v2274
        %v2293 = vmul.f32 %v2253, %v2292
        %v2294 = vrcp.pop %v2277
        %v2295 = vmul.f32 %v2255, %v2294
        %v2296 = vrcp.pop %v2280
        %v2297 = vmul.f32 %v2257, %v2296
        %v2298 = vrcp.pop %v2283
        %v2299 = vmul.f32 %v2259, %v2298
        %v2300 = vpack.c.bf16 %v2287, %v2285
        %v2301 = vpack.c.bf16 %v2291, %v2289
        %v2302 = vpack.c.bf16 %v2295, %v2293
        %v2303 = vpack.c.bf16 %v2299, %v2297
        %2304 = vrot.lane.b32.xlu0 %v2107, 64
        %v2305 = vpop.permute.xlu0 %2304
        %2306 = vrot.lane.b32.xlu0 %v2108, 64
        %v2307 = vpop.permute.xlu0 %2306
        %2308 = vrot.lane.b32.xlu0 %v2109, 64
        %v2309 = vpop.permute.xlu0 %2308
        %2310 = vrot.lane.b32.xlu0 %v2110, 64
        %v2311 = vpop.permute.xlu0 %2310
        %v2317 = vsel %vm900, %v2300, 0
        %v2320 = vsel %vm900, %v2301, 0
        %v2323 = vsel %vm900, %v2302, 0
        %v2326 = vsel %vm900, %v2303, 0
        %2328 = vmatprep.subr.bf16.mxu0 0
        %2329 = vmatpush1.bf16.msra.mxu0 0
        %2330 = vmatprep.subr.bf16.mxu0 0
        %2331 = vmatpush1.bf16.msra.mxu0 0
        %2332 = vmatprep.subr.bf16.mxu0 0
        %2333 = vmatpush1.bf16.msra.mxu0 0
        %2334 = vmatprep.subr.bf16.mxu0 0
        %2335 = vmatpush1.bf16.msra.mxu0 0
        %2336 = vmatprep.subr.bf16.mxu0 0
        %2337 = vmatpush1.bf16.msra.mxu0 %v2311
        %2338 = vmatprep.subr.bf16.mxu0 0
        %2339 = vmatpush1.bf16.msra.mxu0 %v2309
        %2340 = vmatprep.subr.bf16.mxu0 0
        %2341 = vmatpush1.bf16.msra.mxu0 %v2307
        %2342 = vmatprep.subr.bf16.mxu0 0
        %2343 = vmatpush1.bf16.msra.mxu0 %v2305
        %2344 = vmatprep.subr.bf16.mxu0 0
        %2345 = vmatpush2.bf16.msra.mxu0 0
        %2346 = vmatprep.subr.bf16.mxu0 0
        %2347 = vmatpush2.bf16.msra.mxu0 0
        %2348 = vmatprep.subr.bf16.mxu0 0
        %2349 = vmatpush2.bf16.msra.mxu0 0
        %2350 = vmatprep.subr.bf16.mxu0 0
        %2351 = vmatpush2.bf16.msra.mxu0 0
        %2352 = vmatprep.subr.bf16.mxu0 0
        %2353 = vmatpush2.bf16.msra.mxu0 0
        %2354 = vmatprep.subr.bf16.mxu0 0
        %2355 = vmatpush2.bf16.msra.mxu0 0
        %2356 = vmatprep.subr.bf16.mxu0 0
        %2357 = vmatpush2.bf16.msra.mxu0 0
        %2358 = vmatprep.subr.bf16.mxu0 0
        %2359 = vmatpush2.bf16.msra.mxu0 0
        %2360 = vmatprep.mubr.bf16.mxu0 0
        %2361 = vmatmul.mubr.bf16.gmra.mxu0 %v2317
        %v2362 = vpop.f32.mrf.mxu0
        %v2363 = vadd.f32 0.0, %v2362
        %v2364 = vpop.f32.mrf.mxu0
        %v2365 = vpop.f32.mrf.mxu0
        %v2366 = vadd.f32 0.0, %v2365
        %v2367 = vpop.f32.mrf.mxu0
        %2368 = vmatprep.mubr.bf16.mxu0 0
        %2369 = vmatmul.mubr.bf16.gmra.mxu0 %v2320
        %v2370 = vpop.f32.mrf.mxu0
        %v2371 = vadd.f32 0.0, %v2370
        %v2372 = vpop.f32.mrf.mxu0
        %v2373 = vpop.f32.mrf.mxu0
        %v2374 = vadd.f32 0.0, %v2373
        %v2375 = vpop.f32.mrf.mxu0
        %2376 = vmatprep.mubr.bf16.mxu0 0
        %2377 = vmatmul.mubr.bf16.gmra.mxu0 %v2323
        %v2378 = vpop.f32.mrf.mxu0
        %v2379 = vadd.f32 0.0, %v2378
        %v2380 = vpop.f32.mrf.mxu0
        %v2381 = vpop.f32.mrf.mxu0
        %v2382 = vadd.f32 0.0, %v2381
        %v2383 = vpop.f32.mrf.mxu0
        %2384 = vmatprep.mubr.bf16.mxu0 0
        %2385 = vmatmul.mubr.bf16.gmra.mxu0 %v2326
        %v2386 = vpop.f32.mrf.mxu0
        %v2387 = vadd.f32 0.0, %v2386
        %v2388 = vpop.f32.mrf.mxu0
        %v2389 = vpop.f32.mrf.mxu0
        %v2390 = vadd.f32 0.0, %v2389
        %v2391 = vpop.f32.mrf.mxu0
        %2392 = vdwg.mxu0
        %2393 = vrot.lane.b32.xlu0 %v2107, 112
        %v2394 = vpop.permute.xlu0 %2393
        %2395 = vrot.lane.b32.xlu0 %v2108, 112
        %v2396 = vpop.permute.xlu0 %2395
        %2397 = vrot.lane.b32.xlu0 %v2109, 112
        %v2398 = vpop.permute.xlu0 %2397
        %2399 = vrot.lane.b32.xlu0 %v2110, 112
        %v2400 = vpop.permute.xlu0 %2399
        %2401 = vrot.lane.b32.xlu0 %v2107, 80
        %v2402 = vpop.permute.xlu0 %2401
        %2403 = vrot.lane.b32.xlu0 %v2108, 80
        %v2404 = vpop.permute.xlu0 %2403
        %2405 = vrot.lane.b32.xlu0 %v2109, 80
        %v2406 = vpop.permute.xlu0 %2405
        %2407 = vrot.lane.b32.xlu0 %v2110, 80
        %v2408 = vpop.permute.xlu0 %2407
        %v2410 = vsel %vm521, %v2394, 0
        %v2413 = vsel %vm521, %v2396, 0
        %v2416 = vsel %vm521, %v2398, 0
        %v2419 = vsel %vm521, %v2400, 0
        %v2422 = vsel %vm521, %v2402, 0
        %v2425 = vsel %vm521, %v2404, 0
        %v2428 = vsel %vm521, %v2406, 0
        %v2431 = vsel %vm521, %v2408, 0
        %2433 = vmatprep.subr.bf16.mxu0 0
        %2434 = vmatpush1.bf16.xpose.msra.mxu0 0
        %2435 = vmatprep.subr.bf16.mxu0 0
        %2436 = vmatpush1.bf16.xpose.msra.mxu0 0
        %2437 = vmatprep.subr.bf16.mxu0 0
        %2438 = vmatpush1.bf16.xpose.msra.mxu0 0
        %2439 = vmatprep.subr.bf16.mxu0 0
        %2440 = vmatpush1.bf16.xpose.msra.mxu0 0
        %2441 = vmatprep.subr.bf16.mxu0 0
        %2442 = vmatpush1.bf16.xpose.msra.mxu0 %v2431
        %2443 = vmatprep.subr.bf16.mxu0 0
        %2444 = vmatpush1.bf16.xpose.msra.mxu0 %v2428
        %2445 = vmatprep.subr.bf16.mxu0 0
        %2446 = vmatpush1.bf16.xpose.msra.mxu0 %v2425
        %2447 = vmatprep.subr.bf16.mxu0 0
        %2448 = vmatpush1.bf16.xpose.msra.mxu0 %v2422
        %2449 = vmatprep.subr.bf16.mxu0 0
        %2450 = vmatpush2.bf16.xpose.msra.mxu0 0
        %2451 = vmatprep.subr.bf16.mxu0 0
        %2452 = vmatpush2.bf16.xpose.msra.mxu0 0
        %2453 = vmatprep.subr.bf16.mxu0 0
        %2454 = vmatpush2.bf16.xpose.msra.mxu0 0
        %2455 = vmatprep.subr.bf16.mxu0 0
        %2456 = vmatpush2.bf16.xpose.msra.mxu0 0
        %2457 = vmatprep.subr.bf16.mxu0 0
        %2458 = vmatpush2.bf16.xpose.msra.mxu0 0
        %2459 = vmatprep.subr.bf16.mxu0 0
        %2460 = vmatpush2.bf16.xpose.msra.mxu0 0
        %2461 = vmatprep.subr.bf16.mxu0 0
        %2462 = vmatpush2.bf16.xpose.msra.mxu0 0
        %2463 = vmatprep.subr.bf16.mxu0 0
        %2464 = vmatpush2.bf16.xpose.msra.mxu0 0
        %2465 = vmatprep.mubr.bf16.mxu0 0
        %2466 = vmatmul.mubr.bf16.gmra.mxu0 %v2410
        %v2467 = vpop.f32.mrf.mxu0
        %v2468 = vadd.f32 %v2099, %v2467
        %v2469 = vpop.f32.mrf.mxu0
        %v2470 = vpop.f32.mrf.mxu0
        %v2471 = vadd.f32 %v2100, %v2470
        %v2472 = vpop.f32.mrf.mxu0
        %2473 = vmatprep.mubr.bf16.mxu0 0
        %2474 = vmatmul.mubr.bf16.gmra.mxu0 %v2413
        %v2475 = vpop.f32.mrf.mxu0
        %v2476 = vadd.f32 %v2101, %v2475
        %v2477 = vpop.f32.mrf.mxu0
        %v2478 = vpop.f32.mrf.mxu0
        %v2479 = vadd.f32 %v2102, %v2478
        %v2480 = vpop.f32.mrf.mxu0
        %2481 = vmatprep.mubr.bf16.mxu0 0
        %2482 = vmatmul.mubr.bf16.gmra.mxu0 %v2416
        %v2483 = vpop.f32.mrf.mxu0
        %v2484 = vadd.f32 %v2103, %v2483
        %v2485 = vpop.f32.mrf.mxu0
        %v2486 = vpop.f32.mrf.mxu0
        %v2487 = vadd.f32 %v2104, %v2486
        %v2488 = vpop.f32.mrf.mxu0
        %2489 = vmatprep.mubr.bf16.mxu0 0
        %2490 = vmatmul.mubr.bf16.gmra.mxu0 %v2419
        %v2491 = vpop.f32.mrf.mxu0
        %v2492 = vadd.f32 %v2105, %v2491
        %v2493 = vpop.f32.mrf.mxu0
        %v2494 = vpop.f32.mrf.mxu0
        %v2495 = vadd.f32 %v2106, %v2494
        %v2496 = vpop.f32.mrf.mxu0
        %2497 = vdwg.mxu0
        %v2498 = vsel %vm900, %v2468, -inf
        %2499 = vmax.xlane.f32.xlu0 %v2498
        %v2500 = vpop.xlane.xlu0 %2499
        %v2501 = vsel %vm900, %v2471, -inf
        %2502 = vmax.xlane.f32.xlu0 %v2501
        %v2503 = vpop.xlane.xlu0 %2502
        %v2504 = vsel %vm900, %v2476, -inf
        %2505 = vmax.xlane.f32.xlu0 %v2504
        %v2506 = vpop.xlane.xlu0 %2505
        %v2507 = vsel %vm900, %v2479, -inf
        %2508 = vmax.xlane.f32.xlu0 %v2507
        %v2509 = vpop.xlane.xlu0 %2508
        %v2510 = vsel %vm900, %v2484, -inf
        %2511 = vmax.xlane.f32.xlu0 %v2510
        %v2512 = vpop.xlane.xlu0 %2511
        %v2513 = vsel %vm900, %v2487, -inf
        %2514 = vmax.xlane.f32.xlu0 %v2513
        %v2515 = vpop.xlane.xlu0 %2514
        %v2516 = vsel %vm900, %v2492, -inf
        %2517 = vmax.xlane.f32.xlu0 %v2516
        %v2518 = vpop.xlane.xlu0 %2517
        %v2519 = vsel %vm900, %v2495, -inf
        %2520 = vmax.xlane.f32.xlu0 %v2519
        %v2521 = vpop.xlane.xlu0 %2520
        %v2522 = vsub.f32 %v2468, %v2500
        %v2523 = vsub.f32 %v2471, %v2503
        %v2524 = vsub.f32 %v2476, %v2506
        %v2525 = vsub.f32 %v2479, %v2509
        %v2526 = vsub.f32 %v2484, %v2512
        %v2527 = vsub.f32 %v2487, %v2515
        %v2528 = vsub.f32 %v2492, %v2518
        %v2529 = vsub.f32 %v2495, %v2521
        %v2530 = vmul.f32 %v2522, 1.442695
        %v2531 = vpow.pop %v2530
        %v2532 = vmul.f32 %v2523, 1.442695
        %v2533 = vpow.pop %v2532
        %v2534 = vmul.f32 %v2524, 1.442695
        %v2535 = vpow.pop %v2534
        %v2536 = vmul.f32 %v2525, 1.442695
        %v2537 = vpow.pop %v2536
        %v2538 = vmul.f32 %v2526, 1.442695
        %v2539 = vpow.pop %v2538
        %v2540 = vmul.f32 %v2527, 1.442695
        %v2541 = vpow.pop %v2540
        %v2542 = vmul.f32 %v2528, 1.442695
        %v2543 = vpow.pop %v2542
        %v2544 = vmul.f32 %v2529, 1.442695
        %v2545 = vpow.pop %v2544
        %v2546 = vsel %vm900, %v2531, 0.0
        %2547 = vadd.xlane.f32.xlu0 %v2546
        %v2548 = vpop.xlane.xlu0 %2547
        %v2549 = vsel %vm900, %v2533, 0.0
        %2550 = vadd.xlane.f32.xlu0 %v2549
        %v2551 = vpop.xlane.xlu0 %2550
        %v2552 = vsel %vm900, %v2535, 0.0
        %2553 = vadd.xlane.f32.xlu0 %v2552
        %v2554 = vpop.xlane.xlu0 %2553
        %v2555 = vsel %vm900, %v2537, 0.0
        %2556 = vadd.xlane.f32.xlu0 %v2555
        %v2557 = vpop.xlane.xlu0 %2556
        %v2558 = vsel %vm900, %v2539, 0.0
        %2559 = vadd.xlane.f32.xlu0 %v2558
        %v2560 = vpop.xlane.xlu0 %2559
        %v2561 = vsel %vm900, %v2541, 0.0
        %2562 = vadd.xlane.f32.xlu0 %v2561
        %v2563 = vpop.xlane.xlu0 %2562
        %v2564 = vsel %vm900, %v2543, 0.0
        %2565 = vadd.xlane.f32.xlu0 %v2564
        %v2566 = vpop.xlane.xlu0 %2565
        %v2567 = vsel %vm900, %v2545, 0.0
        %2568 = vadd.xlane.f32.xlu0 %v2567
        %v2569 = vpop.xlane.xlu0 %2568
        %v2570 = vrcp.pop %v2548
        %v2571 = vmul.f32 %v2531, %v2570
        %v2572 = vrcp.pop %v2551
        %v2573 = vmul.f32 %v2533, %v2572
        %v2574 = vrcp.pop %v2554
        %v2575 = vmul.f32 %v2535, %v2574
        %v2576 = vrcp.pop %v2557
        %v2577 = vmul.f32 %v2537, %v2576
        %v2578 = vrcp.pop %v2560
        %v2579 = vmul.f32 %v2539, %v2578
        %v2580 = vrcp.pop %v2563
        %v2581 = vmul.f32 %v2541, %v2580
        %v2582 = vrcp.pop %v2566
        %v2583 = vmul.f32 %v2543, %v2582
        %v2584 = vrcp.pop %v2569
        %v2585 = vmul.f32 %v2545, %v2584
        %v2586 = vpack.c.bf16 %v2573, %v2571
        %v2587 = vpack.c.bf16 %v2577, %v2575
        %v2588 = vpack.c.bf16 %v2581, %v2579
        %v2589 = vpack.c.bf16 %v2585, %v2583
        %2590 = vrot.lane.b32.xlu0 %v2107, 48
        %v2591 = vpop.permute.xlu0 %2590
        %2592 = vrot.lane.b32.xlu0 %v2108, 48
        %v2593 = vpop.permute.xlu0 %2592
        %2594 = vrot.lane.b32.xlu0 %v2109, 48
        %v2595 = vpop.permute.xlu0 %2594
        %2596 = vrot.lane.b32.xlu0 %v2110, 48
        %v2597 = vpop.permute.xlu0 %2596
        %v2603 = vsel %vm900, %v2586, 0
        %v2606 = vsel %vm900, %v2587, 0
        %v2609 = vsel %vm900, %v2588, 0
        %v2612 = vsel %vm900, %v2589, 0
        %2614 = vmatprep.subr.bf16.mxu0 0
        %2615 = vmatpush1.bf16.msra.mxu0 0
        %2616 = vmatprep.subr.bf16.mxu0 0
        %2617 = vmatpush1.bf16.msra.mxu0 0
        %2618 = vmatprep.subr.bf16.mxu0 0
        %2619 = vmatpush1.bf16.msra.mxu0 0
        %2620 = vmatprep.subr.bf16.mxu0 0
        %2621 = vmatpush1.bf16.msra.mxu0 0
        %2622 = vmatprep.subr.bf16.mxu0 0
        %2623 = vmatpush1.bf16.msra.mxu0 %v2597
        %2624 = vmatprep.subr.bf16.mxu0 0
        %2625 = vmatpush1.bf16.msra.mxu0 %v2595
        %2626 = vmatprep.subr.bf16.mxu0 0
        %2627 = vmatpush1.bf16.msra.mxu0 %v2593
        %2628 = vmatprep.subr.bf16.mxu0 0
        %2629 = vmatpush1.bf16.msra.mxu0 %v2591
        %2630 = vmatprep.subr.bf16.mxu0 0
        %2631 = vmatpush2.bf16.msra.mxu0 0
        %2632 = vmatprep.subr.bf16.mxu0 0
        %2633 = vmatpush2.bf16.msra.mxu0 0
        %2634 = vmatprep.subr.bf16.mxu0 0
        %2635 = vmatpush2.bf16.msra.mxu0 0
        %2636 = vmatprep.subr.bf16.mxu0 0
        %2637 = vmatpush2.bf16.msra.mxu0 0
        %2638 = vmatprep.subr.bf16.mxu0 0
        %2639 = vmatpush2.bf16.msra.mxu0 0
        %2640 = vmatprep.subr.bf16.mxu0 0
        %2641 = vmatpush2.bf16.msra.mxu0 0
        %2642 = vmatprep.subr.bf16.mxu0 0
        %2643 = vmatpush2.bf16.msra.mxu0 0
        %2644 = vmatprep.subr.bf16.mxu0 0
        %2645 = vmatpush2.bf16.msra.mxu0 0
        %2646 = vmatprep.mubr.bf16.mxu0 0
        %2647 = vmatmul.mubr.bf16.gmra.mxu0 %v2603
        %v2648 = vpop.f32.mrf.mxu0
        %v2649 = vadd.f32 0.0, %v2648
        %v2650 = vpop.f32.mrf.mxu0
        %v2651 = vpop.f32.mrf.mxu0
        %v2652 = vadd.f32 0.0, %v2651
        %v2653 = vpop.f32.mrf.mxu0
        %2654 = vmatprep.mubr.bf16.mxu0 0
        %2655 = vmatmul.mubr.bf16.gmra.mxu0 %v2606
        %v2656 = vpop.f32.mrf.mxu0
        %v2657 = vadd.f32 0.0, %v2656
        %v2658 = vpop.f32.mrf.mxu0
        %v2659 = vpop.f32.mrf.mxu0
        %v2660 = vadd.f32 0.0, %v2659
        %v2661 = vpop.f32.mrf.mxu0
        %2662 = vmatprep.mubr.bf16.mxu0 0
        %2663 = vmatmul.mubr.bf16.gmra.mxu0 %v2609
        %v2664 = vpop.f32.mrf.mxu0
        %v2665 = vadd.f32 0.0, %v2664
        %v2666 = vpop.f32.mrf.mxu0
        %v2667 = vpop.f32.mrf.mxu0
        %v2668 = vadd.f32 0.0, %v2667
        %v2669 = vpop.f32.mrf.mxu0
        %2670 = vmatprep.mubr.bf16.mxu0 0
        %2671 = vmatmul.mubr.bf16.gmra.mxu0 %v2612
        %v2672 = vpop.f32.mrf.mxu0
        %v2673 = vadd.f32 0.0, %v2672
        %v2674 = vpop.f32.mrf.mxu0
        %v2675 = vpop.f32.mrf.mxu0
        %v2676 = vadd.f32 0.0, %v2675
        %v2677 = vpop.f32.mrf.mxu0
        %2678 = vdwg.mxu0
        %2687 = vrot.lane.b32.xlu0 %v2649, 16
        %v2688 = vpop.permute.xlu0 %2687
        %2689 = vrot.lane.b32.xlu0 %v2652, 16
        %v2690 = vpop.permute.xlu0 %2689
        %2691 = vrot.lane.b32.xlu0 %v2657, 16
        %v2692 = vpop.permute.xlu0 %2691
        %2693 = vrot.lane.b32.xlu0 %v2660, 16
        %v2694 = vpop.permute.xlu0 %2693
        %2695 = vrot.lane.b32.xlu0 %v2665, 16
        %v2696 = vpop.permute.xlu0 %2695
        %2697 = vrot.lane.b32.xlu0 %v2668, 16
        %v2698 = vpop.permute.xlu0 %2697
        %2699 = vrot.lane.b32.xlu0 %v2673, 16
        %v2700 = vpop.permute.xlu0 %2699
        %2701 = vrot.lane.b32.xlu0 %v2676, 16
        %v2702 = vpop.permute.xlu0 %2701
        %v2711 = vsel %vm521, %v2363, %v2688
        %v2712 = vsel %vm521, %v2366, %v2690
        %v2713 = vsel %vm521, %v2371, %v2692
        %v2714 = vsel %vm521, %v2374, %v2694
        %v2715 = vsel %vm521, %v2379, %v2696
        %v2716 = vsel %vm521, %v2382, %v2698
        %v2717 = vsel %vm521, %v2387, %v2700
        %v2718 = vsel %vm521, %v2390, %v2702
        %v2719 = vpack.c.bf16 %v2712, %v2711
        %v2720 = vpack.c.bf16 %v2714, %v2713
        %v2721 = vpack.c.bf16 %v2716, %v2715
        %v2722 = vpack.c.bf16 %v2718, %v2717
        %s2723 = scalar_lea.vmem %s6, 16
        %v2724 = vld [vmem:[%s2723] sm:$0xf]
        %v2725 = vld [vmem:[%s2723 + $0x4] sm:$0xf]
        %v2726 = vld [vmem:[%s2723 + $0x8] sm:$0xf]
        %v2727 = vld [vmem:[%s2723 + $0xc] sm:$0xf]
        %s2728 = scalar_lea.vmem %s7, 1
        %v2729 = vld [vmem:[%s2728] sm:$0x1]
        %v2731 = vlaneseq
        %v2732 = vshrl.u32 %v2731, 7
        %v2733 = vsub.s32 0, %v2732
        %v2734 = vrot.slane %v2729, %v2733
        %v2740 = vunpack.c.l.b16 %v2724
        %v2741 = vunpack.c.l.b16 %v2725
        %v2742 = vunpack.c.l.b16 %v2726
        %v2743 = vunpack.c.l.b16 %v2727
        %v2744 = vpack.c.b16 %v2741, %v2740
        %v2745 = vpack.c.b16 %v2743, %v2742
        %v2749 = vsel %vm609, %v2719, 0
        %v2752 = vsel %vm609, %v2720, 0
        %v2755 = vsel %vm609, %v2721, 0
        %v2758 = vsel %vm609, %v2722, 0
        %2760 = vmatprep.subr.bf16.mxu0 0
        %2761 = vmatpush1.bf16.msra.mxu0 0
        %2762 = vmatprep.subr.bf16.mxu0 0
        %2763 = vmatpush1.bf16.msra.mxu0 0
        %2764 = vmatprep.subr.bf16.mxu0 0
        %2765 = vmatpush1.bf16.msra.mxu0 0
        %2766 = vmatprep.subr.bf16.mxu0 0
        %2767 = vmatpush1.bf16.msra.mxu0 0
        %2768 = vmatprep.subr.bf16.mxu0 0
        %2769 = vmatpush1.bf16.msra.mxu0 0
        %2770 = vmatprep.subr.bf16.mxu0 0
        %2771 = vmatpush1.bf16.msra.mxu0 0
        %2772 = vmatprep.subr.bf16.mxu0 0
        %2773 = vmatpush1.bf16.msra.mxu0 %v2745
        %2774 = vmatprep.subr.bf16.mxu0 0
        %2775 = vmatpush1.bf16.msra.mxu0 %v2744
        %2776 = vmatprep.subr.bf16.mxu0 0
        %2777 = vmatpush2.bf16.msra.mxu0 0
        %2778 = vmatprep.subr.bf16.mxu0 0
        %2779 = vmatpush2.bf16.msra.mxu0 0
        %2780 = vmatprep.subr.bf16.mxu0 0
        %2781 = vmatpush2.bf16.msra.mxu0 0
        %2782 = vmatprep.subr.bf16.mxu0 0
        %2783 = vmatpush2.bf16.msra.mxu0 0
        %2784 = vmatprep.subr.bf16.mxu0 0
        %2785 = vmatpush2.bf16.msra.mxu0 0
        %2786 = vmatprep.subr.bf16.mxu0 0
        %2787 = vmatpush2.bf16.msra.mxu0 0
        %2788 = vmatprep.subr.bf16.mxu0 0
        %2789 = vmatpush2.bf16.msra.mxu0 0
        %2790 = vmatprep.subr.bf16.mxu0 0
        %2791 = vmatpush2.bf16.msra.mxu0 0
        %2792 = vmatprep.mubr.bf16.mxu0 0
        %2793 = vmatmul.mubr.bf16.gmra.mxu0 %v2749
        %v2794 = vpop.f32.mrf.mxu0
        %v2795 = vadd.f32 %v2734, %v2794
        %v2796 = vpop.f32.mrf.mxu0
        %v2797 = vpop.f32.mrf.mxu0
        %v2798 = vadd.f32 %v2734, %v2797
        %v2799 = vpop.f32.mrf.mxu0
        %2800 = vmatprep.mubr.bf16.mxu0 0
        %2801 = vmatmul.mubr.bf16.gmra.mxu0 %v2752
        %v2802 = vpop.f32.mrf.mxu0
        %v2803 = vadd.f32 %v2734, %v2802
        %v2804 = vpop.f32.mrf.mxu0
        %v2805 = vpop.f32.mrf.mxu0
        %v2806 = vadd.f32 %v2734, %v2805
        %v2807 = vpop.f32.mrf.mxu0
        %2808 = vmatprep.mubr.bf16.mxu0 0
        %2809 = vmatmul.mubr.bf16.gmra.mxu0 %v2755
        %v2810 = vpop.f32.mrf.mxu0
        %v2811 = vadd.f32 %v2734, %v2810
        %v2812 = vpop.f32.mrf.mxu0
        %v2813 = vpop.f32.mrf.mxu0
        %v2814 = vadd.f32 %v2734, %v2813
        %v2815 = vpop.f32.mrf.mxu0
        %2816 = vmatprep.mubr.bf16.mxu0 0
        %2817 = vmatmul.mubr.bf16.gmra.mxu0 %v2758
        %v2818 = vpop.f32.mrf.mxu0
        %v2819 = vadd.f32 %v2734, %v2818
        %v2820 = vpop.f32.mrf.mxu0
        %v2821 = vpop.f32.mrf.mxu0
        %v2822 = vadd.f32 %v2734, %v2821
        %v2823 = vpop.f32.mrf.mxu0
        %2824 = vdwg.mxu0
        %v2825 = vadd.f32 %v2795, %v1901
        %v2826 = vadd.f32 %v2798, %v1902
        %v2827 = vadd.f32 %v2803, %v1903
        %v2828 = vadd.f32 %v2806, %v1904
        %v2829 = vadd.f32 %v2811, %v1905
        %v2830 = vadd.f32 %v2814, %v1906
        %v2831 = vadd.f32 %v2819, %v1907
        %v2832 = vadd.f32 %v2822, %v1908
        %s2833 = scalar_lea.vmem %s9, 1
        %v2834 = vld [vmem:[%s2833] sm:$0x1]
        %s2835 = scalar_lea.vmem %s10, 1
        %v2836 = vld [vmem:[%s2835] sm:$0x1]
        %v2837 = vmul.f32 %v2825, %v2825
        %v2838 = vmul.f32 %v2826, %v2826
        %v2839 = vmul.f32 %v2827, %v2827
        %v2840 = vmul.f32 %v2828, %v2828
        %v2841 = vmul.f32 %v2829, %v2829
        %v2842 = vmul.f32 %v2830, %v2830
        %v2843 = vmul.f32 %v2831, %v2831
        %v2844 = vmul.f32 %v2832, %v2832
        %v2845 = vsel %vm609, %v2837, 0.0
        %v2846 = vsel %vm609, %v2838, 0.0
        %v2847 = vadd.f32 %v2845, %v2846
        %v2848 = vsel %vm609, %v2839, 0.0
        %v2849 = vadd.f32 %v2847, %v2848
        %v2850 = vsel %vm609, %v2840, 0.0
        %v2851 = vadd.f32 %v2849, %v2850
        %v2852 = vsel %vm609, %v2841, 0.0
        %v2853 = vadd.f32 %v2851, %v2852
        %v2854 = vsel %vm609, %v2842, 0.0
        %v2855 = vadd.f32 %v2853, %v2854
        %v2856 = vsel %vm609, %v2843, 0.0
        %v2857 = vadd.f32 %v2855, %v2856
        %v2858 = vsel %vm609, %v2844, 0.0
        %v2859 = vadd.f32 %v2857, %v2858
        %v2860 = vrot.slane %v2859, 4
        %v2861 = vadd.f32 %v2859, %v2860
        %v2862 = vrot.slane %v2861, 2
        %v2863 = vadd.f32 %v2861, %v2862
        %v2864 = vrot.slane %v2863, 1
        %v2865 = vadd.f32 %v2863, %v2864
        %v2866 = vrsqrt.pop %v2865
        %v2867 = vmul.f32 %v2865, %v2866
        %vm2868 = vcmp.eq.f32.partialorder %v2865, inf
        %v2869 = vsel %vm2868, %v2865, %v2867
        %vm2870 = vcmp.eq.f32.partialorder %v2865, 0.0
        %v2871 = vand.u32 %v2865, 2147483648
        %v2872 = vsel %vm2870, %v2871, %v2869
        %v2873 = vsel %vm609, %v2872, 0.0
        %2874 = vadd.xlane.f32.xlu0 %v2873
        %v2875 = vpop.xlane.xlu0 %2874
        %v2876 = vmul.f32 %v2875, %v641
        %v2877 = vadd.f32 %v2876, 1e-06
        %v2878 = vrcp.pop %v2877
        %v2879 = vmul.f32 %v2872, %v2878
        %v2880 = vmul.f32 %v2825, %v2879
        %v2881 = vmul.f32 %v2826, %v2879
        %v2882 = vmul.f32 %v2827, %v2879
        %v2883 = vmul.f32 %v2828, %v2879
        %v2884 = vmul.f32 %v2829, %v2879
        %v2885 = vmul.f32 %v2830, %v2879
        %v2886 = vmul.f32 %v2831, %v2879
        %v2887 = vmul.f32 %v2832, %v2879
        %v2889 = vlaneseq
        %v2890 = vshrl.u32 %v2889, 7
        %v2891 = vsub.s32 0, %v2890
        %v2892 = vrot.slane %v2834, %v2891
        %v2894 = vmul.f32 %v2892, %v2880
        %v2895 = vmul.f32 %v2892, %v2881
        %v2896 = vmul.f32 %v2892, %v2882
        %v2897 = vmul.f32 %v2892, %v2883
        %v2898 = vmul.f32 %v2892, %v2884
        %v2899 = vmul.f32 %v2892, %v2885
        %v2900 = vmul.f32 %v2892, %v2886
        %v2901 = vmul.f32 %v2892, %v2887
        %v2903 = vlaneseq
        %v2904 = vshrl.u32 %v2903, 7
        %v2905 = vsub.s32 0, %v2904
        %v2906 = vrot.slane %v2836, %v2905
        %v2908 = vadd.f32 %v2894, %v2906
        %v2909 = vadd.f32 %v2895, %v2906
        %v2910 = vadd.f32 %v2896, %v2906
        %v2911 = vadd.f32 %v2897, %v2906
        %v2912 = vadd.f32 %v2898, %v2906
        %v2913 = vadd.f32 %v2899, %v2906
        %v2914 = vadd.f32 %v2900, %v2906
        %v2915 = vadd.f32 %v2901, %v2906
        %v2916 = vadd.f32 %v2908, %v2825
        %v2917 = vadd.f32 %v2909, %v2826
        %v2918 = vadd.f32 %v2910, %v2827
        %v2919 = vadd.f32 %v2911, %v2828
        %v2920 = vadd.f32 %v2912, %v2829
        %v2921 = vadd.f32 %v2913, %v2830
        %v2922 = vadd.f32 %v2914, %v2831
        %v2923 = vadd.f32 %v2915, %v2832
        %v2924 = vpack.c.bf16 %v2917, %v2916
        %v2925 = vpack.c.bf16 %v2919, %v2918
        %v2926 = vpack.c.bf16 %v2921, %v2920
        %v2927 = vpack.c.bf16 %v2923, %v2922
        %s2928 = scalar_lea.vmem %s11, 16
        %v2929 = vld [vmem:[%s2928] sm:$0xf]
        %v2930 = vld [vmem:[%s2928 + $0x4] sm:$0xf]
        %v2931 = vld [vmem:[%s2928 + $0x8] sm:$0xf]
        %v2932 = vld [vmem:[%s2928 + $0xc] sm:$0xf]
        %s2933 = scalar_lea.vmem %s12, 1
        %v2934 = vld [vmem:[%s2933] sm:$0x1]
        %v2936 = vlaneseq
        %v2937 = vshrl.u32 %v2936, 7
        %v2938 = vsub.s32 0, %v2937
        %v2939 = vrot.slane %v2934, %v2938
        %v2945 = vunpack.c.l.b16 %v2929
        %v2946 = vunpack.c.l.b16 %v2930
        %v2947 = vunpack.c.l.b16 %v2931
        %v2948 = vunpack.c.l.b16 %v2932
        %v2949 = vpack.c.b16 %v2946, %v2945
        %v2950 = vpack.c.b16 %v2948, %v2947
        %v2954 = vsel %vm609, %v2924, 0
        %v2957 = vsel %vm609, %v2925, 0
        %v2960 = vsel %vm609, %v2926, 0
        %v2963 = vsel %vm609, %v2927, 0
        %2965 = vmatprep.subr.bf16.mxu0 0
        %2966 = vmatpush1.bf16.msra.mxu0 0
        %2967 = vmatprep.subr.bf16.mxu0 0
        %2968 = vmatpush1.bf16.msra.mxu0 0
        %2969 = vmatprep.subr.bf16.mxu0 0
        %2970 = vmatpush1.bf16.msra.mxu0 0
        %2971 = vmatprep.subr.bf16.mxu0 0
        %2972 = vmatpush1.bf16.msra.mxu0 0
        %2973 = vmatprep.subr.bf16.mxu0 0
        %2974 = vmatpush1.bf16.msra.mxu0 0
        %2975 = vmatprep.subr.bf16.mxu0 0
        %2976 = vmatpush1.bf16.msra.mxu0 0
        %2977 = vmatprep.subr.bf16.mxu0 0
        %2978 = vmatpush1.bf16.msra.mxu0 %v2950
        %2979 = vmatprep.subr.bf16.mxu0 0
        %2980 = vmatpush1.bf16.msra.mxu0 %v2949
        %2981 = vmatprep.subr.bf16.mxu0 0
        %2982 = vmatpush2.bf16.msra.mxu0 0
        %2983 = vmatprep.subr.bf16.mxu0 0
        %2984 = vmatpush2.bf16.msra.mxu0 0
        %2985 = vmatprep.subr.bf16.mxu0 0
        %2986 = vmatpush2.bf16.msra.mxu0 0
        %2987 = vmatprep.subr.bf16.mxu0 0
        %2988 = vmatpush2.bf16.msra.mxu0 0
        %2989 = vmatprep.subr.bf16.mxu0 0
        %2990 = vmatpush2.bf16.msra.mxu0 0
        %2991 = vmatprep.subr.bf16.mxu0 0
        %2992 = vmatpush2.bf16.msra.mxu0 0
        %2993 = vmatprep.subr.bf16.mxu0 0
        %2994 = vmatpush2.bf16.msra.mxu0 0
        %2995 = vmatprep.subr.bf16.mxu0 0
        %2996 = vmatpush2.bf16.msra.mxu0 0
        %2997 = vmatprep.mubr.bf16.mxu0 0
        %2998 = vmatmul.mubr.bf16.gmra.mxu0 %v2954
        %v2999 = vpop.f32.mrf.mxu0
        %v3000 = vadd.f32 %v2939, %v2999
        %v3001 = vpop.f32.mrf.mxu0
        %v3002 = vpop.f32.mrf.mxu0
        %v3003 = vadd.f32 %v2939, %v3002
        %v3004 = vpop.f32.mrf.mxu0
        %3005 = vmatprep.mubr.bf16.mxu0 0
        %3006 = vmatmul.mubr.bf16.gmra.mxu0 %v2957
        %v3007 = vpop.f32.mrf.mxu0
        %v3008 = vadd.f32 %v2939, %v3007
        %v3009 = vpop.f32.mrf.mxu0
        %v3010 = vpop.f32.mrf.mxu0
        %v3011 = vadd.f32 %v2939, %v3010
        %v3012 = vpop.f32.mrf.mxu0
        %3013 = vmatprep.mubr.bf16.mxu0 0
        %3014 = vmatmul.mubr.bf16.gmra.mxu0 %v2960
        %v3015 = vpop.f32.mrf.mxu0
        %v3016 = vadd.f32 %v2939, %v3015
        %v3017 = vpop.f32.mrf.mxu0
        %v3018 = vpop.f32.mrf.mxu0
        %v3019 = vadd.f32 %v2939, %v3018
        %v3020 = vpop.f32.mrf.mxu0
        %3021 = vmatprep.mubr.bf16.mxu0 0
        %3022 = vmatmul.mubr.bf16.gmra.mxu0 %v2963
        %v3023 = vpop.f32.mrf.mxu0
        %v3024 = vadd.f32 %v2939, %v3023
        %v3025 = vpop.f32.mrf.mxu0
        %v3026 = vpop.f32.mrf.mxu0
        %v3027 = vadd.f32 %v2939, %v3026
        %v3028 = vpop.f32.mrf.mxu0
        %3029 = vdwg.mxu0
        %v3030 = vmul.f32 %v3000, 0.5
        %v3031 = vmul.f32 %v3003, 0.5
        %v3032 = vmul.f32 %v3008, 0.5
        %v3033 = vmul.f32 %v3011, 0.5
        %v3034 = vmul.f32 %v3016, 0.5
        %v3035 = vmul.f32 %v3019, 0.5
        %v3036 = vmul.f32 %v3024, 0.5
        %v3037 = vmul.f32 %v3027, 0.5
        %v3038 = vmul.f32 %v3000, 0.70710677
        %v3039 = vmul.f32 %v3003, 0.70710677
        %v3040 = vmul.f32 %v3008, 0.70710677
        %v3041 = vmul.f32 %v3011, 0.70710677
        %v3042 = vmul.f32 %v3016, 0.70710677
        %v3043 = vmul.f32 %v3019, 0.70710677
        %v3044 = vmul.f32 %v3024, 0.70710677
        %v3045 = vmul.f32 %v3027, 0.70710677
        %v3046 = verf.f32.pop %v3038
        %v3047 = verf.f32.pop %v3039
        %v3048 = verf.f32.pop %v3040
        %v3049 = verf.f32.pop %v3041
        %v3050 = verf.f32.pop %v3042
        %v3051 = verf.f32.pop %v3043
        %v3052 = verf.f32.pop %v3044
        %v3053 = verf.f32.pop %v3045
        %v3054 = vadd.f32 %v3046, 1.0
        %v3055 = vadd.f32 %v3047, 1.0
        %v3056 = vadd.f32 %v3048, 1.0
        %v3057 = vadd.f32 %v3049, 1.0
        %v3058 = vadd.f32 %v3050, 1.0
        %v3059 = vadd.f32 %v3051, 1.0
        %v3060 = vadd.f32 %v3052, 1.0
        %v3061 = vadd.f32 %v3053, 1.0
        %v3062 = vmul.f32 %v3030, %v3054
        %v3063 = vmul.f32 %v3031, %v3055
        %v3064 = vmul.f32 %v3032, %v3056
        %v3065 = vmul.f32 %v3033, %v3057
        %v3066 = vmul.f32 %v3034, %v3058
        %v3067 = vmul.f32 %v3035, %v3059
        %v3068 = vmul.f32 %v3036, %v3060
        %v3069 = vmul.f32 %v3037, %v3061
        %v3070 = vpack.c.bf16 %v3063, %v3062
        %v3071 = vpack.c.bf16 %v3065, %v3064
        %v3072 = vpack.c.bf16 %v3067, %v3066
        %v3073 = vpack.c.bf16 %v3069, %v3068
        %s3074 = scalar_lea.vmem %s13, 64
        %v3075 = vld [vmem:[%s3074] sm:$0xf]
        %v3076 = vld [vmem:[%s3074 + $0x4] sm:$0xf]
        %v3077 = vld [vmem:[%s3074 + $0x8] sm:$0xf]
        %v3078 = vld [vmem:[%s3074 + $0xc] sm:$0xf]
        %v3079 = vld [vmem:[%s3074 + $0x10] sm:$0xf]
        %v3080 = vld [vmem:[%s3074 + $0x14] sm:$0xf]
        %v3081 = vld [vmem:[%s3074 + $0x18] sm:$0xf]
        %v3082 = vld [vmem:[%s3074 + $0x1c] sm:$0xf]
        %v3083 = vld [vmem:[%s3074 + $0x20] sm:$0xf]
        %v3084 = vld [vmem:[%s3074 + $0x24] sm:$0xf]
        %v3085 = vld [vmem:[%s3074 + $0x28] sm:$0xf]
        %v3086 = vld [vmem:[%s3074 + $0x2c] sm:$0xf]
        %v3087 = vld [vmem:[%s3074 + $0x30] sm:$0xf]
        %v3088 = vld [vmem:[%s3074 + $0x34] sm:$0xf]
        %v3089 = vld [vmem:[%s3074 + $0x38] sm:$0xf]
        %v3090 = vld [vmem:[%s3074 + $0x3c] sm:$0xf]
        %v3107 = vunpack.c.l.b16 %v3075
        %v3108 = vunpack.c.l.b16 %v3076
        %v3109 = vunpack.c.l.b16 %v3077
        %v3110 = vunpack.c.l.b16 %v3078
        %v3111 = vunpack.c.l.b16 %v3079
        %v3112 = vunpack.c.l.b16 %v3080
        %v3113 = vunpack.c.l.b16 %v3081
        %v3114 = vunpack.c.l.b16 %v3082
        %v3115 = vunpack.c.l.b16 %v3083
        %v3116 = vunpack.c.l.b16 %v3084
        %v3117 = vunpack.c.l.b16 %v3085
        %v3118 = vunpack.c.l.b16 %v3086
        %v3119 = vunpack.c.l.b16 %v3087
        %v3120 = vunpack.c.l.b16 %v3088
        %v3121 = vunpack.c.l.b16 %v3089
        %v3122 = vunpack.c.l.b16 %v3090
        %v3123 = vpack.c.b16 %v3108, %v3107
        %v3124 = vpack.c.b16 %v3110, %v3109
        %v3125 = vpack.c.b16 %v3112, %v3111
        %v3126 = vpack.c.b16 %v3114, %v3113
        %v3127 = vpack.c.b16 %v3116, %v3115
        %v3128 = vpack.c.b16 %v3118, %v3117
        %v3129 = vpack.c.b16 %v3120, %v3119
        %v3130 = vpack.c.b16 %v3122, %v3121
        %3139 = vmatprep.subr.bf16.mxu0 0
        %3140 = vmatpush1.bf16.msra.mxu0 %v3130
        %3141 = vmatprep.subr.bf16.mxu0 0
        %3142 = vmatpush1.bf16.msra.mxu0 %v3129
        %3143 = vmatprep.subr.bf16.mxu0 0
        %3144 = vmatpush1.bf16.msra.mxu0 %v3128
        %3145 = vmatprep.subr.bf16.mxu0 0
        %3146 = vmatpush1.bf16.msra.mxu0 %v3127
        %3147 = vmatprep.subr.bf16.mxu0 0
        %3148 = vmatpush1.bf16.msra.mxu0 %v3126
        %3149 = vmatprep.subr.bf16.mxu0 0
        %3150 = vmatpush1.bf16.msra.mxu0 %v3125
        %3151 = vmatprep.subr.bf16.mxu0 0
        %3152 = vmatpush1.bf16.msra.mxu0 %v3124
        %3153 = vmatprep.subr.bf16.mxu0 0
        %3154 = vmatpush1.bf16.msra.mxu0 %v3123
        %3155 = vmatprep.subr.bf16.mxu0 0
        %3156 = vmatpush2.bf16.msra.mxu0 0
        %3157 = vmatprep.subr.bf16.mxu0 0
        %3158 = vmatpush2.bf16.msra.mxu0 0
        %3159 = vmatprep.subr.bf16.mxu0 0
        %3160 = vmatpush2.bf16.msra.mxu0 0
        %3161 = vmatprep.subr.bf16.mxu0 0
        %3162 = vmatpush2.bf16.msra.mxu0 0
        %3163 = vmatprep.subr.bf16.mxu0 0
        %3164 = vmatpush2.bf16.msra.mxu0 0
        %3165 = vmatprep.subr.bf16.mxu0 0
        %3166 = vmatpush2.bf16.msra.mxu0 0
        %3167 = vmatprep.subr.bf16.mxu0 0
        %3168 = vmatpush2.bf16.msra.mxu0 0
        %3169 = vmatprep.subr.bf16.mxu0 0
        %3170 = vmatpush2.bf16.msra.mxu0 0
        %3171 = vmatprep.mubr.bf16.mxu0 0
        %3172 = vmatmul.mubr.bf16.gmra.mxu0 %v3070
        %v3173 = vpop.f32.mrf.mxu0
        %v3174 = vadd.f32 0.0, %v3173
        %v3175 = vpop.f32.mrf.mxu0
        %v3176 = vpop.f32.mrf.mxu0
        %v3177 = vadd.f32 0.0, %v3176
        %v3178 = vpop.f32.mrf.mxu0
        %3179 = vmatprep.mubr.bf16.mxu0 0
        %3180 = vmatmul.mubr.bf16.gmra.mxu0 %v3071
        %v3181 = vpop.f32.mrf.mxu0
        %v3182 = vadd.f32 0.0, %v3181
        %v3183 = vpop.f32.mrf.mxu0
        %v3184 = vpop.f32.mrf.mxu0
        %v3185 = vadd.f32 0.0, %v3184
        %v3186 = vpop.f32.mrf.mxu0
        %3187 = vmatprep.mubr.bf16.mxu0 0
        %3188 = vmatmul.mubr.bf16.gmra.mxu0 %v3072
        %v3189 = vpop.f32.mrf.mxu0
        %v3190 = vadd.f32 0.0, %v3189
        %v3191 = vpop.f32.mrf.mxu0
        %v3192 = vpop.f32.mrf.mxu0
        %v3193 = vadd.f32 0.0, %v3192
        %v3194 = vpop.f32.mrf.mxu0
        %3195 = vmatprep.mubr.bf16.mxu0 0
        %3196 = vmatmul.mubr.bf16.gmra.mxu0 %v3073
        %v3197 = vpop.f32.mrf.mxu0
        %v3198 = vadd.f32 0.0, %v3197
        %v3199 = vpop.f32.mrf.mxu0
        %v3200 = vpop.f32.mrf.mxu0
        %v3201 = vadd.f32 0.0, %v3200
        %v3202 = vpop.f32.mrf.mxu0
        %3203 = vdwg.mxu0
        %v3204 = vadd.f32 %v2825, %v3174
        %v3205 = vadd.f32 %v2826, %v3177
        %v3206 = vadd.f32 %v2827, %v3182
        %v3207 = vadd.f32 %v2828, %v3185
        %v3208 = vadd.f32 %v2829, %v3190
        %v3209 = vadd.f32 %v2830, %v3193
        %v3210 = vadd.f32 %v2831, %v3198
        %v3211 = vadd.f32 %v2832, %v3201
        %s3212 = scalar_lea.vmem %s14, 1
        %v3213 = vld [vmem:[%s3212] sm:$0x1]
        %v3215 = vlaneseq
        %v3216 = vshrl.u32 %v3215, 7
        %v3217 = vsub.s32 0, %v3216
        %v3218 = vrot.slane %v3213, %v3217
        %v3220 = vadd.f32 %v3204, %v3218
        %v3221 = vadd.f32 %v3205, %v3218
        %v3222 = vadd.f32 %v3206, %v3218
        %v3223 = vadd.f32 %v3207, %v3218
        %v3224 = vadd.f32 %v3208, %v3218
        %v3225 = vadd.f32 %v3209, %v3218
        %v3226 = vadd.f32 %v3210, %v3218
        %v3227 = vadd.f32 %v3211, %v3218
        %3228 = vst.msk [vmem:[%s487] sm:$0xff] %vm609, %v3220
        %3229 = vst.msk [vmem:[%s487 + $0x8] sm:$0xff] %vm609, %v3221
        %3230 = vst.msk [vmem:[%s487 + $0x10] sm:$0xff] %vm609, %v3222
        %3231 = vst.msk [vmem:[%s487 + $0x18] sm:$0xff] %vm609, %v3223
        %3232 = vst.msk [vmem:[%s487 + $0x20] sm:$0xff] %vm609, %v3224
        %3233 = vst.msk [vmem:[%s487 + $0x28] sm:$0xff] %vm609, %v3225
        %3234 = vst.msk [vmem:[%s487 + $0x30] sm:$0xff] %vm609, %v3226
        %3235 = vst.msk [vmem:[%s487 + $0x38] sm:$0xff] %vm609, %v3227
        %s3236 = sand.u32 %s357, 1
        %s3237 = scalar_lea.sflag [#allocation3], %s3236
        %s3238 = sand.u32 %s357, 1
        %s3239 = smul.addr %s3238, 64
        %s3240 = scalar_lea.vmem [#allocation2], %s3239
        // Predicated region
        $region81: #{stage_module_forward.1} parent=79 // pred_check
          %p3241 = pneg %p367
        $region82: #{stage_module_forward.1} parent=79 // pred_check_branch
          %3243 = sbr.rel (%p3241) target = $region84
        $region83: #{stage_module_forward.1} parent=79 // pred_region
          %s3245 = ssub.s32 1024, 1024
          %3246 = vsyncadd %s3237, %s3245
          %s3247 = smul.addr %s29, 8
          %s3248 = smul.addr %s3247, 128
          %s3249 = scalar_lea.hbm %s15, %s3248
          %s3250 = sshll.u32 %s3240, 4
          %s3251 = int_to_ptr.vmem [resolvable:$true] %s3250
          %3256 = dma.vmem_to_hbm [thread:$0]  %s3251, 1024, %s3249, %s3237, 128, 128, 8
        $region84: #{stage_module_forward.1} parent=79 // pred_fallthru
          _
      $region80: #{stage_module_forward.1} parent=5 // pred_fallthru
        _
      %p3257 = scmp.le.s32.totalorder 2, %s24
      // Predicated region
      $region85: #{stage_module_forward.1} parent=5 // pred_check
        %p3258 = pneg %p3257
      $region86: #{stage_module_forward.1} parent=5 // pred_check_branch
        %3260 = sbr.rel (%p3258) target = $region88
      $region87: #{stage_module_forward.1} parent=5 // pred_region
        %s3261 = ssub.s32 %s24, 2
        // Predicated region
        $region89: #{stage_module_forward.1} parent=87 // pred_check
          %p3262 = pneg %p373
        $region90: #{stage_module_forward.1} parent=87 // pred_check_branch
          %3264 = sbr.rel (%p3262) target = $region92
        $region91: #{stage_module_forward.1} parent=87 // pred_region
          %s3265 = sand.u32 %s358, 1
          %s3266 = scalar_lea.sflag [#allocation3], %s3265
          %s3267 = sand.u32 %s358, 1
          %s3268 = smul.addr %s3267, 64
          %s3269 = scalar_lea.vmem [#allocation2], %s3268
          %3270 = dma.done %s3266, 1024
        $region92: #{stage_module_forward.1} parent=87 // pred_fallthru
          _
      $region88: #{stage_module_forward.1} parent=5 // pred_fallthru
        _
    $region6: #{stage_module_forward.1} parent=1 // loop_footer
      %s28 = sadd.s32 1, %s24
    $region7: #{stage_module_forward.1} parent=1 // loop_footer_branch
      %23 = sbr.rel target = $region3
    $region8: #{stage_module_forward.1} parent=1 // loop_exit
      _
    %3271 = vsyncpa [#allocation3], 1
    %s3272 = scalar_lea.sflag [#allocation3], 1
    %3273 = vsyncpa %s3272, 1

</llo_original>
